<compile_context>
chip_gen: v7x
topology: tpu7x:2x2x1
jax: 0.10.0
libtpu: 0.0.40
codegen_flags: <defaults>
</compile_context>

<pallas_src>
import math
import functools

import jax
import jax.numpy as jnp
from jax.experimental import pallas as pl
from jax.experimental.pallas import tpu as pltpu


def _layer_norm(x, gamma, beta, eps=1e-6):
    mu = jnp.mean(x, axis=-1, keepdims=True)
    var = jnp.mean((x - mu) ** 2, axis=-1, keepdims=True)
    return gamma * (x - mu) * jax.lax.rsqrt(var + eps) + beta


def _decoder_stack_kernel(num_heads, batch_block,
                          x_ref, enc_ref, srcb_ref, tgtb_ref,
                          wp_ref, bp_ref, wo_ref, bo_ref,
                          w1_ref, b1_ref, w2_ref, b2_ref,
                          lng_ref, lnb_ref, fng_ref, fnb_ref,
                          out_ref, h_ref, cat_ref):
    """One (batch-block, layer) step of the fused decoder stack."""
    layer = pl.program_id(1)
    is_last = layer == pl.num_programs(1) - 1

    # Load the input activations into the resident VMEM scratch on layer 0.
    @pl.when(layer == 0)
    def _():
        h_ref[...] = x_ref[...]

    H = num_heads
    D = h_ref.shape[-1]
    dh = D // H

    def mha(q_in16, kv_in16, bias, base, which):
        # Full-width projections: one MXU pass over the activations each,
        # N = D columns (no broadcast-to-(H,T,D), no N = dh narrow matmuls).
        q = jnp.dot(q_in16, wp_ref[0, base + 0],
                    preferred_element_type=jnp.float32) + bp_ref[0, base + 0]
        k = jnp.dot(kv_in16, wp_ref[0, base + 1],
                    preferred_element_type=jnp.float32) + bp_ref[0, base + 1]
        v = jnp.dot(kv_in16, wp_ref[0, base + 2],
                    preferred_element_type=jnp.float32) + bp_ref[0, base + 2]
        # Per-head attention; only one (T, S) score tile is live at a time.
        # (1/sqrt(dh) is already folded into Wq/bq; `bias` is additive.)
        for h in range(H):
            sl = slice(h * dh, (h + 1) * dh)
            qh = q[:, sl].astype(jnp.bfloat16)
            kh = k[:, sl].astype(jnp.bfloat16)
            vh = v[:, sl].astype(jnp.bfloat16)
            s = jnp.einsum('tf,sf->ts', qh, kh,
                           preferred_element_type=jnp.float32) + bias
            s = s - jnp.max(s, axis=-1, keepdims=True)
            e = jnp.exp(s)
            p = e * pl.reciprocal(jnp.sum(e, axis=-1, keepdims=True), approx=True)
            cat_ref[:, sl] = jnp.dot(p.astype(jnp.bfloat16), vh,
                                     preferred_element_type=jnp.float32)
        # concat(heads) @ Wo as ONE full-width matmul (K = H*dh = D); no
        # (H, T, D) f32 intermediate and no cross-head reduction.
        return jnp.dot(cat_ref[...].astype(jnp.bfloat16), wo_ref[0, which],
                       preferred_element_type=jnp.float32) + bo_ref[0, which]

    # Loop over the batch block: weights are fetched from HBM once per layer
    # and reused for every element (VMEM re-reads only).
    for i in range(batch_block):
        x_i = h_ref[i]                     # (T, D) f32 resident activations
        x16 = x_i.astype(jnp.bfloat16)
        tgt_b = tgtb_ref[i]                # (T, T) additive mask
        src_b = srcb_ref[i]                # (1, S) additive mask
        enc16 = enc_ref[i]                 # (S, D) bf16 encoder output

        # self-attention -> residual -> norm1
        h1 = _layer_norm(x_i + mha(x16, x16, tgt_b, 0, 0),
                         lng_ref[0, 0], lnb_ref[0, 0])
        # cross-attention (k, v = encoder output) -> residual -> norm2
        h2 = _layer_norm(h1 + mha(h1.astype(jnp.bfloat16), enc16, src_b, 3, 1),
                         lng_ref[0, 1], lnb_ref[0, 1])
        # feed-forward (Linear -> ReLU -> Linear) -> residual -> norm3
        hidden = jnp.maximum(
            jnp.dot(h2.astype(jnp.bfloat16), w1_ref[0],
                    preferred_element_type=jnp.float32) + b1_ref[0], 0.0)
        ff = jnp.dot(hidden.astype(jnp.bfloat16), w2_ref[0],
                     preferred_element_type=jnp.float32) + b2_ref[0]
        h3 = _layer_norm(h2 + ff, lng_ref[0, 2], lnb_ref[0, 2])

        h_ref[i] = h3

        # Final LayerNormalization folded into the last layer step.
        @pl.when(is_last)
        def _():
            out_ref[i] = _layer_norm(h3, fng_ref[...], fnb_ref[...])


def _vmem_limit_bytes():
    """~75% of physical VMEM: ~48 MiB on v7x (64 physical), ~96 MiB on
    v5e/v6e (128 physical), leaving headroom for Mosaic internal scratch and
    double-buffered weight blocks."""
    try:
        cap = int(pltpu.get_tpu_info().vmem_capacity_bytes)
    except Exception:
        cap = 64 * 1024 * 1024   # conservative fallback (v7x physical size)
    return max(32 * 1024 * 1024, (cap * 3) // 4)


def decoder_forward(x, enc, src_mask, tgt_mask, packed, num_heads,
                    *, batch_block=8):
    B, T, D = x.shape
    S = enc.shape[1]
    L = packed["w_proj"].shape[0]
    F = packed["w1"].shape[-1]

    # Batch blocking: each grid step handles `bb` batch elements per weight
    # fetch.  On v7x prefer bb = B // 2 (pass batch_block accordingly) so both
    # TensorCores keep a parallel block.
    bb = max(1, min(batch_block, B))
    while B % bb:
        bb -= 1
    nb = B // bb

    # Additive masks precomputed host-side (plain add in the kernel instead of
    # compare + select); broadcast dims squeezed away.
    src_bias = jnp.where(src_mask == 0.0, -1e9, 0.0).astype(jnp.float32).reshape(B, 1, S)
    tgt_bias = jnp.where(tgt_mask == 0.0, -1e9, 0.0).astype(jnp.float32).reshape(B, T, T)
    # TODO(synk): generate purely-causal tgt masks in-kernel with iota to avoid
    # the T*T DMA when the mask is known to be causal.

    enc16 = enc.astype(jnp.bfloat16)   # enc is only ever a bf16 MXU operand

    kernel = functools.partial(_decoder_stack_kernel, num_heads, bb)

    grid_spec = pltpu.PrefetchScalarGridSpec(
        num_scalar_prefetch=0,
        grid=(nb, L),
        in_specs=[
            pl.BlockSpec((bb, T, D), lambda b, l: (b, 0, 0)),        # x
            pl.BlockSpec((bb, S, D), lambda b, l: (b, 0, 0)),        # encoder output
            pl.BlockSpec((bb, 1, S), lambda b, l: (b, 0, 0)),        # src additive mask
            pl.BlockSpec((bb, T, T), lambda b, l: (b, 0, 0)),        # tgt additive mask
            pl.BlockSpec((1, 6, D, D), lambda b, l: (l, 0, 0, 0)),   # q/k/v weights
            pl.BlockSpec((1, 6, 1, D), lambda b, l: (l, 0, 0, 0)),   # q/k/v biases
            pl.BlockSpec((1, 2, D, D), lambda b, l: (l, 0, 0, 0)),   # out-proj weights
            pl.BlockSpec((1, 2, 1, D), lambda b, l: (l, 0, 0, 0)),   # out-proj biases
            pl.BlockSpec((1, D, F), lambda b, l: (l, 0, 0)),         # ffn w1
            pl.BlockSpec((1, 1, F), lambda b, l: (l, 0, 0)),         # ffn b1
            pl.BlockSpec((1, F, D), lambda b, l: (l, 0, 0)),         # ffn w2
            pl.BlockSpec((1, 1, D), lambda b, l: (l, 0, 0)),         # ffn b2
            pl.BlockSpec((1, 3, 1, D), lambda b, l: (l, 0, 0, 0)),   # layernorm gammas
            pl.BlockSpec((1, 3, 1, D), lambda b, l: (l, 0, 0, 0)),   # layernorm betas
            pl.BlockSpec((1, D), lambda b, l: (0, 0)),               # final gamma
            pl.BlockSpec((1, D), lambda b, l: (0, 0)),               # final beta
        ],
        out_specs=pl.BlockSpec((bb, T, D), lambda b, l: (b, 0, 0)),
        scratch_shapes=[
            pltpu.VMEM((bb, T, D), jnp.float32),   # resident activations
            pltpu.VMEM((T, D), jnp.float32),       # concat(heads) staging
        ],
    )

    return pl.pallas_call(
        kernel,
        out_shape=jax.ShapeDtypeStruct((B, T, D), jnp.float32),
        grid_spec=grid_spec,
        compiler_params=pltpu.CompilerParams(
            dimension_semantics=("parallel", "arbitrary"),
            vmem_limit_bytes=_vmem_limit_bytes()),
    )(x, enc16, src_bias, tgt_bias,
      packed["w_proj"], packed["b_proj"], packed["w_o"], packed["b_o"],
      packed["w1"], packed["b1"], packed["w2"], packed["b2"],
      packed["ln_g"], packed["ln_b"], packed["fin_g"], packed["fin_b"])


# ----------------------------------------------------------------------------
# Parameter construction / host-side packing
# ----------------------------------------------------------------------------
def init_layer_params(key, num_layers, d_model, d_ff):
    def dense(k, shape, s=0.02):
        return s * jax.random.normal(k, shape, jnp.float32)

    layers = []
    for _ in range(num_layers):
        key, *ks = jax.random.split(key, 21)
        ks = iter(ks)

        def attn_params():
            return dict(
                wq=dense(next(ks), (d_model, d_model)),
                wk=dense(next(ks), (d_model, d_model)),
                wv=dense(next(ks), (d_model, d_model)),
                wo=dense(next(ks), (d_model, d_model)),
                bq=dense(next(ks), (d_model,), 0.01),
                bk=dense(next(ks), (d_model,), 0.01),
                bv=dense(next(ks), (d_model,), 0.01),
                bo=dense(next(ks), (d_model,), 0.01),
            )

        layers.append(dict(
            self=attn_params(),
            cross=attn_params(),
            ffn=dict(
                w1=dense(next(ks), (d_model, d_ff)),
                b1=dense(next(ks), (d_ff,), 0.01),
                w2=dense(next(ks), (d_ff, d_model)),
                b2=dense(next(ks), (d_model,), 0.01),
            ),
            ln=[dict(gamma=jnp.ones((d_model,), jnp.float32),
                     beta=jnp.zeros((d_model,), jnp.float32)) for _ in range(3)],
        ))
    final_gamma = jnp.ones((d_model,), jnp.float32)
    final_beta = jnp.zeros((d_model,), jnp.float32)
    return layers, final_gamma, final_beta


def pack_params(layers, final_gamma, final_beta, num_heads):
    """Repack per-layer weights for the fused kernel.

    * Projections stay full-width (D, D) so the kernel feeds the whole MXU;
      head splitting happens with static lane slices in-kernel.
    * The 1/sqrt(d_head) attention scale is folded into Wq / bq.
    * MXU operands are bf16 (halves weight HBM traffic); biases / layer-norm
      parameters stay f32.
    """
    D = layers[0]["self"]["wq"].shape[0]
    dh = D // num_heads
    scale = 1.0 / math.sqrt(dh)

    w_proj, b_proj, w_o, b_o = [], [], [], []
    w1, b1, w2, b2, ln_g, ln_b = [], [], [], [], [], []
    for lp in layers:
        ws, bs = [], []
        for attn in ("self", "cross"):
            a = lp[attn]
            ws += [a["wq"] * scale, a["wk"], a["wv"]]
            bs += [(a["bq"] * scale)[None, :], a["bk"][None, :], a["bv"][None, :]]
        w_proj.append(jnp.stack(ws))                                      # (6, D, D)
        b_proj.append(jnp.stack(bs))                                      # (6, 1, D)
        w_o.append(jnp.stack([lp[a]["wo"] for a in ("self", "cross")]))   # (2, D, D)
        b_o.append(jnp.stack([lp[a]["bo"][None, :] for a in ("self", "cross")]))
        w1.append(lp["ffn"]["w1"]); b1.append(lp["ffn"]["b1"][None, :])
        w2.append(lp["ffn"]["w2"]); b2.append(lp["ffn"]["b2"][None, :])
        ln_g.append(jnp.stack([lp["ln"][i]["gamma"][None, :] for i in range(3)]))
        ln_b.append(jnp.stack([lp["ln"][i]["beta"][None, :] for i in range(3)]))

    bf16 = lambda xs: jnp.stack(xs).astype(jnp.bfloat16)
    f32 = lambda xs: jnp.stack(xs).astype(jnp.float32)
    # TODO(synk): on v7x store w_proj/w1/w2 as fp8 with per-channel scales.
    return dict(
        w_proj=bf16(w_proj), b_proj=f32(b_proj),
        w_o=bf16(w_o), b_o=f32(b_o),
        w1=bf16(w1), b1=f32(b1),
        w2=bf16(w2), b2=f32(b2),
        ln_g=f32(ln_g), ln_b=f32(ln_b),
        fin_g=final_gamma[None, :].astype(jnp.float32),
        fin_b=final_beta[None, :].astype(jnp.float32),
    )


# ----------------------------------------------------------------------------
# Pure-JAX f32 reference (mirrors the PyTorch module, eval mode)
# ----------------------------------------------------------------------------
def reference_forward(x, enc, src_mask, tgt_mask, layers, final_gamma, final_beta,
                      num_heads, eps=1e-6):
    def layer_norm(v, g, b):
        mu = jnp.mean(v, axis=-1, keepdims=True)
        var = jnp.mean((v - mu) ** 2, axis=-1, keepdims=True)
        return g * (v - mu) * jax.lax.rsqrt(var + eps) + b

    def mha(q_in, kv_in, mask, p):
        B, T, D = q_in.shape
        S = kv_in.shape[1]
        H = num_heads
        dh = D // H
        q = q_in @ p["wq"] + p["bq"]
        k = kv_in @ p["wk"] + p["bk"]
        v = kv_in @ p["wv"] + p["bv"]
        q = q.reshape(B, T, H, dh).transpose(0, 2, 1, 3)
        k = k.reshape(B, S, H, dh).transpose(0, 2, 1, 3)
        v = v.reshape(B, S, H, dh).transpose(0, 2, 1, 3)
        s = jnp.einsum("bhtd,bhsd->bhts", q, k) / math.sqrt(dh)
        s = jnp.where(mask == 0.0, -1e9, s)
        p_attn = jax.nn.softmax(s, axis=-1)
        o = jnp.einsum("bhts,bhsd->bhtd", p_attn, v)
        o = o.transpose(0, 2, 1, 3).reshape(B, T, D)
        return o @ p["wo"] + p["bo"]

    for lp in layers:
        x = layer_norm(x + mha(x, x, tgt_mask, lp["self"]),
                       lp["ln"][0]["gamma"], lp["ln"][0]["beta"])
        x = layer_norm(x + mha(x, enc, src_mask, lp["cross"]),
                       lp["ln"][1]["gamma"], lp["ln"][1]["beta"])
        ff = (jnp.maximum(x @ lp["ffn"]["w1"] + lp["ffn"]["b1"], 0.0)
              @ lp["ffn"]["w2"] + lp["ffn"]["b2"])
        x = layer_norm(x + ff, lp["ln"][2]["gamma"], lp["ln"][2]["beta"])
    return layer_norm(x, final_gamma, final_beta)


if __name__ == "__main__":
    # Small config consistent with the module's forward pass.
    num_layers, d_model, num_heads, d_ff = 2, 32, 4, 64
    B, T, S = 2, 8, 8   # batch, tgt_seq_len, src_seq_len

    key = jax.random.PRNGKey(0)
    key, kx, ke = jax.random.split(key, 3)
    x = jax.random.normal(kx, (B, T, d_model), jnp.float32)
    enc = jax.random.normal(ke, (B, S, d_model), jnp.float32)

    # src_mask: (B, 1, 1, S) all-ones; tgt_mask: (B, 1, T, T) causal.
    src_mask = jnp.ones((B, 1, 1, S), jnp.float32)
    tgt_mask = jnp.broadcast_to(
        jnp.tril(jnp.ones((T, T), jnp.float32))[None, None], (B, 1, T, T))

    layers, fin_g, fin_b = init_layer_params(key, num_layers, d_model, d_ff)
    packed = pack_params(layers, fin_g, fin_b, num_heads)

    out = decoder_forward(x, enc, src_mask, tgt_mask, packed, num_heads)
    out = jax.block_until_ready(out)
    assert out.shape == (B, T, d_model) and out.dtype == jnp.float32

    # Numerical check against the pure-f32 reference (loose tol: bf16 matmuls).
    ref = reference_forward(x, enc, src_mask, tgt_mask, layers, fin_g, fin_b, num_heads)
    max_err = float(jnp.max(jnp.abs(out - ref)))
    assert max_err < 0.1, f"kernel deviates from f32 reference by {max_err}"

    print("KERNEL_OK")
</pallas_src>

<mosaic_0001>
module attributes {stable_mosaic.version = 11 : i64} {
  func.func @_decoder_stack_kernel(%arg0: i32, %arg1: i32, %arg2: memref<2x8x32xf32, #tpu.memory_space<vmem>>, %arg3: memref<2x8x32xbf16, #tpu.memory_space<vmem>>, %arg4: memref<2x1x8xf32, #tpu.memory_space<vmem>>, %arg5: memref<2x8x8xf32, #tpu.memory_space<vmem>>, %arg6: memref<1x6x32x32xbf16, #tpu.memory_space<vmem>>, %arg7: memref<1x6x1x32xf32, #tpu.memory_space<vmem>>, %arg8: memref<1x2x32x32xbf16, #tpu.memory_space<vmem>>, %arg9: memref<1x2x1x32xf32, #tpu.memory_space<vmem>>, %arg10: memref<1x32x64xbf16, #tpu.memory_space<vmem>>, %arg11: memref<1x1x64xf32, #tpu.memory_space<vmem>>, %arg12: memref<1x64x32xbf16, #tpu.memory_space<vmem>>, %arg13: memref<1x1x32xf32, #tpu.memory_space<vmem>>, %arg14: memref<1x3x1x32xf32, #tpu.memory_space<vmem>>, %arg15: memref<1x3x1x32xf32, #tpu.memory_space<vmem>>, %arg16: memref<1x32xf32, #tpu.memory_space<vmem>>, %arg17: memref<1x32xf32, #tpu.memory_space<vmem>>, %arg18: memref<2x8x32xf32, #tpu.memory_space<vmem>>, %arg19: memref<2x8x32xf32, #tpu.memory_space<vmem>>, %arg20: memref<8x32xf32, #tpu.memory_space<vmem>>) attributes {dimension_semantics = [#tpu.dimension_semantics<parallel>, #tpu.dimension_semantics<arbitrary>], iteration_bounds = array<i64: 1, 2>, scalar_prefetch = 0 : i64, scratch_operands = 2 : i64, tpu.core_type = #tpu.core_type<tc>, window_params = [{transform_indices = @transform_0, window_bounds = array<i64: 2, 8, 32>}, {transform_indices = @transform_1, window_bounds = array<i64: 2, 8, 32>}, {transform_indices = @transform_2, window_bounds = array<i64: 2, 1, 8>}, {transform_indices = @transform_3, window_bounds = array<i64: 2, 8, 8>}, {transform_indices = @transform_4, window_bounds = array<i64: 1, 6, 32, 32>}, {transform_indices = @transform_5, window_bounds = array<i64: 1, 6, 1, 32>}, {transform_indices = @transform_6, window_bounds = array<i64: 1, 2, 32, 32>}, {transform_indices = @transform_7, window_bounds = array<i64: 1, 2, 1, 32>}, {transform_indices = @transform_8, window_bounds = array<i64: 1, 32, 64>}, {transform_indices = @transform_9, window_bounds = array<i64: 1, 1, 64>}, {transform_indices = @transform_10, window_bounds = array<i64: 1, 64, 32>}, {transform_indices = @transform_11, window_bounds = array<i64: 1, 1, 32>}, {transform_indices = @transform_12, window_bounds = array<i64: 1, 3, 1, 32>}, {transform_indices = @transform_13, window_bounds = array<i64: 1, 3, 1, 32>}, {pipeline_mode = #tpu.pipeline_mode<synchronous>, transform_indices = @transform_14, window_bounds = array<i64: 1, 32>}, {pipeline_mode = #tpu.pipeline_mode<synchronous>, transform_indices = @transform_15, window_bounds = array<i64: 1, 32>}, {transform_indices = @transform_16, window_bounds = array<i64: 2, 8, 32>}]} {
    %c1_i32 = arith.constant 1 : i32
    %0 = arith.cmpi eq, %arg1, %c1_i32 : i32
    %c0_i32 = arith.constant 0 : i32
    %1 = arith.cmpi eq, %arg1, %c0_i32 : i32
    %2 = arith.extui %1 : i1 to i32
    %c0_i32_0 = arith.constant 0 : i32
    %3 = arith.cmpi ne, %2, %c0_i32_0 : i32
    scf.if %3 {
      %c0_379 = arith.constant 0 : index
      %c0_380 = arith.constant 0 : index
      %c0_381 = arith.constant 0 : index
      %696 = vector.load %arg2[%c0_379, %c0_380, %c0_381] : memref<2x8x32xf32, #tpu.memory_space<vmem>>, vector<2x8x32xf32>
      %c0_382 = arith.constant 0 : index
      %c0_383 = arith.constant 0 : index
      %c0_384 = arith.constant 0 : index
      %697 = vector.load %arg19[%c0_382, %c0_383, %c0_384] : memref<2x8x32xf32, #tpu.memory_space<vmem>>, vector<2x8x32xf32>
      tpu.vector_store %arg19[%c0_382, %c0_383, %c0_384], %696 {strides = array<i32>} : memref<2x8x32xf32, #tpu.memory_space<vmem>>, vector<2x8x32xf32>,
    } else {
    }
    %c0 = arith.constant 0 : index
    %c0_1 = arith.constant 0 : index
    %c0_2 = arith.constant 0 : index
    %4 = vector.load %arg19[%c0, %c0_1, %c0_2] : memref<2x8x32xf32, #tpu.memory_space<vmem>>, vector<1x8x32xf32>
    %5 = vector.shape_cast %4 : vector<1x8x32xf32> to vector<8x32xf32>
    %6 = arith.truncf %5 : vector<8x32xf32> to vector<8x32xbf16>
    %c0_3 = arith.constant 0 : index
    %c0_4 = arith.constant 0 : index
    %c0_5 = arith.constant 0 : index
    %7 = vector.load %arg5[%c0_3, %c0_4, %c0_5] : memref<2x8x8xf32, #tpu.memory_space<vmem>>, vector<1x8x8xf32>
    %8 = vector.shape_cast %7 : vector<1x8x8xf32> to vector<8x8xf32>
    %c0_6 = arith.constant 0 : index
    %c0_7 = arith.constant 0 : index
    %c0_8 = arith.constant 0 : index
    %9 = vector.load %arg4[%c0_6, %c0_7, %c0_8] : memref<2x1x8xf32, #tpu.memory_space<vmem>>, vector<1x1x8xf32>
    %10 = vector.shape_cast %9 : vector<1x1x8xf32> to vector<1x8xf32>
    %c0_9 = arith.constant 0 : index
    %c0_10 = arith.constant 0 : index
    %c0_11 = arith.constant 0 : index
    %11 = vector.load %arg3[%c0_9, %c0_10, %c0_11] : memref<2x8x32xbf16, #tpu.memory_space<vmem>>, vector<1x8x32xbf16>
    %12 = vector.shape_cast %11 : vector<1x8x32xbf16> to vector<8x32xbf16>
    %c0_12 = arith.constant 0 : index
    %c0_13 = arith.constant 0 : index
    %c0_14 = arith.constant 0 : index
    %c0_15 = arith.constant 0 : index
    %13 = vector.load %arg6[%c0_12, %c0_13, %c0_14, %c0_15] : memref<1x6x32x32xbf16, #tpu.memory_space<vmem>>, vector<1x1x32x32xbf16>
    %14 = vector.shape_cast %13 : vector<1x1x32x32xbf16> to vector<32x32xbf16>
    %cst = arith.constant dense<0.000000e+00> : vector<8x32xf32>
    %15 = tpu.matmul %6, %14, %cst {dimension_numbers = #tpu.dot_dimension_numbers<[1], [0], [0], [1], [0, 0, 1, 1], [], []>} : vector<8x32xbf16>, vector<32x32xbf16>, vector<8x32xf32> -> vector<8x32xf32>
    %c0_16 = arith.constant 0 : index
    %c0_17 = arith.constant 0 : index
    %c0_18 = arith.constant 0 : index
    %c0_19 = arith.constant 0 : index
    %16 = vector.load %arg7[%c0_16, %c0_17, %c0_18, %c0_19] : memref<1x6x1x32xf32, #tpu.memory_space<vmem>>, vector<1x1x1x32xf32>
    %17 = vector.shape_cast %16 : vector<1x1x1x32xf32> to vector<1x32xf32>
    %18 = vector.broadcast %17 : vector<1x32xf32> to vector<8x32xf32>
    %19 = arith.addf %15, %18 : vector<8x32xf32>
    %c0_20 = arith.constant 0 : index
    %c1 = arith.constant 1 : index
    %c0_21 = arith.constant 0 : index
    %c0_22 = arith.constant 0 : index
    %20 = vector.load %arg6[%c0_20, %c1, %c0_21, %c0_22] : memref<1x6x32x32xbf16, #tpu.memory_space<vmem>>, vector<1x1x32x32xbf16>
    %21 = vector.shape_cast %20 : vector<1x1x32x32xbf16> to vector<32x32xbf16>
    %cst_23 = arith.constant dense<0.000000e+00> : vector<8x32xf32>
    %22 = tpu.matmul %6, %21, %cst_23 {dimension_numbers = #tpu.dot_dimension_numbers<[1], [0], [0], [1], [0, 0, 1, 1], [], []>} : vector<8x32xbf16>, vector<32x32xbf16>, vector<8x32xf32> -> vector<8x32xf32>
    %c0_24 = arith.constant 0 : index
    %c1_25 = arith.constant 1 : index
    %c0_26 = arith.constant 0 : index
    %c0_27 = arith.constant 0 : index
    %23 = vector.load %arg7[%c0_24, %c1_25, %c0_26, %c0_27] : memref<1x6x1x32xf32, #tpu.memory_space<vmem>>, vector<1x1x1x32xf32>
    %24 = vector.shape_cast %23 : vector<1x1x1x32xf32> to vector<1x32xf32>
    %25 = vector.broadcast %24 : vector<1x32xf32> to vector<8x32xf32>
    %26 = arith.addf %22, %25 : vector<8x32xf32>
    %c0_28 = arith.constant 0 : index
    %c2 = arith.constant 2 : index
    %c0_29 = arith.constant 0 : index
    %c0_30 = arith.constant 0 : index
    %27 = vector.load %arg6[%c0_28, %c2, %c0_29, %c0_30] : memref<1x6x32x32xbf16, #tpu.memory_space<vmem>>, vector<1x1x32x32xbf16>
    %28 = vector.shape_cast %27 : vector<1x1x32x32xbf16> to vector<32x32xbf16>
    %cst_31 = arith.constant dense<0.000000e+00> : vector<8x32xf32>
    %29 = tpu.matmul %6, %28, %cst_31 {dimension_numbers = #tpu.dot_dimension_numbers<[1], [0], [0], [1], [0, 0, 1, 1], [], []>} : vector<8x32xbf16>, vector<32x32xbf16>, vector<8x32xf32> -> vector<8x32xf32>
    %c0_32 = arith.constant 0 : index
    %c2_33 = arith.constant 2 : index
    %c0_34 = arith.constant 0 : index
    %c0_35 = arith.constant 0 : index
    %30 = vector.load %arg7[%c0_32, %c2_33, %c0_34, %c0_35] : memref<1x6x1x32xf32, #tpu.memory_space<vmem>>, vector<1x1x1x32xf32>
    %31 = vector.shape_cast %30 : vector<1x1x1x32xf32> to vector<1x32xf32>
    %32 = vector.broadcast %31 : vector<1x32xf32> to vector<8x32xf32>
    %33 = arith.addf %29, %32 : vector<8x32xf32>
    %34 = vector.extract_strided_slice %19 {offsets = [0, 0], sizes = [8, 8], strides = [1, 1]} : vector<8x32xf32> to vector<8x8xf32>
    %35 = arith.truncf %34 : vector<8x8xf32> to vector<8x8xbf16>
    %36 = vector.extract_strided_slice %26 {offsets = [0, 0], sizes = [8, 8], strides = [1, 1]} : vector<8x32xf32> to vector<8x8xf32>
    %37 = arith.truncf %36 : vector<8x8xf32> to vector<8x8xbf16>
    %38 = vector.extract_strided_slice %33 {offsets = [0, 0], sizes = [8, 8], strides = [1, 1]} : vector<8x32xf32> to vector<8x8xf32>
    %39 = arith.truncf %38 : vector<8x8xf32> to vector<8x8xbf16>
    "tpu.trace_start"() <{level = 10 : i32, message = "tf,sf->ts"}> : () -> ()
    %cst_36 = arith.constant dense<0.000000e+00> : vector<8x8xf32>
    %40 = tpu.matmul %35, %37, %cst_36 {dimension_numbers = #tpu.dot_dimension_numbers<[1], [1], [0], [0], [0, 0, 1, 0], [], []>} : vector<8x8xbf16>, vector<8x8xbf16>, vector<8x8xf32> -> vector<8x8xf32>
    "tpu.trace_stop"() : () -> ()
    %41 = arith.addf %40, %8 : vector<8x8xf32>
    %cst_37 = arith.constant dense<0xFF800000> : vector<8xf32>
    %42 = vector.multi_reduction <maximumf>, %41, %cst_37 [1] : vector<8x8xf32> to vector<8xf32>
    %43 = vector.shape_cast %42 : vector<8xf32> to vector<8x1xf32>
    %44 = vector.broadcast %43 : vector<8x1xf32> to vector<8x8xf32>
    %45 = arith.subf %41, %44 : vector<8x8xf32>
    %46 = math.exp %45 : vector<8x8xf32>
    %cst_38 = arith.constant dense<0.000000e+00> : vector<8xf32>
    %47 = vector.multi_reduction <add>, %46, %cst_38 [1] : vector<8x8xf32> to vector<8xf32>
    %48 = vector.shape_cast %47 : vector<8xf32> to vector<8x1xf32>
    %49 = tpu.reciprocal %48 {approx = true} : vector<8x1xf32> -> vector<8x1xf32>
    %50 = vector.broadcast %49 : vector<8x1xf32> to vector<8x8xf32>
    %51 = arith.mulf %46, %50 : vector<8x8xf32>
    %52 = arith.truncf %51 : vector<8x8xf32> to vector<8x8xbf16>
    %cst_39 = arith.constant dense<0.000000e+00> : vector<8x8xf32>
    %53 = tpu.matmul %52, %39, %cst_39 {dimension_numbers = #tpu.dot_dimension_numbers<[1], [0], [0], [1], [0, 0, 1, 1], [], []>} : vector<8x8xbf16>, vector<8x8xbf16>, vector<8x8xf32> -> vector<8x8xf32>
    %c0_40 = arith.constant 0 : index
    %c0_41 = arith.constant 0 : index
    %54 = vector.load %arg20[%c0_40, %c0_41] : memref<8x32xf32, #tpu.memory_space<vmem>>, vector<8x8xf32>
    tpu.vector_store %arg20[%c0_40, %c0_41], %53 {strides = array<i32>} : memref<8x32xf32, #tpu.memory_space<vmem>>, vector<8x8xf32>,
    %55 = vector.extract_strided_slice %19 {offsets = [0, 8], sizes = [8, 8], strides = [1, 1]} : vector<8x32xf32> to vector<8x8xf32>
    %56 = arith.truncf %55 : vector<8x8xf32> to vector<8x8xbf16>
    %57 = vector.extract_strided_slice %26 {offsets = [0, 8], sizes = [8, 8], strides = [1, 1]} : vector<8x32xf32> to vector<8x8xf32>
    %58 = arith.truncf %57 : vector<8x8xf32> to vector<8x8xbf16>
    %59 = vector.extract_strided_slice %33 {offsets = [0, 8], sizes = [8, 8], strides = [1, 1]} : vector<8x32xf32> to vector<8x8xf32>
    %60 = arith.truncf %59 : vector<8x8xf32> to vector<8x8xbf16>
    "tpu.trace_start"() <{level = 10 : i32, message = "tf,sf->ts"}> : () -> ()
    %cst_42 = arith.constant dense<0.000000e+00> : vector<8x8xf32>
    %61 = tpu.matmul %56, %58, %cst_42 {dimension_numbers = #tpu.dot_dimension_numbers<[1], [1], [0], [0], [0, 0, 1, 0], [], []>} : vector<8x8xbf16>, vector<8x8xbf16>, vector<8x8xf32> -> vector<8x8xf32>
    "tpu.trace_stop"() : () -> ()
    %62 = arith.addf %61, %8 : vector<8x8xf32>
    %cst_43 = arith.constant dense<0xFF800000> : vector<8xf32>
    %63 = vector.multi_reduction <maximumf>, %62, %cst_43 [1] : vector<8x8xf32> to vector<8xf32>
    %64 = vector.shape_cast %63 : vector<8xf32> to vector<8x1xf32>
    %65 = vector.broadcast %64 : vector<8x1xf32> to vector<8x8xf32>
    %66 = arith.subf %62, %65 : vector<8x8xf32>
    %67 = math.exp %66 : vector<8x8xf32>
    %cst_44 = arith.constant dense<0.000000e+00> : vector<8xf32>
    %68 = vector.multi_reduction <add>, %67, %cst_44 [1] : vector<8x8xf32> to vector<8xf32>
    %69 = vector.shape_cast %68 : vector<8xf32> to vector<8x1xf32>
    %70 = tpu.reciprocal %69 {approx = true} : vector<8x1xf32> -> vector<8x1xf32>
    %71 = vector.broadcast %70 : vector<8x1xf32> to vector<8x8xf32>
    %72 = arith.mulf %67, %71 : vector<8x8xf32>
    %73 = arith.truncf %72 : vector<8x8xf32> to vector<8x8xbf16>
    %cst_45 = arith.constant dense<0.000000e+00> : vector<8x8xf32>
    %74 = tpu.matmul %73, %60, %cst_45 {dimension_numbers = #tpu.dot_dimension_numbers<[1], [0], [0], [1], [0, 0, 1, 1], [], []>} : vector<8x8xbf16>, vector<8x8xbf16>, vector<8x8xf32> -> vector<8x8xf32>
    %c0_46 = arith.constant 0 : index
    %c8 = arith.constant 8 : index
    %75 = vector.load %arg20[%c0_46, %c8] : memref<8x32xf32, #tpu.memory_space<vmem>>, vector<8x8xf32>
    tpu.vector_store %arg20[%c0_46, %c8], %74 {strides = array<i32>} : memref<8x32xf32, #tpu.memory_space<vmem>>, vector<8x8xf32>,
    %76 = vector.extract_strided_slice %19 {offsets = [0, 16], sizes = [8, 8], strides = [1, 1]} : vector<8x32xf32> to vector<8x8xf32>
    %77 = arith.truncf %76 : vector<8x8xf32> to vector<8x8xbf16>
    %78 = vector.extract_strided_slice %26 {offsets = [0, 16], sizes = [8, 8], strides = [1, 1]} : vector<8x32xf32> to vector<8x8xf32>
    %79 = arith.truncf %78 : vector<8x8xf32> to vector<8x8xbf16>
    %80 = vector.extract_strided_slice %33 {offsets = [0, 16], sizes = [8, 8], strides = [1, 1]} : vector<8x32xf32> to vector<8x8xf32>
    %81 = arith.truncf %80 : vector<8x8xf32> to vector<8x8xbf16>
    "tpu.trace_start"() <{level = 10 : i32, message = "tf,sf->ts"}> : () -> ()
    %cst_47 = arith.constant dense<0.000000e+00> : vector<8x8xf32>
    %82 = tpu.matmul %77, %79, %cst_47 {dimension_numbers = #tpu.dot_dimension_numbers<[1], [1], [0], [0], [0, 0, 1, 0], [], []>} : vector<8x8xbf16>, vector<8x8xbf16>, vector<8x8xf32> -> vector<8x8xf32>
    "tpu.trace_stop"() : () -> ()
    %83 = arith.addf %82, %8 : vector<8x8xf32>
    %cst_48 = arith.constant dense<0xFF800000> : vector<8xf32>
    %84 = vector.multi_reduction <maximumf>, %83, %cst_48 [1] : vector<8x8xf32> to vector<8xf32>
    %85 = vector.shape_cast %84 : vector<8xf32> to vector<8x1xf32>
    %86 = vector.broadcast %85 : vector<8x1xf32> to vector<8x8xf32>
    %87 = arith.subf %83, %86 : vector<8x8xf32>
    %88 = math.exp %87 : vector<8x8xf32>
    %cst_49 = arith.constant dense<0.000000e+00> : vector<8xf32>
    %89 = vector.multi_reduction <add>, %88, %cst_49 [1] : vector<8x8xf32> to vector<8xf32>
    %90 = vector.shape_cast %89 : vector<8xf32> to vector<8x1xf32>
    %91 = tpu.reciprocal %90 {approx = true} : vector<8x1xf32> -> vector<8x1xf32>
    %92 = vector.broadcast %91 : vector<8x1xf32> to vector<8x8xf32>
    %93 = arith.mulf %88, %92 : vector<8x8xf32>
    %94 = arith.truncf %93 : vector<8x8xf32> to vector<8x8xbf16>
    %cst_50 = arith.constant dense<0.000000e+00> : vector<8x8xf32>
    %95 = tpu.matmul %94, %81, %cst_50 {dimension_numbers = #tpu.dot_dimension_numbers<[1], [0], [0], [1], [0, 0, 1, 1], [], []>} : vector<8x8xbf16>, vector<8x8xbf16>, vector<8x8xf32> -> vector<8x8xf32>
    %c0_51 = arith.constant 0 : index
    %c16 = arith.constant 16 : index
    %96 = vector.load %arg20[%c0_51, %c16] : memref<8x32xf32, #tpu.memory_space<vmem>>, vector<8x8xf32>
    tpu.vector_store %arg20[%c0_51, %c16], %95 {strides = array<i32>} : memref<8x32xf32, #tpu.memory_space<vmem>>, vector<8x8xf32>,
    %97 = vector.extract_strided_slice %19 {offsets = [0, 24], sizes = [8, 8], strides = [1, 1]} : vector<8x32xf32> to vector<8x8xf32>
    %98 = arith.truncf %97 : vector<8x8xf32> to vector<8x8xbf16>
    %99 = vector.extract_strided_slice %26 {offsets = [0, 24], sizes = [8, 8], strides = [1, 1]} : vector<8x32xf32> to vector<8x8xf32>
    %100 = arith.truncf %99 : vector<8x8xf32> to vector<8x8xbf16>
    %101 = vector.extract_strided_slice %33 {offsets = [0, 24], sizes = [8, 8], strides = [1, 1]} : vector<8x32xf32> to vector<8x8xf32>
    %102 = arith.truncf %101 : vector<8x8xf32> to vector<8x8xbf16>
    "tpu.trace_start"() <{level = 10 : i32, message = "tf,sf->ts"}> : () -> ()
    %cst_52 = arith.constant dense<0.000000e+00> : vector<8x8xf32>
    %103 = tpu.matmul %98, %100, %cst_52 {dimension_numbers = #tpu.dot_dimension_numbers<[1], [1], [0], [0], [0, 0, 1, 0], [], []>} : vector<8x8xbf16>, vector<8x8xbf16>, vector<8x8xf32> -> vector<8x8xf32>
    "tpu.trace_stop"() : () -> ()
    %104 = arith.addf %103, %8 : vector<8x8xf32>
    %cst_53 = arith.constant dense<0xFF800000> : vector<8xf32>
    %105 = vector.multi_reduction <maximumf>, %104, %cst_53 [1] : vector<8x8xf32> to vector<8xf32>
    %106 = vector.shape_cast %105 : vector<8xf32> to vector<8x1xf32>
    %107 = vector.broadcast %106 : vector<8x1xf32> to vector<8x8xf32>
    %108 = arith.subf %104, %107 : vector<8x8xf32>
    %109 = math.exp %108 : vector<8x8xf32>
    %cst_54 = arith.constant dense<0.000000e+00> : vector<8xf32>
    %110 = vector.multi_reduction <add>, %109, %cst_54 [1] : vector<8x8xf32> to vector<8xf32>
    %111 = vector.shape_cast %110 : vector<8xf32> to vector<8x1xf32>
    %112 = tpu.reciprocal %111 {approx = true} : vector<8x1xf32> -> vector<8x1xf32>
    %113 = vector.broadcast %112 : vector<8x1xf32> to vector<8x8xf32>
    %114 = arith.mulf %109, %113 : vector<8x8xf32>
    %115 = arith.truncf %114 : vector<8x8xf32> to vector<8x8xbf16>
    %cst_55 = arith.constant dense<0.000000e+00> : vector<8x8xf32>
    %116 = tpu.matmul %115, %102, %cst_55 {dimension_numbers = #tpu.dot_dimension_numbers<[1], [0], [0], [1], [0, 0, 1, 1], [], []>} : vector<8x8xbf16>, vector<8x8xbf16>, vector<8x8xf32> -> vector<8x8xf32>
    %c0_56 = arith.constant 0 : index
    %c24 = arith.constant 24 : index
    %117 = vector.load %arg20[%c0_56, %c24] : memref<8x32xf32, #tpu.memory_space<vmem>>, vector<8x8xf32>
    tpu.vector_store %arg20[%c0_56, %c24], %116 {strides = array<i32>} : memref<8x32xf32, #tpu.memory_space<vmem>>, vector<8x8xf32>,
    %c0_57 = arith.constant 0 : index
    %c0_58 = arith.constant 0 : index
    %118 = vector.load %arg20[%c0_57, %c0_58] : memref<8x32xf32, #tpu.memory_space<vmem>>, vector<8x32xf32>
    %119 = arith.truncf %118 : vector<8x32xf32> to vector<8x32xbf16>
    %c0_59 = arith.constant 0 : index
    %c0_60 = arith.constant 0 : index
    %c0_61 = arith.constant 0 : index
    %c0_62 = arith.constant 0 : index
    %120 = vector.load %arg8[%c0_59, %c0_60, %c0_61, %c0_62] : memref<1x2x32x32xbf16, #tpu.memory_space<vmem>>, vector<1x1x32x32xbf16>
    %121 = vector.shape_cast %120 : vector<1x1x32x32xbf16> to vector<32x32xbf16>
    %cst_63 = arith.constant dense<0.000000e+00> : vector<8x32xf32>
    %122 = tpu.matmul %119, %121, %cst_63 {dimension_numbers = #tpu.dot_dimension_numbers<[1], [0], [0], [1], [0, 0, 1, 1], [], []>} : vector<8x32xbf16>, vector<32x32xbf16>, vector<8x32xf32> -> vector<8x32xf32>
    %c0_64 = arith.constant 0 : index
    %c0_65 = arith.constant 0 : index
    %c0_66 = arith.constant 0 : index
    %c0_67 = arith.constant 0 : index
    %123 = vector.load %arg9[%c0_64, %c0_65, %c0_66, %c0_67] : memref<1x2x1x32xf32, #tpu.memory_space<vmem>>, vector<1x1x1x32xf32>
    %124 = vector.shape_cast %123 : vector<1x1x1x32xf32> to vector<1x32xf32>
    %125 = vector.broadcast %124 : vector<1x32xf32> to vector<8x32xf32>
    %126 = arith.addf %122, %125 : vector<8x32xf32>
    %127 = arith.addf %5, %126 : vector<8x32xf32>
    %c0_68 = arith.constant 0 : index
    %c0_69 = arith.constant 0 : index
    %c0_70 = arith.constant 0 : index
    %c0_71 = arith.constant 0 : index
    %128 = vector.load %arg14[%c0_68, %c0_69, %c0_70, %c0_71] : memref<1x3x1x32xf32, #tpu.memory_space<vmem>>, vector<1x1x1x32xf32>
    %129 = vector.shape_cast %128 : vector<1x1x1x32xf32> to vector<1x32xf32>
    %c0_72 = arith.constant 0 : index
    %c0_73 = arith.constant 0 : index
    %c0_74 = arith.constant 0 : index
    %c0_75 = arith.constant 0 : index
    %130 = vector.load %arg15[%c0_72, %c0_73, %c0_74, %c0_75] : memref<1x3x1x32xf32, #tpu.memory_space<vmem>>, vector<1x1x1x32xf32>
    %131 = vector.shape_cast %130 : vector<1x1x1x32xf32> to vector<1x32xf32>
    %cst_76 = arith.constant dense<0.000000e+00> : vector<8xf32>
    %132 = vector.multi_reduction <add>, %127, %cst_76 [1] : vector<8x32xf32> to vector<8xf32>
    %133 = vector.shape_cast %132 : vector<8xf32> to vector<8x1xf32>
    %cst_77 = arith.constant 3.200000e+01 : f32
    %134 = vector.broadcast %cst_77 : f32 to vector<8x1xf32>
    %135 = arith.divf %133, %134 : vector<8x1xf32>
    %136 = vector.broadcast %135 : vector<8x1xf32> to vector<8x32xf32>
    %137 = arith.subf %127, %136 : vector<8x32xf32>
    %138 = arith.mulf %137, %137 : vector<8x32xf32>
    %cst_78 = arith.constant dense<0.000000e+00> : vector<8xf32>
    %139 = vector.multi_reduction <add>, %138, %cst_78 [1] : vector<8x32xf32> to vector<8xf32>
    %140 = vector.shape_cast %139 : vector<8xf32> to vector<8x1xf32>
    %cst_79 = arith.constant 3.200000e+01 : f32
    %141 = vector.broadcast %cst_79 : f32 to vector<8x1xf32>
    %142 = arith.divf %140, %141 : vector<8x1xf32>
    %143 = vector.broadcast %135 : vector<8x1xf32> to vector<8x32xf32>
    %144 = arith.subf %127, %143 : vector<8x32xf32>
    %145 = vector.broadcast %129 : vector<1x32xf32> to vector<8x32xf32>
    %146 = arith.mulf %145, %144 : vector<8x32xf32>
    %cst_80 = arith.constant 9.99999997E-7 : f32
    %147 = vector.broadcast %cst_80 : f32 to vector<8x1xf32>
    %148 = arith.addf %142, %147 : vector<8x1xf32>
    %149 = math.rsqrt %148 : vector<8x1xf32>
    %150 = vector.broadcast %149 : vector<8x1xf32> to vector<8x32xf32>
    %151 = arith.mulf %146, %150 : vector<8x32xf32>
    %152 = vector.broadcast %131 : vector<1x32xf32> to vector<8x32xf32>
    %153 = arith.addf %151, %152 : vector<8x32xf32>
    %154 = arith.truncf %153 : vector<8x32xf32> to vector<8x32xbf16>
    %c0_81 = arith.constant 0 : index
    %c3 = arith.constant 3 : index
    %c0_82 = arith.constant 0 : index
    %c0_83 = arith.constant 0 : index
    %155 = vector.load %arg6[%c0_81, %c3, %c0_82, %c0_83] : memref<1x6x32x32xbf16, #tpu.memory_space<vmem>>, vector<1x1x32x32xbf16>
    %156 = vector.shape_cast %155 : vector<1x1x32x32xbf16> to vector<32x32xbf16>
    %cst_84 = arith.constant dense<0.000000e+00> : vector<8x32xf32>
    %157 = tpu.matmul %154, %156, %cst_84 {dimension_numbers = #tpu.dot_dimension_numbers<[1], [0], [0], [1], [0, 0, 1, 1], [], []>} : vector<8x32xbf16>, vector<32x32xbf16>, vector<8x32xf32> -> vector<8x32xf32>
    %c0_85 = arith.constant 0 : index
    %c3_86 = arith.constant 3 : index
    %c0_87 = arith.constant 0 : index
    %c0_88 = arith.constant 0 : index
    %158 = vector.load %arg7[%c0_85, %c3_86, %c0_87, %c0_88] : memref<1x6x1x32xf32, #tpu.memory_space<vmem>>, vector<1x1x1x32xf32>
    %159 = vector.shape_cast %158 : vector<1x1x1x32xf32> to vector<1x32xf32>
    %160 = vector.broadcast %159 : vector<1x32xf32> to vector<8x32xf32>
    %161 = arith.addf %157, %160 : vector<8x32xf32>
    %c0_89 = arith.constant 0 : index
    %c4 = arith.constant 4 : index
    %c0_90 = arith.constant 0 : index
    %c0_91 = arith.constant 0 : index
    %162 = vector.load %arg6[%c0_89, %c4, %c0_90, %c0_91] : memref<1x6x32x32xbf16, #tpu.memory_space<vmem>>, vector<1x1x32x32xbf16>
    %163 = vector.shape_cast %162 : vector<1x1x32x32xbf16> to vector<32x32xbf16>
    %cst_92 = arith.constant dense<0.000000e+00> : vector<8x32xf32>
    %164 = tpu.matmul %12, %163, %cst_92 {dimension_numbers = #tpu.dot_dimension_numbers<[1], [0], [0], [1], [0, 0, 1, 1], [], []>} : vector<8x32xbf16>, vector<32x32xbf16>, vector<8x32xf32> -> vector<8x32xf32>
    %c0_93 = arith.constant 0 : index
    %c4_94 = arith.constant 4 : index
    %c0_95 = arith.constant 0 : index
    %c0_96 = arith.constant 0 : index
    %165 = vector.load %arg7[%c0_93, %c4_94, %c0_95, %c0_96] : memref<1x6x1x32xf32, #tpu.memory_space<vmem>>, vector<1x1x1x32xf32>
    %166 = vector.shape_cast %165 : vector<1x1x1x32xf32> to vector<1x32xf32>
    %167 = vector.broadcast %166 : vector<1x32xf32> to vector<8x32xf32>
    %168 = arith.addf %164, %167 : vector<8x32xf32>
    %c0_97 = arith.constant 0 : index
    %c5 = arith.constant 5 : index
    %c0_98 = arith.constant 0 : index
    %c0_99 = arith.constant 0 : index
    %169 = vector.load %arg6[%c0_97, %c5, %c0_98, %c0_99] : memref<1x6x32x32xbf16, #tpu.memory_space<vmem>>, vector<1x1x32x32xbf16>
    %170 = vector.shape_cast %169 : vector<1x1x32x32xbf16> to vector<32x32xbf16>
    %cst_100 = arith.constant dense<0.000000e+00> : vector<8x32xf32>
    %171 = tpu.matmul %12, %170, %cst_100 {dimension_numbers = #tpu.dot_dimension_numbers<[1], [0], [0], [1], [0, 0, 1, 1], [], []>} : vector<8x32xbf16>, vector<32x32xbf16>, vector<8x32xf32> -> vector<8x32xf32>
    %c0_101 = arith.constant 0 : index
    %c5_102 = arith.constant 5 : index
    %c0_103 = arith.constant 0 : index
    %c0_104 = arith.constant 0 : index
    %172 = vector.load %arg7[%c0_101, %c5_102, %c0_103, %c0_104] : memref<1x6x1x32xf32, #tpu.memory_space<vmem>>, vector<1x1x1x32xf32>
    %173 = vector.shape_cast %172 : vector<1x1x1x32xf32> to vector<1x32xf32>
    %174 = vector.broadcast %173 : vector<1x32xf32> to vector<8x32xf32>
    %175 = arith.addf %171, %174 : vector<8x32xf32>
    %176 = vector.extract_strided_slice %161 {offsets = [0, 0], sizes = [8, 8], strides = [1, 1]} : vector<8x32xf32> to vector<8x8xf32>
    %177 = arith.truncf %176 : vector<8x8xf32> to vector<8x8xbf16>
    %178 = vector.extract_strided_slice %168 {offsets = [0, 0], sizes = [8, 8], strides = [1, 1]} : vector<8x32xf32> to vector<8x8xf32>
    %179 = arith.truncf %178 : vector<8x8xf32> to vector<8x8xbf16>
    %180 = vector.extract_strided_slice %175 {offsets = [0, 0], sizes = [8, 8], strides = [1, 1]} : vector<8x32xf32> to vector<8x8xf32>
    %181 = arith.truncf %180 : vector<8x8xf32> to vector<8x8xbf16>
    "tpu.trace_start"() <{level = 10 : i32, message = "tf,sf->ts"}> : () -> ()
    %cst_105 = arith.constant dense<0.000000e+00> : vector<8x8xf32>
    %182 = tpu.matmul %177, %179, %cst_105 {dimension_numbers = #tpu.dot_dimension_numbers<[1], [1], [0], [0], [0, 0, 1, 0], [], []>} : vector<8x8xbf16>, vector<8x8xbf16>, vector<8x8xf32> -> vector<8x8xf32>
    "tpu.trace_stop"() : () -> ()
    %183 = vector.broadcast %10 : vector<1x8xf32> to vector<8x8xf32>
    %184 = arith.addf %182, %183 : vector<8x8xf32>
    %cst_106 = arith.constant dense<0xFF800000> : vector<8xf32>
    %185 = vector.multi_reduction <maximumf>, %184, %cst_106 [1] : vector<8x8xf32> to vector<8xf32>
    %186 = vector.shape_cast %185 : vector<8xf32> to vector<8x1xf32>
    %187 = vector.broadcast %186 : vector<8x1xf32> to vector<8x8xf32>
    %188 = arith.subf %184, %187 : vector<8x8xf32>
    %189 = math.exp %188 : vector<8x8xf32>
    %cst_107 = arith.constant dense<0.000000e+00> : vector<8xf32>
    %190 = vector.multi_reduction <add>, %189, %cst_107 [1] : vector<8x8xf32> to vector<8xf32>
    %191 = vector.shape_cast %190 : vector<8xf32> to vector<8x1xf32>
    %192 = tpu.reciprocal %191 {approx = true} : vector<8x1xf32> -> vector<8x1xf32>
    %193 = vector.broadcast %192 : vector<8x1xf32> to vector<8x8xf32>
    %194 = arith.mulf %189, %193 : vector<8x8xf32>
    %195 = arith.truncf %194 : vector<8x8xf32> to vector<8x8xbf16>
    %cst_108 = arith.constant dense<0.000000e+00> : vector<8x8xf32>
    %196 = tpu.matmul %195, %181, %cst_108 {dimension_numbers = #tpu.dot_dimension_numbers<[1], [0], [0], [1], [0, 0, 1, 1], [], []>} : vector<8x8xbf16>, vector<8x8xbf16>, vector<8x8xf32> -> vector<8x8xf32>
    %c0_109 = arith.constant 0 : index
    %c0_110 = arith.constant 0 : index
    %197 = vector.load %arg20[%c0_109, %c0_110] : memref<8x32xf32, #tpu.memory_space<vmem>>, vector<8x8xf32>
    tpu.vector_store %arg20[%c0_109, %c0_110], %196 {strides = array<i32>} : memref<8x32xf32, #tpu.memory_space<vmem>>, vector<8x8xf32>,
    %198 = vector.extract_strided_slice %161 {offsets = [0, 8], sizes = [8, 8], strides = [1, 1]} : vector<8x32xf32> to vector<8x8xf32>
    %199 = arith.truncf %198 : vector<8x8xf32> to vector<8x8xbf16>
    %200 = vector.extract_strided_slice %168 {offsets = [0, 8], sizes = [8, 8], strides = [1, 1]} : vector<8x32xf32> to vector<8x8xf32>
    %201 = arith.truncf %200 : vector<8x8xf32> to vector<8x8xbf16>
    %202 = vector.extract_strided_slice %175 {offsets = [0, 8], sizes = [8, 8], strides = [1, 1]} : vector<8x32xf32> to vector<8x8xf32>
    %203 = arith.truncf %202 : vector<8x8xf32> to vector<8x8xbf16>
    "tpu.trace_start"() <{level = 10 : i32, message = "tf,sf->ts"}> : () -> ()
    %cst_111 = arith.constant dense<0.000000e+00> : vector<8x8xf32>
    %204 = tpu.matmul %199, %201, %cst_111 {dimension_numbers = #tpu.dot_dimension_numbers<[1], [1], [0], [0], [0, 0, 1, 0], [], []>} : vector<8x8xbf16>, vector<8x8xbf16>, vector<8x8xf32> -> vector<8x8xf32>
    "tpu.trace_stop"() : () -> ()
    %205 = vector.broadcast %10 : vector<1x8xf32> to vector<8x8xf32>
    %206 = arith.addf %204, %205 : vector<8x8xf32>
    %cst_112 = arith.constant dense<0xFF800000> : vector<8xf32>
    %207 = vector.multi_reduction <maximumf>, %206, %cst_112 [1] : vector<8x8xf32> to vector<8xf32>
    %208 = vector.shape_cast %207 : vector<8xf32> to vector<8x1xf32>
    %209 = vector.broadcast %208 : vector<8x1xf32> to vector<8x8xf32>
    %210 = arith.subf %206, %209 : vector<8x8xf32>
    %211 = math.exp %210 : vector<8x8xf32>
    %cst_113 = arith.constant dense<0.000000e+00> : vector<8xf32>
    %212 = vector.multi_reduction <add>, %211, %cst_113 [1] : vector<8x8xf32> to vector<8xf32>
    %213 = vector.shape_cast %212 : vector<8xf32> to vector<8x1xf32>
    %214 = tpu.reciprocal %213 {approx = true} : vector<8x1xf32> -> vector<8x1xf32>
    %215 = vector.broadcast %214 : vector<8x1xf32> to vector<8x8xf32>
    %216 = arith.mulf %211, %215 : vector<8x8xf32>
    %217 = arith.truncf %216 : vector<8x8xf32> to vector<8x8xbf16>
    %cst_114 = arith.constant dense<0.000000e+00> : vector<8x8xf32>
    %218 = tpu.matmul %217, %203, %cst_114 {dimension_numbers = #tpu.dot_dimension_numbers<[1], [0], [0], [1], [0, 0, 1, 1], [], []>} : vector<8x8xbf16>, vector<8x8xbf16>, vector<8x8xf32> -> vector<8x8xf32>
    %c0_115 = arith.constant 0 : index
    %c8_116 = arith.constant 8 : index
    %219 = vector.load %arg20[%c0_115, %c8_116] : memref<8x32xf32, #tpu.memory_space<vmem>>, vector<8x8xf32>
    tpu.vector_store %arg20[%c0_115, %c8_116], %218 {strides = array<i32>} : memref<8x32xf32, #tpu.memory_space<vmem>>, vector<8x8xf32>,
    %220 = vector.extract_strided_slice %161 {offsets = [0, 16], sizes = [8, 8], strides = [1, 1]} : vector<8x32xf32> to vector<8x8xf32>
    %221 = arith.truncf %220 : vector<8x8xf32> to vector<8x8xbf16>
    %222 = vector.extract_strided_slice %168 {offsets = [0, 16], sizes = [8, 8], strides = [1, 1]} : vector<8x32xf32> to vector<8x8xf32>
    %223 = arith.truncf %222 : vector<8x8xf32> to vector<8x8xbf16>
    %224 = vector.extract_strided_slice %175 {offsets = [0, 16], sizes = [8, 8], strides = [1, 1]} : vector<8x32xf32> to vector<8x8xf32>
    %225 = arith.truncf %224 : vector<8x8xf32> to vector<8x8xbf16>
    "tpu.trace_start"() <{level = 10 : i32, message = "tf,sf->ts"}> : () -> ()
    %cst_117 = arith.constant dense<0.000000e+00> : vector<8x8xf32>
    %226 = tpu.matmul %221, %223, %cst_117 {dimension_numbers = #tpu.dot_dimension_numbers<[1], [1], [0], [0], [0, 0, 1, 0], [], []>} : vector<8x8xbf16>, vector<8x8xbf16>, vector<8x8xf32> -> vector<8x8xf32>
    "tpu.trace_stop"() : () -> ()
    %227 = vector.broadcast %10 : vector<1x8xf32> to vector<8x8xf32>
    %228 = arith.addf %226, %227 : vector<8x8xf32>
    %cst_118 = arith.constant dense<0xFF800000> : vector<8xf32>
    %229 = vector.multi_reduction <maximumf>, %228, %cst_118 [1] : vector<8x8xf32> to vector<8xf32>
    %230 = vector.shape_cast %229 : vector<8xf32> to vector<8x1xf32>
    %231 = vector.broadcast %230 : vector<8x1xf32> to vector<8x8xf32>
    %232 = arith.subf %228, %231 : vector<8x8xf32>
    %233 = math.exp %232 : vector<8x8xf32>
    %cst_119 = arith.constant dense<0.000000e+00> : vector<8xf32>
    %234 = vector.multi_reduction <add>, %233, %cst_119 [1] : vector<8x8xf32> to vector<8xf32>
    %235 = vector.shape_cast %234 : vector<8xf32> to vector<8x1xf32>
    %236 = tpu.reciprocal %235 {approx = true} : vector<8x1xf32> -> vector<8x1xf32>
    %237 = vector.broadcast %236 : vector<8x1xf32> to vector<8x8xf32>
    %238 = arith.mulf %233, %237 : vector<8x8xf32>
    %239 = arith.truncf %238 : vector<8x8xf32> to vector<8x8xbf16>
    %cst_120 = arith.constant dense<0.000000e+00> : vector<8x8xf32>
    %240 = tpu.matmul %239, %225, %cst_120 {dimension_numbers = #tpu.dot_dimension_numbers<[1], [0], [0], [1], [0, 0, 1, 1], [], []>} : vector<8x8xbf16>, vector<8x8xbf16>, vector<8x8xf32> -> vector<8x8xf32>
    %c0_121 = arith.constant 0 : index
    %c16_122 = arith.constant 16 : index
    %241 = vector.load %arg20[%c0_121, %c16_122] : memref<8x32xf32, #tpu.memory_space<vmem>>, vector<8x8xf32>
    tpu.vector_store %arg20[%c0_121, %c16_122], %240 {strides = array<i32>} : memref<8x32xf32, #tpu.memory_space<vmem>>, vector<8x8xf32>,
    %242 = vector.extract_strided_slice %161 {offsets = [0, 24], sizes = [8, 8], strides = [1, 1]} : vector<8x32xf32> to vector<8x8xf32>
    %243 = arith.truncf %242 : vector<8x8xf32> to vector<8x8xbf16>
    %244 = vector.extract_strided_slice %168 {offsets = [0, 24], sizes = [8, 8], strides = [1, 1]} : vector<8x32xf32> to vector<8x8xf32>
    %245 = arith.truncf %244 : vector<8x8xf32> to vector<8x8xbf16>
    %246 = vector.extract_strided_slice %175 {offsets = [0, 24], sizes = [8, 8], strides = [1, 1]} : vector<8x32xf32> to vector<8x8xf32>
    %247 = arith.truncf %246 : vector<8x8xf32> to vector<8x8xbf16>
    "tpu.trace_start"() <{level = 10 : i32, message = "tf,sf->ts"}> : () -> ()
    %cst_123 = arith.constant dense<0.000000e+00> : vector<8x8xf32>
    %248 = tpu.matmul %243, %245, %cst_123 {dimension_numbers = #tpu.dot_dimension_numbers<[1], [1], [0], [0], [0, 0, 1, 0], [], []>} : vector<8x8xbf16>, vector<8x8xbf16>, vector<8x8xf32> -> vector<8x8xf32>
    "tpu.trace_stop"() : () -> ()
    %249 = vector.broadcast %10 : vector<1x8xf32> to vector<8x8xf32>
    %250 = arith.addf %248, %249 : vector<8x8xf32>
    %cst_124 = arith.constant dense<0xFF800000> : vector<8xf32>
    %251 = vector.multi_reduction <maximumf>, %250, %cst_124 [1] : vector<8x8xf32> to vector<8xf32>
    %252 = vector.shape_cast %251 : vector<8xf32> to vector<8x1xf32>
    %253 = vector.broadcast %252 : vector<8x1xf32> to vector<8x8xf32>
    %254 = arith.subf %250, %253 : vector<8x8xf32>
    %255 = math.exp %254 : vector<8x8xf32>
    %cst_125 = arith.constant dense<0.000000e+00> : vector<8xf32>
    %256 = vector.multi_reduction <add>, %255, %cst_125 [1] : vector<8x8xf32> to vector<8xf32>
    %257 = vector.shape_cast %256 : vector<8xf32> to vector<8x1xf32>
    %258 = tpu.reciprocal %257 {approx = true} : vector<8x1xf32> -> vector<8x1xf32>
    %259 = vector.broadcast %258 : vector<8x1xf32> to vector<8x8xf32>
    %260 = arith.mulf %255, %259 : vector<8x8xf32>
    %261 = arith.truncf %260 : vector<8x8xf32> to vector<8x8xbf16>
    %cst_126 = arith.constant dense<0.000000e+00> : vector<8x8xf32>
    %262 = tpu.matmul %261, %247, %cst_126 {dimension_numbers = #tpu.dot_dimension_numbers<[1], [0], [0], [1], [0, 0, 1, 1], [], []>} : vector<8x8xbf16>, vector<8x8xbf16>, vector<8x8xf32> -> vector<8x8xf32>
    %c0_127 = arith.constant 0 : index
    %c24_128 = arith.constant 24 : index
    %263 = vector.load %arg20[%c0_127, %c24_128] : memref<8x32xf32, #tpu.memory_space<vmem>>, vector<8x8xf32>
    tpu.vector_store %arg20[%c0_127, %c24_128], %262 {strides = array<i32>} : memref<8x32xf32, #tpu.memory_space<vmem>>, vector<8x8xf32>,
    %c0_129 = arith.constant 0 : index
    %c0_130 = arith.constant 0 : index
    %264 = vector.load %arg20[%c0_129, %c0_130] : memref<8x32xf32, #tpu.memory_space<vmem>>, vector<8x32xf32>
    %265 = arith.truncf %264 : vector<8x32xf32> to vector<8x32xbf16>
    %c0_131 = arith.constant 0 : index
    %c1_132 = arith.constant 1 : index
    %c0_133 = arith.constant 0 : index
    %c0_134 = arith.constant 0 : index
    %266 = vector.load %arg8[%c0_131, %c1_132, %c0_133, %c0_134] : memref<1x2x32x32xbf16, #tpu.memory_space<vmem>>, vector<1x1x32x32xbf16>
    %267 = vector.shape_cast %266 : vector<1x1x32x32xbf16> to vector<32x32xbf16>
    %cst_135 = arith.constant dense<0.000000e+00> : vector<8x32xf32>
    %268 = tpu.matmul %265, %267, %cst_135 {dimension_numbers = #tpu.dot_dimension_numbers<[1], [0], [0], [1], [0, 0, 1, 1], [], []>} : vector<8x32xbf16>, vector<32x32xbf16>, vector<8x32xf32> -> vector<8x32xf32>
    %c0_136 = arith.constant 0 : index
    %c1_137 = arith.constant 1 : index
    %c0_138 = arith.constant 0 : index
    %c0_139 = arith.constant 0 : index
    %269 = vector.load %arg9[%c0_136, %c1_137, %c0_138, %c0_139] : memref<1x2x1x32xf32, #tpu.memory_space<vmem>>, vector<1x1x1x32xf32>
    %270 = vector.shape_cast %269 : vector<1x1x1x32xf32> to vector<1x32xf32>
    %271 = vector.broadcast %270 : vector<1x32xf32> to vector<8x32xf32>
    %272 = arith.addf %268, %271 : vector<8x32xf32>
    %273 = arith.addf %153, %272 : vector<8x32xf32>
    %c0_140 = arith.constant 0 : index
    %c1_141 = arith.constant 1 : index
    %c0_142 = arith.constant 0 : index
    %c0_143 = arith.constant 0 : index
    %274 = vector.load %arg14[%c0_140, %c1_141, %c0_142, %c0_143] : memref<1x3x1x32xf32, #tpu.memory_space<vmem>>, vector<1x1x1x32xf32>
    %275 = vector.shape_cast %274 : vector<1x1x1x32xf32> to vector<1x32xf32>
    %c0_144 = arith.constant 0 : index
    %c1_145 = arith.constant 1 : index
    %c0_146 = arith.constant 0 : index
    %c0_147 = arith.constant 0 : index
    %276 = vector.load %arg15[%c0_144, %c1_145, %c0_146, %c0_147] : memref<1x3x1x32xf32, #tpu.memory_space<vmem>>, vector<1x1x1x32xf32>
    %277 = vector.shape_cast %276 : vector<1x1x1x32xf32> to vector<1x32xf32>
    %cst_148 = arith.constant dense<0.000000e+00> : vector<8xf32>
    %278 = vector.multi_reduction <add>, %273, %cst_148 [1] : vector<8x32xf32> to vector<8xf32>
    %279 = vector.shape_cast %278 : vector<8xf32> to vector<8x1xf32>
    %cst_149 = arith.constant 3.200000e+01 : f32
    %280 = vector.broadcast %cst_149 : f32 to vector<8x1xf32>
    %281 = arith.divf %279, %280 : vector<8x1xf32>
    %282 = vector.broadcast %281 : vector<8x1xf32> to vector<8x32xf32>
    %283 = arith.subf %273, %282 : vector<8x32xf32>
    %284 = arith.mulf %283, %283 : vector<8x32xf32>
    %cst_150 = arith.constant dense<0.000000e+00> : vector<8xf32>
    %285 = vector.multi_reduction <add>, %284, %cst_150 [1] : vector<8x32xf32> to vector<8xf32>
    %286 = vector.shape_cast %285 : vector<8xf32> to vector<8x1xf32>
    %cst_151 = arith.constant 3.200000e+01 : f32
    %287 = vector.broadcast %cst_151 : f32 to vector<8x1xf32>
    %288 = arith.divf %286, %287 : vector<8x1xf32>
    %289 = vector.broadcast %281 : vector<8x1xf32> to vector<8x32xf32>
    %290 = arith.subf %273, %289 : vector<8x32xf32>
    %291 = vector.broadcast %275 : vector<1x32xf32> to vector<8x32xf32>
    %292 = arith.mulf %291, %290 : vector<8x32xf32>
    %cst_152 = arith.constant 9.99999997E-7 : f32
    %293 = vector.broadcast %cst_152 : f32 to vector<8x1xf32>
    %294 = arith.addf %288, %293 : vector<8x1xf32>
    %295 = math.rsqrt %294 : vector<8x1xf32>
    %296 = vector.broadcast %295 : vector<8x1xf32> to vector<8x32xf32>
    %297 = arith.mulf %292, %296 : vector<8x32xf32>
    %298 = vector.broadcast %277 : vector<1x32xf32> to vector<8x32xf32>
    %299 = arith.addf %297, %298 : vector<8x32xf32>
    %300 = arith.truncf %299 : vector<8x32xf32> to vector<8x32xbf16>
    %c0_153 = arith.constant 0 : index
    %c0_154 = arith.constant 0 : index
    %c0_155 = arith.constant 0 : index
    %301 = vector.load %arg10[%c0_153, %c0_154, %c0_155] : memref<1x32x64xbf16, #tpu.memory_space<vmem>>, vector<1x32x64xbf16>
    %302 = vector.shape_cast %301 : vector<1x32x64xbf16> to vector<32x64xbf16>
    %cst_156 = arith.constant dense<0.000000e+00> : vector<8x64xf32>
    %303 = tpu.matmul %300, %302, %cst_156 {dimension_numbers = #tpu.dot_dimension_numbers<[1], [0], [0], [1], [0, 0, 1, 1], [], []>} : vector<8x32xbf16>, vector<32x64xbf16>, vector<8x64xf32> -> vector<8x64xf32>
    %c0_157 = arith.constant 0 : index
    %c0_158 = arith.constant 0 : index
    %c0_159 = arith.constant 0 : index
    %304 = vector.load %arg11[%c0_157, %c0_158, %c0_159] : memref<1x1x64xf32, #tpu.memory_space<vmem>>, vector<1x1x64xf32>
    %305 = vector.shape_cast %304 : vector<1x1x64xf32> to vector<1x64xf32>
    %306 = vector.broadcast %305 : vector<1x64xf32> to vector<8x64xf32>
    %307 = arith.addf %303, %306 : vector<8x64xf32>
    %cst_160 = arith.constant 0.000000e+00 : f32
    %308 = vector.broadcast %cst_160 : f32 to vector<8x64xf32>
    %309 = arith.maximumf %307, %308 : vector<8x64xf32>
    %310 = arith.truncf %309 : vector<8x64xf32> to vector<8x64xbf16>
    %c0_161 = arith.constant 0 : index
    %c0_162 = arith.constant 0 : index
    %c0_163 = arith.constant 0 : index
    %311 = vector.load %arg12[%c0_161, %c0_162, %c0_163] : memref<1x64x32xbf16, #tpu.memory_space<vmem>>, vector<1x64x32xbf16>
    %312 = vector.shape_cast %311 : vector<1x64x32xbf16> to vector<64x32xbf16>
    %cst_164 = arith.constant dense<0.000000e+00> : vector<8x32xf32>
    %313 = tpu.matmul %310, %312, %cst_164 {dimension_numbers = #tpu.dot_dimension_numbers<[1], [0], [0], [1], [0, 0, 1, 1], [], []>} : vector<8x64xbf16>, vector<64x32xbf16>, vector<8x32xf32> -> vector<8x32xf32>
    %c0_165 = arith.constant 0 : index
    %c0_166 = arith.constant 0 : index
    %c0_167 = arith.constant 0 : index
    %314 = vector.load %arg13[%c0_165, %c0_166, %c0_167] : memref<1x1x32xf32, #tpu.memory_space<vmem>>, vector<1x1x32xf32>
    %315 = vector.shape_cast %314 : vector<1x1x32xf32> to vector<1x32xf32>
    %316 = vector.broadcast %315 : vector<1x32xf32> to vector<8x32xf32>
    %317 = arith.addf %313, %316 : vector<8x32xf32>
    %318 = arith.addf %299, %317 : vector<8x32xf32>
    %c0_168 = arith.constant 0 : index
    %c2_169 = arith.constant 2 : index
    %c0_170 = arith.constant 0 : index
    %c0_171 = arith.constant 0 : index
    %319 = vector.load %arg14[%c0_168, %c2_169, %c0_170, %c0_171] : memref<1x3x1x32xf32, #tpu.memory_space<vmem>>, vector<1x1x1x32xf32>
    %320 = vector.shape_cast %319 : vector<1x1x1x32xf32> to vector<1x32xf32>
    %c0_172 = arith.constant 0 : index
    %c2_173 = arith.constant 2 : index
    %c0_174 = arith.constant 0 : index
    %c0_175 = arith.constant 0 : index
    %321 = vector.load %arg15[%c0_172, %c2_173, %c0_174, %c0_175] : memref<1x3x1x32xf32, #tpu.memory_space<vmem>>, vector<1x1x1x32xf32>
    %322 = vector.shape_cast %321 : vector<1x1x1x32xf32> to vector<1x32xf32>
    %cst_176 = arith.constant dense<0.000000e+00> : vector<8xf32>
    %323 = vector.multi_reduction <add>, %318, %cst_176 [1] : vector<8x32xf32> to vector<8xf32>
    %324 = vector.shape_cast %323 : vector<8xf32> to vector<8x1xf32>
    %cst_177 = arith.constant 3.200000e+01 : f32
    %325 = vector.broadcast %cst_177 : f32 to vector<8x1xf32>
    %326 = arith.divf %324, %325 : vector<8x1xf32>
    %327 = vector.broadcast %326 : vector<8x1xf32> to vector<8x32xf32>
    %328 = arith.subf %318, %327 : vector<8x32xf32>
    %329 = arith.mulf %328, %328 : vector<8x32xf32>
    %cst_178 = arith.constant dense<0.000000e+00> : vector<8xf32>
    %330 = vector.multi_reduction <add>, %329, %cst_178 [1] : vector<8x32xf32> to vector<8xf32>
    %331 = vector.shape_cast %330 : vector<8xf32> to vector<8x1xf32>
    %cst_179 = arith.constant 3.200000e+01 : f32
    %332 = vector.broadcast %cst_179 : f32 to vector<8x1xf32>
    %333 = arith.divf %331, %332 : vector<8x1xf32>
    %334 = vector.broadcast %326 : vector<8x1xf32> to vector<8x32xf32>
    %335 = arith.subf %318, %334 : vector<8x32xf32>
    %336 = vector.broadcast %320 : vector<1x32xf32> to vector<8x32xf32>
    %337 = arith.mulf %336, %335 : vector<8x32xf32>
    %cst_180 = arith.constant 9.99999997E-7 : f32
    %338 = vector.broadcast %cst_180 : f32 to vector<8x1xf32>
    %339 = arith.addf %333, %338 : vector<8x1xf32>
    %340 = math.rsqrt %339 : vector<8x1xf32>
    %341 = vector.broadcast %340 : vector<8x1xf32> to vector<8x32xf32>
    %342 = arith.mulf %337, %341 : vector<8x32xf32>
    %343 = vector.broadcast %322 : vector<1x32xf32> to vector<8x32xf32>
    %344 = arith.addf %342, %343 : vector<8x32xf32>
    %c0_181 = arith.constant 0 : index
    %c0_182 = arith.constant 0 : index
    %c0_183 = arith.constant 0 : index
    %345 = vector.load %arg19[%c0_181, %c0_182, %c0_183] : memref<2x8x32xf32, #tpu.memory_space<vmem>>, vector<1x8x32xf32>
    %346 = vector.shape_cast %345 : vector<1x8x32xf32> to vector<8x32xf32>
    %347 = vector.shape_cast %344 : vector<8x32xf32> to vector<1x8x32xf32>
    tpu.vector_store %arg19[%c0_181, %c0_182, %c0_183], %347 {strides = array<i32>} : memref<2x8x32xf32, #tpu.memory_space<vmem>>, vector<1x8x32xf32>,
    %348 = arith.extui %0 : i1 to i32
    %c0_i32_184 = arith.constant 0 : i32
    %349 = arith.cmpi ne, %348, %c0_i32_184 : i32
    scf.if %349 {
      %c0_379 = arith.constant 0 : index
      %c0_380 = arith.constant 0 : index
      %696 = vector.load %arg16[%c0_379, %c0_380] : memref<1x32xf32, #tpu.memory_space<vmem>>, vector<1x32xf32>
      %c0_381 = arith.constant 0 : index
      %c0_382 = arith.constant 0 : index
      %697 = vector.load %arg17[%c0_381, %c0_382] : memref<1x32xf32, #tpu.memory_space<vmem>>, vector<1x32xf32>
      %cst_383 = arith.constant dense<0.000000e+00> : vector<8xf32>
      %698 = vector.multi_reduction <add>, %344, %cst_383 [1] : vector<8x32xf32> to vector<8xf32>
      %699 = vector.shape_cast %698 : vector<8xf32> to vector<8x1xf32>
      %cst_384 = arith.constant 3.200000e+01 : f32
      %700 = vector.broadcast %cst_384 : f32 to vector<8x1xf32>
      %701 = arith.divf %699, %700 : vector<8x1xf32>
      %702 = vector.broadcast %701 : vector<8x1xf32> to vector<8x32xf32>
      %703 = arith.subf %344, %702 : vector<8x32xf32>
      %704 = arith.mulf %703, %703 : vector<8x32xf32>
      %cst_385 = arith.constant dense<0.000000e+00> : vector<8xf32>
      %705 = vector.multi_reduction <add>, %704, %cst_385 [1] : vector<8x32xf32> to vector<8xf32>
      %706 = vector.shape_cast %705 : vector<8xf32> to vector<8x1xf32>
      %cst_386 = arith.constant 3.200000e+01 : f32
      %707 = vector.broadcast %cst_386 : f32 to vector<8x1xf32>
      %708 = arith.divf %706, %707 : vector<8x1xf32>
      %709 = vector.broadcast %701 : vector<8x1xf32> to vector<8x32xf32>
      %710 = arith.subf %344, %709 : vector<8x32xf32>
      %711 = vector.broadcast %696 : vector<1x32xf32> to vector<8x32xf32>
      %712 = arith.mulf %711, %710 : vector<8x32xf32>
      %cst_387 = arith.constant 9.99999997E-7 : f32
      %713 = vector.broadcast %cst_387 : f32 to vector<8x1xf32>
      %714 = arith.addf %708, %713 : vector<8x1xf32>
      %715 = math.rsqrt %714 : vector<8x1xf32>
      %716 = vector.broadcast %715 : vector<8x1xf32> to vector<8x32xf32>
      %717 = arith.mulf %712, %716 : vector<8x32xf32>
      %718 = vector.broadcast %697 : vector<1x32xf32> to vector<8x32xf32>
      %719 = arith.addf %717, %718 : vector<8x32xf32>
      %c0_388 = arith.constant 0 : index
      %c0_389 = arith.constant 0 : index
      %c0_390 = arith.constant 0 : index
      %720 = vector.load %arg18[%c0_388, %c0_389, %c0_390] : memref<2x8x32xf32, #tpu.memory_space<vmem>>, vector<1x8x32xf32>
      %721 = vector.shape_cast %720 : vector<1x8x32xf32> to vector<8x32xf32>
      %722 = vector.shape_cast %719 : vector<8x32xf32> to vector<1x8x32xf32>
      tpu.vector_store %arg18[%c0_388, %c0_389, %c0_390], %722 {strides = array<i32>} : memref<2x8x32xf32, #tpu.memory_space<vmem>>, vector<1x8x32xf32>,
    } else {
    }
    %c1_185 = arith.constant 1 : index
    %c0_186 = arith.constant 0 : index
    %c0_187 = arith.constant 0 : index
    %350 = vector.load %arg19[%c1_185, %c0_186, %c0_187] : memref<2x8x32xf32, #tpu.memory_space<vmem>>, vector<1x8x32xf32>
    %351 = vector.shape_cast %350 : vector<1x8x32xf32> to vector<8x32xf32>
    %352 = arith.truncf %351 : vector<8x32xf32> to vector<8x32xbf16>
    %c1_188 = arith.constant 1 : index
    %c0_189 = arith.constant 0 : index
    %c0_190 = arith.constant 0 : index
    %353 = vector.load %arg5[%c1_188, %c0_189, %c0_190] : memref<2x8x8xf32, #tpu.memory_space<vmem>>, vector<1x8x8xf32>
    %354 = vector.shape_cast %353 : vector<1x8x8xf32> to vector<8x8xf32>
    %c1_191 = arith.constant 1 : index
    %c0_192 = arith.constant 0 : index
    %c0_193 = arith.constant 0 : index
    %355 = vector.load %arg4[%c1_191, %c0_192, %c0_193] : memref<2x1x8xf32, #tpu.memory_space<vmem>>, vector<1x1x8xf32>
    %356 = vector.shape_cast %355 : vector<1x1x8xf32> to vector<1x8xf32>
    %c1_194 = arith.constant 1 : index
    %c0_195 = arith.constant 0 : index
    %c0_196 = arith.constant 0 : index
    %357 = vector.load %arg3[%c1_194, %c0_195, %c0_196] : memref<2x8x32xbf16, #tpu.memory_space<vmem>>, vector<1x8x32xbf16>
    %358 = vector.shape_cast %357 : vector<1x8x32xbf16> to vector<8x32xbf16>
    %c0_197 = arith.constant 0 : index
    %c0_198 = arith.constant 0 : index
    %c0_199 = arith.constant 0 : index
    %c0_200 = arith.constant 0 : index
    %359 = vector.load %arg6[%c0_197, %c0_198, %c0_199, %c0_200] : memref<1x6x32x32xbf16, #tpu.memory_space<vmem>>, vector<1x1x32x32xbf16>
    %360 = vector.shape_cast %359 : vector<1x1x32x32xbf16> to vector<32x32xbf16>
    %cst_201 = arith.constant dense<0.000000e+00> : vector<8x32xf32>
    %361 = tpu.matmul %352, %360, %cst_201 {dimension_numbers = #tpu.dot_dimension_numbers<[1], [0], [0], [1], [0, 0, 1, 1], [], []>} : vector<8x32xbf16>, vector<32x32xbf16>, vector<8x32xf32> -> vector<8x32xf32>
    %c0_202 = arith.constant 0 : index
    %c0_203 = arith.constant 0 : index
    %c0_204 = arith.constant 0 : index
    %c0_205 = arith.constant 0 : index
    %362 = vector.load %arg7[%c0_202, %c0_203, %c0_204, %c0_205] : memref<1x6x1x32xf32, #tpu.memory_space<vmem>>, vector<1x1x1x32xf32>
    %363 = vector.shape_cast %362 : vector<1x1x1x32xf32> to vector<1x32xf32>
    %364 = vector.broadcast %363 : vector<1x32xf32> to vector<8x32xf32>
    %365 = arith.addf %361, %364 : vector<8x32xf32>
    %c0_206 = arith.constant 0 : index
    %c1_207 = arith.constant 1 : index
    %c0_208 = arith.constant 0 : index
    %c0_209 = arith.constant 0 : index
    %366 = vector.load %arg6[%c0_206, %c1_207, %c0_208, %c0_209] : memref<1x6x32x32xbf16, #tpu.memory_space<vmem>>, vector<1x1x32x32xbf16>
    %367 = vector.shape_cast %366 : vector<1x1x32x32xbf16> to vector<32x32xbf16>
    %cst_210 = arith.constant dense<0.000000e+00> : vector<8x32xf32>
    %368 = tpu.matmul %352, %367, %cst_210 {dimension_numbers = #tpu.dot_dimension_numbers<[1], [0], [0], [1], [0, 0, 1, 1], [], []>} : vector<8x32xbf16>, vector<32x32xbf16>, vector<8x32xf32> -> vector<8x32xf32>
    %c0_211 = arith.constant 0 : index
    %c1_212 = arith.constant 1 : index
    %c0_213 = arith.constant 0 : index
    %c0_214 = arith.constant 0 : index
    %369 = vector.load %arg7[%c0_211, %c1_212, %c0_213, %c0_214] : memref<1x6x1x32xf32, #tpu.memory_space<vmem>>, vector<1x1x1x32xf32>
    %370 = vector.shape_cast %369 : vector<1x1x1x32xf32> to vector<1x32xf32>
    %371 = vector.broadcast %370 : vector<1x32xf32> to vector<8x32xf32>
    %372 = arith.addf %368, %371 : vector<8x32xf32>
    %c0_215 = arith.constant 0 : index
    %c2_216 = arith.constant 2 : index
    %c0_217 = arith.constant 0 : index
    %c0_218 = arith.constant 0 : index
    %373 = vector.load %arg6[%c0_215, %c2_216, %c0_217, %c0_218] : memref<1x6x32x32xbf16, #tpu.memory_space<vmem>>, vector<1x1x32x32xbf16>
    %374 = vector.shape_cast %373 : vector<1x1x32x32xbf16> to vector<32x32xbf16>
    %cst_219 = arith.constant dense<0.000000e+00> : vector<8x32xf32>
    %375 = tpu.matmul %352, %374, %cst_219 {dimension_numbers = #tpu.dot_dimension_numbers<[1], [0], [0], [1], [0, 0, 1, 1], [], []>} : vector<8x32xbf16>, vector<32x32xbf16>, vector<8x32xf32> -> vector<8x32xf32>
    %c0_220 = arith.constant 0 : index
    %c2_221 = arith.constant 2 : index
    %c0_222 = arith.constant 0 : index
    %c0_223 = arith.constant 0 : index
    %376 = vector.load %arg7[%c0_220, %c2_221, %c0_222, %c0_223] : memref<1x6x1x32xf32, #tpu.memory_space<vmem>>, vector<1x1x1x32xf32>
    %377 = vector.shape_cast %376 : vector<1x1x1x32xf32> to vector<1x32xf32>
    %378 = vector.broadcast %377 : vector<1x32xf32> to vector<8x32xf32>
    %379 = arith.addf %375, %378 : vector<8x32xf32>
    %380 = vector.extract_strided_slice %365 {offsets = [0, 0], sizes = [8, 8], strides = [1, 1]} : vector<8x32xf32> to vector<8x8xf32>
    %381 = arith.truncf %380 : vector<8x8xf32> to vector<8x8xbf16>
    %382 = vector.extract_strided_slice %372 {offsets = [0, 0], sizes = [8, 8], strides = [1, 1]} : vector<8x32xf32> to vector<8x8xf32>
    %383 = arith.truncf %382 : vector<8x8xf32> to vector<8x8xbf16>
    %384 = vector.extract_strided_slice %379 {offsets = [0, 0], sizes = [8, 8], strides = [1, 1]} : vector<8x32xf32> to vector<8x8xf32>
    %385 = arith.truncf %384 : vector<8x8xf32> to vector<8x8xbf16>
    "tpu.trace_start"() <{level = 10 : i32, message = "tf,sf->ts"}> : () -> ()
    %cst_224 = arith.constant dense<0.000000e+00> : vector<8x8xf32>
    %386 = tpu.matmul %381, %383, %cst_224 {dimension_numbers = #tpu.dot_dimension_numbers<[1], [1], [0], [0], [0, 0, 1, 0], [], []>} : vector<8x8xbf16>, vector<8x8xbf16>, vector<8x8xf32> -> vector<8x8xf32>
    "tpu.trace_stop"() : () -> ()
    %387 = arith.addf %386, %354 : vector<8x8xf32>
    %cst_225 = arith.constant dense<0xFF800000> : vector<8xf32>
    %388 = vector.multi_reduction <maximumf>, %387, %cst_225 [1] : vector<8x8xf32> to vector<8xf32>
    %389 = vector.shape_cast %388 : vector<8xf32> to vector<8x1xf32>
    %390 = vector.broadcast %389 : vector<8x1xf32> to vector<8x8xf32>
    %391 = arith.subf %387, %390 : vector<8x8xf32>
    %392 = math.exp %391 : vector<8x8xf32>
    %cst_226 = arith.constant dense<0.000000e+00> : vector<8xf32>
    %393 = vector.multi_reduction <add>, %392, %cst_226 [1] : vector<8x8xf32> to vector<8xf32>
    %394 = vector.shape_cast %393 : vector<8xf32> to vector<8x1xf32>
    %395 = tpu.reciprocal %394 {approx = true} : vector<8x1xf32> -> vector<8x1xf32>
    %396 = vector.broadcast %395 : vector<8x1xf32> to vector<8x8xf32>
    %397 = arith.mulf %392, %396 : vector<8x8xf32>
    %398 = arith.truncf %397 : vector<8x8xf32> to vector<8x8xbf16>
    %cst_227 = arith.constant dense<0.000000e+00> : vector<8x8xf32>
    %399 = tpu.matmul %398, %385, %cst_227 {dimension_numbers = #tpu.dot_dimension_numbers<[1], [0], [0], [1], [0, 0, 1, 1], [], []>} : vector<8x8xbf16>, vector<8x8xbf16>, vector<8x8xf32> -> vector<8x8xf32>
    %c0_228 = arith.constant 0 : index
    %c0_229 = arith.constant 0 : index
    %400 = vector.load %arg20[%c0_228, %c0_229] : memref<8x32xf32, #tpu.memory_space<vmem>>, vector<8x8xf32>
    tpu.vector_store %arg20[%c0_228, %c0_229], %399 {strides = array<i32>} : memref<8x32xf32, #tpu.memory_space<vmem>>, vector<8x8xf32>,
    %401 = vector.extract_strided_slice %365 {offsets = [0, 8], sizes = [8, 8], strides = [1, 1]} : vector<8x32xf32> to vector<8x8xf32>
    %402 = arith.truncf %401 : vector<8x8xf32> to vector<8x8xbf16>
    %403 = vector.extract_strided_slice %372 {offsets = [0, 8], sizes = [8, 8], strides = [1, 1]} : vector<8x32xf32> to vector<8x8xf32>
    %404 = arith.truncf %403 : vector<8x8xf32> to vector<8x8xbf16>
    %405 = vector.extract_strided_slice %379 {offsets = [0, 8], sizes = [8, 8], strides = [1, 1]} : vector<8x32xf32> to vector<8x8xf32>
    %406 = arith.truncf %405 : vector<8x8xf32> to vector<8x8xbf16>
    "tpu.trace_start"() <{level = 10 : i32, message = "tf,sf->ts"}> : () -> ()
    %cst_230 = arith.constant dense<0.000000e+00> : vector<8x8xf32>
    %407 = tpu.matmul %402, %404, %cst_230 {dimension_numbers = #tpu.dot_dimension_numbers<[1], [1], [0], [0], [0, 0, 1, 0], [], []>} : vector<8x8xbf16>, vector<8x8xbf16>, vector<8x8xf32> -> vector<8x8xf32>
    "tpu.trace_stop"() : () -> ()
    %408 = arith.addf %407, %354 : vector<8x8xf32>
    %cst_231 = arith.constant dense<0xFF800000> : vector<8xf32>
    %409 = vector.multi_reduction <maximumf>, %408, %cst_231 [1] : vector<8x8xf32> to vector<8xf32>
    %410 = vector.shape_cast %409 : vector<8xf32> to vector<8x1xf32>
    %411 = vector.broadcast %410 : vector<8x1xf32> to vector<8x8xf32>
    %412 = arith.subf %408, %411 : vector<8x8xf32>
    %413 = math.exp %412 : vector<8x8xf32>
    %cst_232 = arith.constant dense<0.000000e+00> : vector<8xf32>
    %414 = vector.multi_reduction <add>, %413, %cst_232 [1] : vector<8x8xf32> to vector<8xf32>
    %415 = vector.shape_cast %414 : vector<8xf32> to vector<8x1xf32>
    %416 = tpu.reciprocal %415 {approx = true} : vector<8x1xf32> -> vector<8x1xf32>
    %417 = vector.broadcast %416 : vector<8x1xf32> to vector<8x8xf32>
    %418 = arith.mulf %413, %417 : vector<8x8xf32>
    %419 = arith.truncf %418 : vector<8x8xf32> to vector<8x8xbf16>
    %cst_233 = arith.constant dense<0.000000e+00> : vector<8x8xf32>
    %420 = tpu.matmul %419, %406, %cst_233 {dimension_numbers = #tpu.dot_dimension_numbers<[1], [0], [0], [1], [0, 0, 1, 1], [], []>} : vector<8x8xbf16>, vector<8x8xbf16>, vector<8x8xf32> -> vector<8x8xf32>
    %c0_234 = arith.constant 0 : index
    %c8_235 = arith.constant 8 : index
    %421 = vector.load %arg20[%c0_234, %c8_235] : memref<8x32xf32, #tpu.memory_space<vmem>>, vector<8x8xf32>
    tpu.vector_store %arg20[%c0_234, %c8_235], %420 {strides = array<i32>} : memref<8x32xf32, #tpu.memory_space<vmem>>, vector<8x8xf32>,
    %422 = vector.extract_strided_slice %365 {offsets = [0, 16], sizes = [8, 8], strides = [1, 1]} : vector<8x32xf32> to vector<8x8xf32>
    %423 = arith.truncf %422 : vector<8x8xf32> to vector<8x8xbf16>
    %424 = vector.extract_strided_slice %372 {offsets = [0, 16], sizes = [8, 8], strides = [1, 1]} : vector<8x32xf32> to vector<8x8xf32>
    %425 = arith.truncf %424 : vector<8x8xf32> to vector<8x8xbf16>
    %426 = vector.extract_strided_slice %379 {offsets = [0, 16], sizes = [8, 8], strides = [1, 1]} : vector<8x32xf32> to vector<8x8xf32>
    %427 = arith.truncf %426 : vector<8x8xf32> to vector<8x8xbf16>
    "tpu.trace_start"() <{level = 10 : i32, message = "tf,sf->ts"}> : () -> ()
    %cst_236 = arith.constant dense<0.000000e+00> : vector<8x8xf32>
    %428 = tpu.matmul %423, %425, %cst_236 {dimension_numbers = #tpu.dot_dimension_numbers<[1], [1], [0], [0], [0, 0, 1, 0], [], []>} : vector<8x8xbf16>, vector<8x8xbf16>, vector<8x8xf32> -> vector<8x8xf32>
    "tpu.trace_stop"() : () -> ()
    %429 = arith.addf %428, %354 : vector<8x8xf32>
    %cst_237 = arith.constant dense<0xFF800000> : vector<8xf32>
    %430 = vector.multi_reduction <maximumf>, %429, %cst_237 [1] : vector<8x8xf32> to vector<8xf32>
    %431 = vector.shape_cast %430 : vector<8xf32> to vector<8x1xf32>
    %432 = vector.broadcast %431 : vector<8x1xf32> to vector<8x8xf32>
    %433 = arith.subf %429, %432 : vector<8x8xf32>
    %434 = math.exp %433 : vector<8x8xf32>
    %cst_238 = arith.constant dense<0.000000e+00> : vector<8xf32>
    %435 = vector.multi_reduction <add>, %434, %cst_238 [1] : vector<8x8xf32> to vector<8xf32>
    %436 = vector.shape_cast %435 : vector<8xf32> to vector<8x1xf32>
    %437 = tpu.reciprocal %436 {approx = true} : vector<8x1xf32> -> vector<8x1xf32>
    %438 = vector.broadcast %437 : vector<8x1xf32> to vector<8x8xf32>
    %439 = arith.mulf %434, %438 : vector<8x8xf32>
    %440 = arith.truncf %439 : vector<8x8xf32> to vector<8x8xbf16>
    %cst_239 = arith.constant dense<0.000000e+00> : vector<8x8xf32>
    %441 = tpu.matmul %440, %427, %cst_239 {dimension_numbers = #tpu.dot_dimension_numbers<[1], [0], [0], [1], [0, 0, 1, 1], [], []>} : vector<8x8xbf16>, vector<8x8xbf16>, vector<8x8xf32> -> vector<8x8xf32>
    %c0_240 = arith.constant 0 : index
    %c16_241 = arith.constant 16 : index
    %442 = vector.load %arg20[%c0_240, %c16_241] : memref<8x32xf32, #tpu.memory_space<vmem>>, vector<8x8xf32>
    tpu.vector_store %arg20[%c0_240, %c16_241], %441 {strides = array<i32>} : memref<8x32xf32, #tpu.memory_space<vmem>>, vector<8x8xf32>,
    %443 = vector.extract_strided_slice %365 {offsets = [0, 24], sizes = [8, 8], strides = [1, 1]} : vector<8x32xf32> to vector<8x8xf32>
    %444 = arith.truncf %443 : vector<8x8xf32> to vector<8x8xbf16>
    %445 = vector.extract_strided_slice %372 {offsets = [0, 24], sizes = [8, 8], strides = [1, 1]} : vector<8x32xf32> to vector<8x8xf32>
    %446 = arith.truncf %445 : vector<8x8xf32> to vector<8x8xbf16>
    %447 = vector.extract_strided_slice %379 {offsets = [0, 24], sizes = [8, 8], strides = [1, 1]} : vector<8x32xf32> to vector<8x8xf32>
    %448 = arith.truncf %447 : vector<8x8xf32> to vector<8x8xbf16>
    "tpu.trace_start"() <{level = 10 : i32, message = "tf,sf->ts"}> : () -> ()
    %cst_242 = arith.constant dense<0.000000e+00> : vector<8x8xf32>
    %449 = tpu.matmul %444, %446, %cst_242 {dimension_numbers = #tpu.dot_dimension_numbers<[1], [1], [0], [0], [0, 0, 1, 0], [], []>} : vector<8x8xbf16>, vector<8x8xbf16>, vector<8x8xf32> -> vector<8x8xf32>
    "tpu.trace_stop"() : () -> ()
    %450 = arith.addf %449, %354 : vector<8x8xf32>
    %cst_243 = arith.constant dense<0xFF800000> : vector<8xf32>
    %451 = vector.multi_reduction <maximumf>, %450, %cst_243 [1] : vector<8x8xf32> to vector<8xf32>
    %452 = vector.shape_cast %451 : vector<8xf32> to vector<8x1xf32>
    %453 = vector.broadcast %452 : vector<8x1xf32> to vector<8x8xf32>
    %454 = arith.subf %450, %453 : vector<8x8xf32>
    %455 = math.exp %454 : vector<8x8xf32>
    %cst_244 = arith.constant dense<0.000000e+00> : vector<8xf32>
    %456 = vector.multi_reduction <add>, %455, %cst_244 [1] : vector<8x8xf32> to vector<8xf32>
    %457 = vector.shape_cast %456 : vector<8xf32> to vector<8x1xf32>
    %458 = tpu.reciprocal %457 {approx = true} : vector<8x1xf32> -> vector<8x1xf32>
    %459 = vector.broadcast %458 : vector<8x1xf32> to vector<8x8xf32>
    %460 = arith.mulf %455, %459 : vector<8x8xf32>
    %461 = arith.truncf %460 : vector<8x8xf32> to vector<8x8xbf16>
    %cst_245 = arith.constant dense<0.000000e+00> : vector<8x8xf32>
    %462 = tpu.matmul %461, %448, %cst_245 {dimension_numbers = #tpu.dot_dimension_numbers<[1], [0], [0], [1], [0, 0, 1, 1], [], []>} : vector<8x8xbf16>, vector<8x8xbf16>, vector<8x8xf32> -> vector<8x8xf32>
    %c0_246 = arith.constant 0 : index
    %c24_247 = arith.constant 24 : index
    %463 = vector.load %arg20[%c0_246, %c24_247] : memref<8x32xf32, #tpu.memory_space<vmem>>, vector<8x8xf32>
    tpu.vector_store %arg20[%c0_246, %c24_247], %462 {strides = array<i32>} : memref<8x32xf32, #tpu.memory_space<vmem>>, vector<8x8xf32>,
    %c0_248 = arith.constant 0 : index
    %c0_249 = arith.constant 0 : index
    %464 = vector.load %arg20[%c0_248, %c0_249] : memref<8x32xf32, #tpu.memory_space<vmem>>, vector<8x32xf32>
    %465 = arith.truncf %464 : vector<8x32xf32> to vector<8x32xbf16>
    %c0_250 = arith.constant 0 : index
    %c0_251 = arith.constant 0 : index
    %c0_252 = arith.constant 0 : index
    %c0_253 = arith.constant 0 : index
    %466 = vector.load %arg8[%c0_250, %c0_251, %c0_252, %c0_253] : memref<1x2x32x32xbf16, #tpu.memory_space<vmem>>, vector<1x1x32x32xbf16>
    %467 = vector.shape_cast %466 : vector<1x1x32x32xbf16> to vector<32x32xbf16>
    %cst_254 = arith.constant dense<0.000000e+00> : vector<8x32xf32>
    %468 = tpu.matmul %465, %467, %cst_254 {dimension_numbers = #tpu.dot_dimension_numbers<[1], [0], [0], [1], [0, 0, 1, 1], [], []>} : vector<8x32xbf16>, vector<32x32xbf16>, vector<8x32xf32> -> vector<8x32xf32>
    %c0_255 = arith.constant 0 : index
    %c0_256 = arith.constant 0 : index
    %c0_257 = arith.constant 0 : index
    %c0_258 = arith.constant 0 : index
    %469 = vector.load %arg9[%c0_255, %c0_256, %c0_257, %c0_258] : memref<1x2x1x32xf32, #tpu.memory_space<vmem>>, vector<1x1x1x32xf32>
    %470 = vector.shape_cast %469 : vector<1x1x1x32xf32> to vector<1x32xf32>
    %471 = vector.broadcast %470 : vector<1x32xf32> to vector<8x32xf32>
    %472 = arith.addf %468, %471 : vector<8x32xf32>
    %473 = arith.addf %351, %472 : vector<8x32xf32>
    %c0_259 = arith.constant 0 : index
    %c0_260 = arith.constant 0 : index
    %c0_261 = arith.constant 0 : index
    %c0_262 = arith.constant 0 : index
    %474 = vector.load %arg14[%c0_259, %c0_260, %c0_261, %c0_262] : memref<1x3x1x32xf32, #tpu.memory_space<vmem>>, vector<1x1x1x32xf32>
    %475 = vector.shape_cast %474 : vector<1x1x1x32xf32> to vector<1x32xf32>
    %c0_263 = arith.constant 0 : index
    %c0_264 = arith.constant 0 : index
    %c0_265 = arith.constant 0 : index
    %c0_266 = arith.constant 0 : index
    %476 = vector.load %arg15[%c0_263, %c0_264, %c0_265, %c0_266] : memref<1x3x1x32xf32, #tpu.memory_space<vmem>>, vector<1x1x1x32xf32>
    %477 = vector.shape_cast %476 : vector<1x1x1x32xf32> to vector<1x32xf32>
    %cst_267 = arith.constant dense<0.000000e+00> : vector<8xf32>
    %478 = vector.multi_reduction <add>, %473, %cst_267 [1] : vector<8x32xf32> to vector<8xf32>
    %479 = vector.shape_cast %478 : vector<8xf32> to vector<8x1xf32>
    %cst_268 = arith.constant 3.200000e+01 : f32
    %480 = vector.broadcast %cst_268 : f32 to vector<8x1xf32>
    %481 = arith.divf %479, %480 : vector<8x1xf32>
    %482 = vector.broadcast %481 : vector<8x1xf32> to vector<8x32xf32>
    %483 = arith.subf %473, %482 : vector<8x32xf32>
    %484 = arith.mulf %483, %483 : vector<8x32xf32>
    %cst_269 = arith.constant dense<0.000000e+00> : vector<8xf32>
    %485 = vector.multi_reduction <add>, %484, %cst_269 [1] : vector<8x32xf32> to vector<8xf32>
    %486 = vector.shape_cast %485 : vector<8xf32> to vector<8x1xf32>
    %cst_270 = arith.constant 3.200000e+01 : f32
    %487 = vector.broadcast %cst_270 : f32 to vector<8x1xf32>
    %488 = arith.divf %486, %487 : vector<8x1xf32>
    %489 = vector.broadcast %481 : vector<8x1xf32> to vector<8x32xf32>
    %490 = arith.subf %473, %489 : vector<8x32xf32>
    %491 = vector.broadcast %475 : vector<1x32xf32> to vector<8x32xf32>
    %492 = arith.mulf %491, %490 : vector<8x32xf32>
    %cst_271 = arith.constant 9.99999997E-7 : f32
    %493 = vector.broadcast %cst_271 : f32 to vector<8x1xf32>
    %494 = arith.addf %488, %493 : vector<8x1xf32>
    %495 = math.rsqrt %494 : vector<8x1xf32>
    %496 = vector.broadcast %495 : vector<8x1xf32> to vector<8x32xf32>
    %497 = arith.mulf %492, %496 : vector<8x32xf32>
    %498 = vector.broadcast %477 : vector<1x32xf32> to vector<8x32xf32>
    %499 = arith.addf %497, %498 : vector<8x32xf32>
    %500 = arith.truncf %499 : vector<8x32xf32> to vector<8x32xbf16>
    %c0_272 = arith.constant 0 : index
    %c3_273 = arith.constant 3 : index
    %c0_274 = arith.constant 0 : index
    %c0_275 = arith.constant 0 : index
    %501 = vector.load %arg6[%c0_272, %c3_273, %c0_274, %c0_275] : memref<1x6x32x32xbf16, #tpu.memory_space<vmem>>, vector<1x1x32x32xbf16>
    %502 = vector.shape_cast %501 : vector<1x1x32x32xbf16> to vector<32x32xbf16>
    %cst_276 = arith.constant dense<0.000000e+00> : vector<8x32xf32>
    %503 = tpu.matmul %500, %502, %cst_276 {dimension_numbers = #tpu.dot_dimension_numbers<[1], [0], [0], [1], [0, 0, 1, 1], [], []>} : vector<8x32xbf16>, vector<32x32xbf16>, vector<8x32xf32> -> vector<8x32xf32>
    %c0_277 = arith.constant 0 : index
    %c3_278 = arith.constant 3 : index
    %c0_279 = arith.constant 0 : index
    %c0_280 = arith.constant 0 : index
    %504 = vector.load %arg7[%c0_277, %c3_278, %c0_279, %c0_280] : memref<1x6x1x32xf32, #tpu.memory_space<vmem>>, vector<1x1x1x32xf32>
    %505 = vector.shape_cast %504 : vector<1x1x1x32xf32> to vector<1x32xf32>
    %506 = vector.broadcast %505 : vector<1x32xf32> to vector<8x32xf32>
    %507 = arith.addf %503, %506 : vector<8x32xf32>
    %c0_281 = arith.constant 0 : index
    %c4_282 = arith.constant 4 : index
    %c0_283 = arith.constant 0 : index
    %c0_284 = arith.constant 0 : index
    %508 = vector.load %arg6[%c0_281, %c4_282, %c0_283, %c0_284] : memref<1x6x32x32xbf16, #tpu.memory_space<vmem>>, vector<1x1x32x32xbf16>
    %509 = vector.shape_cast %508 : vector<1x1x32x32xbf16> to vector<32x32xbf16>
    %cst_285 = arith.constant dense<0.000000e+00> : vector<8x32xf32>
    %510 = tpu.matmul %358, %509, %cst_285 {dimension_numbers = #tpu.dot_dimension_numbers<[1], [0], [0], [1], [0, 0, 1, 1], [], []>} : vector<8x32xbf16>, vector<32x32xbf16>, vector<8x32xf32> -> vector<8x32xf32>
    %c0_286 = arith.constant 0 : index
    %c4_287 = arith.constant 4 : index
    %c0_288 = arith.constant 0 : index
    %c0_289 = arith.constant 0 : index
    %511 = vector.load %arg7[%c0_286, %c4_287, %c0_288, %c0_289] : memref<1x6x1x32xf32, #tpu.memory_space<vmem>>, vector<1x1x1x32xf32>
    %512 = vector.shape_cast %511 : vector<1x1x1x32xf32> to vector<1x32xf32>
    %513 = vector.broadcast %512 : vector<1x32xf32> to vector<8x32xf32>
    %514 = arith.addf %510, %513 : vector<8x32xf32>
    %c0_290 = arith.constant 0 : index
    %c5_291 = arith.constant 5 : index
    %c0_292 = arith.constant 0 : index
    %c0_293 = arith.constant 0 : index
    %515 = vector.load %arg6[%c0_290, %c5_291, %c0_292, %c0_293] : memref<1x6x32x32xbf16, #tpu.memory_space<vmem>>, vector<1x1x32x32xbf16>
    %516 = vector.shape_cast %515 : vector<1x1x32x32xbf16> to vector<32x32xbf16>
    %cst_294 = arith.constant dense<0.000000e+00> : vector<8x32xf32>
    %517 = tpu.matmul %358, %516, %cst_294 {dimension_numbers = #tpu.dot_dimension_numbers<[1], [0], [0], [1], [0, 0, 1, 1], [], []>} : vector<8x32xbf16>, vector<32x32xbf16>, vector<8x32xf32> -> vector<8x32xf32>
    %c0_295 = arith.constant 0 : index
    %c5_296 = arith.constant 5 : index
    %c0_297 = arith.constant 0 : index
    %c0_298 = arith.constant 0 : index
    %518 = vector.load %arg7[%c0_295, %c5_296, %c0_297, %c0_298] : memref<1x6x1x32xf32, #tpu.memory_space<vmem>>, vector<1x1x1x32xf32>
    %519 = vector.shape_cast %518 : vector<1x1x1x32xf32> to vector<1x32xf32>
    %520 = vector.broadcast %519 : vector<1x32xf32> to vector<8x32xf32>
    %521 = arith.addf %517, %520 : vector<8x32xf32>
    %522 = vector.extract_strided_slice %507 {offsets = [0, 0], sizes = [8, 8], strides = [1, 1]} : vector<8x32xf32> to vector<8x8xf32>
    %523 = arith.truncf %522 : vector<8x8xf32> to vector<8x8xbf16>
    %524 = vector.extract_strided_slice %514 {offsets = [0, 0], sizes = [8, 8], strides = [1, 1]} : vector<8x32xf32> to vector<8x8xf32>
    %525 = arith.truncf %524 : vector<8x8xf32> to vector<8x8xbf16>
    %526 = vector.extract_strided_slice %521 {offsets = [0, 0], sizes = [8, 8], strides = [1, 1]} : vector<8x32xf32> to vector<8x8xf32>
    %527 = arith.truncf %526 : vector<8x8xf32> to vector<8x8xbf16>
    "tpu.trace_start"() <{level = 10 : i32, message = "tf,sf->ts"}> : () -> ()
    %cst_299 = arith.constant dense<0.000000e+00> : vector<8x8xf32>
    %528 = tpu.matmul %523, %525, %cst_299 {dimension_numbers = #tpu.dot_dimension_numbers<[1], [1], [0], [0], [0, 0, 1, 0], [], []>} : vector<8x8xbf16>, vector<8x8xbf16>, vector<8x8xf32> -> vector<8x8xf32>
    "tpu.trace_stop"() : () -> ()
    %529 = vector.broadcast %356 : vector<1x8xf32> to vector<8x8xf32>
    %530 = arith.addf %528, %529 : vector<8x8xf32>
    %cst_300 = arith.constant dense<0xFF800000> : vector<8xf32>
    %531 = vector.multi_reduction <maximumf>, %530, %cst_300 [1] : vector<8x8xf32> to vector<8xf32>
    %532 = vector.shape_cast %531 : vector<8xf32> to vector<8x1xf32>
    %533 = vector.broadcast %532 : vector<8x1xf32> to vector<8x8xf32>
    %534 = arith.subf %530, %533 : vector<8x8xf32>
    %535 = math.exp %534 : vector<8x8xf32>
    %cst_301 = arith.constant dense<0.000000e+00> : vector<8xf32>
    %536 = vector.multi_reduction <add>, %535, %cst_301 [1] : vector<8x8xf32> to vector<8xf32>
    %537 = vector.shape_cast %536 : vector<8xf32> to vector<8x1xf32>
    %538 = tpu.reciprocal %537 {approx = true} : vector<8x1xf32> -> vector<8x1xf32>
    %539 = vector.broadcast %538 : vector<8x1xf32> to vector<8x8xf32>
    %540 = arith.mulf %535, %539 : vector<8x8xf32>
    %541 = arith.truncf %540 : vector<8x8xf32> to vector<8x8xbf16>
    %cst_302 = arith.constant dense<0.000000e+00> : vector<8x8xf32>
    %542 = tpu.matmul %541, %527, %cst_302 {dimension_numbers = #tpu.dot_dimension_numbers<[1], [0], [0], [1], [0, 0, 1, 1], [], []>} : vector<8x8xbf16>, vector<8x8xbf16>, vector<8x8xf32> -> vector<8x8xf32>
    %c0_303 = arith.constant 0 : index
    %c0_304 = arith.constant 0 : index
    %543 = vector.load %arg20[%c0_303, %c0_304] : memref<8x32xf32, #tpu.memory_space<vmem>>, vector<8x8xf32>
    tpu.vector_store %arg20[%c0_303, %c0_304], %542 {strides = array<i32>} : memref<8x32xf32, #tpu.memory_space<vmem>>, vector<8x8xf32>,
    %544 = vector.extract_strided_slice %507 {offsets = [0, 8], sizes = [8, 8], strides = [1, 1]} : vector<8x32xf32> to vector<8x8xf32>
    %545 = arith.truncf %544 : vector<8x8xf32> to vector<8x8xbf16>
    %546 = vector.extract_strided_slice %514 {offsets = [0, 8], sizes = [8, 8], strides = [1, 1]} : vector<8x32xf32> to vector<8x8xf32>
    %547 = arith.truncf %546 : vector<8x8xf32> to vector<8x8xbf16>
    %548 = vector.extract_strided_slice %521 {offsets = [0, 8], sizes = [8, 8], strides = [1, 1]} : vector<8x32xf32> to vector<8x8xf32>
    %549 = arith.truncf %548 : vector<8x8xf32> to vector<8x8xbf16>
    "tpu.trace_start"() <{level = 10 : i32, message = "tf,sf->ts"}> : () -> ()
    %cst_305 = arith.constant dense<0.000000e+00> : vector<8x8xf32>
    %550 = tpu.matmul %545, %547, %cst_305 {dimension_numbers = #tpu.dot_dimension_numbers<[1], [1], [0], [0], [0, 0, 1, 0], [], []>} : vector<8x8xbf16>, vector<8x8xbf16>, vector<8x8xf32> -> vector<8x8xf32>
    "tpu.trace_stop"() : () -> ()
    %551 = vector.broadcast %356 : vector<1x8xf32> to vector<8x8xf32>
    %552 = arith.addf %550, %551 : vector<8x8xf32>
    %cst_306 = arith.constant dense<0xFF800000> : vector<8xf32>
    %553 = vector.multi_reduction <maximumf>, %552, %cst_306 [1] : vector<8x8xf32> to vector<8xf32>
    %554 = vector.shape_cast %553 : vector<8xf32> to vector<8x1xf32>
    %555 = vector.broadcast %554 : vector<8x1xf32> to vector<8x8xf32>
    %556 = arith.subf %552, %555 : vector<8x8xf32>
    %557 = math.exp %556 : vector<8x8xf32>
    %cst_307 = arith.constant dense<0.000000e+00> : vector<8xf32>
    %558 = vector.multi_reduction <add>, %557, %cst_307 [1] : vector<8x8xf32> to vector<8xf32>
    %559 = vector.shape_cast %558 : vector<8xf32> to vector<8x1xf32>
    %560 = tpu.reciprocal %559 {approx = true} : vector<8x1xf32> -> vector<8x1xf32>
    %561 = vector.broadcast %560 : vector<8x1xf32> to vector<8x8xf32>
    %562 = arith.mulf %557, %561 : vector<8x8xf32>
    %563 = arith.truncf %562 : vector<8x8xf32> to vector<8x8xbf16>
    %cst_308 = arith.constant dense<0.000000e+00> : vector<8x8xf32>
    %564 = tpu.matmul %563, %549, %cst_308 {dimension_numbers = #tpu.dot_dimension_numbers<[1], [0], [0], [1], [0, 0, 1, 1], [], []>} : vector<8x8xbf16>, vector<8x8xbf16>, vector<8x8xf32> -> vector<8x8xf32>
    %c0_309 = arith.constant 0 : index
    %c8_310 = arith.constant 8 : index
    %565 = vector.load %arg20[%c0_309, %c8_310] : memref<8x32xf32, #tpu.memory_space<vmem>>, vector<8x8xf32>
    tpu.vector_store %arg20[%c0_309, %c8_310], %564 {strides = array<i32>} : memref<8x32xf32, #tpu.memory_space<vmem>>, vector<8x8xf32>,
    %566 = vector.extract_strided_slice %507 {offsets = [0, 16], sizes = [8, 8], strides = [1, 1]} : vector<8x32xf32> to vector<8x8xf32>
    %567 = arith.truncf %566 : vector<8x8xf32> to vector<8x8xbf16>
    %568 = vector.extract_strided_slice %514 {offsets = [0, 16], sizes = [8, 8], strides = [1, 1]} : vector<8x32xf32> to vector<8x8xf32>
    %569 = arith.truncf %568 : vector<8x8xf32> to vector<8x8xbf16>
    %570 = vector.extract_strided_slice %521 {offsets = [0, 16], sizes = [8, 8], strides = [1, 1]} : vector<8x32xf32> to vector<8x8xf32>
    %571 = arith.truncf %570 : vector<8x8xf32> to vector<8x8xbf16>
    "tpu.trace_start"() <{level = 10 : i32, message = "tf,sf->ts"}> : () -> ()
    %cst_311 = arith.constant dense<0.000000e+00> : vector<8x8xf32>
    %572 = tpu.matmul %567, %569, %cst_311 {dimension_numbers = #tpu.dot_dimension_numbers<[1], [1], [0], [0], [0, 0, 1, 0], [], []>} : vector<8x8xbf16>, vector<8x8xbf16>, vector<8x8xf32> -> vector<8x8xf32>
    "tpu.trace_stop"() : () -> ()
    %573 = vector.broadcast %356 : vector<1x8xf32> to vector<8x8xf32>
    %574 = arith.addf %572, %573 : vector<8x8xf32>
    %cst_312 = arith.constant dense<0xFF800000> : vector<8xf32>
    %575 = vector.multi_reduction <maximumf>, %574, %cst_312 [1] : vector<8x8xf32> to vector<8xf32>
    %576 = vector.shape_cast %575 : vector<8xf32> to vector<8x1xf32>
    %577 = vector.broadcast %576 : vector<8x1xf32> to vector<8x8xf32>
    %578 = arith.subf %574, %577 : vector<8x8xf32>
    %579 = math.exp %578 : vector<8x8xf32>
    %cst_313 = arith.constant dense<0.000000e+00> : vector<8xf32>
    %580 = vector.multi_reduction <add>, %579, %cst_313 [1] : vector<8x8xf32> to vector<8xf32>
    %581 = vector.shape_cast %580 : vector<8xf32> to vector<8x1xf32>
    %582 = tpu.reciprocal %581 {approx = true} : vector<8x1xf32> -> vector<8x1xf32>
    %583 = vector.broadcast %582 : vector<8x1xf32> to vector<8x8xf32>
    %584 = arith.mulf %579, %583 : vector<8x8xf32>
    %585 = arith.truncf %584 : vector<8x8xf32> to vector<8x8xbf16>
    %cst_314 = arith.constant dense<0.000000e+00> : vector<8x8xf32>
    %586 = tpu.matmul %585, %571, %cst_314 {dimension_numbers = #tpu.dot_dimension_numbers<[1], [0], [0], [1], [0, 0, 1, 1], [], []>} : vector<8x8xbf16>, vector<8x8xbf16>, vector<8x8xf32> -> vector<8x8xf32>
    %c0_315 = arith.constant 0 : index
    %c16_316 = arith.constant 16 : index
    %587 = vector.load %arg20[%c0_315, %c16_316] : memref<8x32xf32, #tpu.memory_space<vmem>>, vector<8x8xf32>
    tpu.vector_store %arg20[%c0_315, %c16_316], %586 {strides = array<i32>} : memref<8x32xf32, #tpu.memory_space<vmem>>, vector<8x8xf32>,
    %588 = vector.extract_strided_slice %507 {offsets = [0, 24], sizes = [8, 8], strides = [1, 1]} : vector<8x32xf32> to vector<8x8xf32>
    %589 = arith.truncf %588 : vector<8x8xf32> to vector<8x8xbf16>
    %590 = vector.extract_strided_slice %514 {offsets = [0, 24], sizes = [8, 8], strides = [1, 1]} : vector<8x32xf32> to vector<8x8xf32>
    %591 = arith.truncf %590 : vector<8x8xf32> to vector<8x8xbf16>
    %592 = vector.extract_strided_slice %521 {offsets = [0, 24], sizes = [8, 8], strides = [1, 1]} : vector<8x32xf32> to vector<8x8xf32>
    %593 = arith.truncf %592 : vector<8x8xf32> to vector<8x8xbf16>
    "tpu.trace_start"() <{level = 10 : i32, message = "tf,sf->ts"}> : () -> ()
    %cst_317 = arith.constant dense<0.000000e+00> : vector<8x8xf32>
    %594 = tpu.matmul %589, %591, %cst_317 {dimension_numbers = #tpu.dot_dimension_numbers<[1], [1], [0], [0], [0, 0, 1, 0], [], []>} : vector<8x8xbf16>, vector<8x8xbf16>, vector<8x8xf32> -> vector<8x8xf32>
    "tpu.trace_stop"() : () -> ()
    %595 = vector.broadcast %356 : vector<1x8xf32> to vector<8x8xf32>
    %596 = arith.addf %594, %595 : vector<8x8xf32>
    %cst_318 = arith.constant dense<0xFF800000> : vector<8xf32>
    %597 = vector.multi_reduction <maximumf>, %596, %cst_318 [1] : vector<8x8xf32> to vector<8xf32>
    %598 = vector.shape_cast %597 : vector<8xf32> to vector<8x1xf32>
    %599 = vector.broadcast %598 : vector<8x1xf32> to vector<8x8xf32>
    %600 = arith.subf %596, %599 : vector<8x8xf32>
    %601 = math.exp %600 : vector<8x8xf32>
    %cst_319 = arith.constant dense<0.000000e+00> : vector<8xf32>
    %602 = vector.multi_reduction <add>, %601, %cst_319 [1] : vector<8x8xf32> to vector<8xf32>
    %603 = vector.shape_cast %602 : vector<8xf32> to vector<8x1xf32>
    %604 = tpu.reciprocal %603 {approx = true} : vector<8x1xf32> -> vector<8x1xf32>
    %605 = vector.broadcast %604 : vector<8x1xf32> to vector<8x8xf32>
    %606 = arith.mulf %601, %605 : vector<8x8xf32>
    %607 = arith.truncf %606 : vector<8x8xf32> to vector<8x8xbf16>
    %cst_320 = arith.constant dense<0.000000e+00> : vector<8x8xf32>
    %608 = tpu.matmul %607, %593, %cst_320 {dimension_numbers = #tpu.dot_dimension_numbers<[1], [0], [0], [1], [0, 0, 1, 1], [], []>} : vector<8x8xbf16>, vector<8x8xbf16>, vector<8x8xf32> -> vector<8x8xf32>
    %c0_321 = arith.constant 0 : index
    %c24_322 = arith.constant 24 : index
    %609 = vector.load %arg20[%c0_321, %c24_322] : memref<8x32xf32, #tpu.memory_space<vmem>>, vector<8x8xf32>
    tpu.vector_store %arg20[%c0_321, %c24_322], %608 {strides = array<i32>} : memref<8x32xf32, #tpu.memory_space<vmem>>, vector<8x8xf32>,
    %c0_323 = arith.constant 0 : index
    %c0_324 = arith.constant 0 : index
    %610 = vector.load %arg20[%c0_323, %c0_324] : memref<8x32xf32, #tpu.memory_space<vmem>>, vector<8x32xf32>
    %611 = arith.truncf %610 : vector<8x32xf32> to vector<8x32xbf16>
    %c0_325 = arith.constant 0 : index
    %c1_326 = arith.constant 1 : index
    %c0_327 = arith.constant 0 : index
    %c0_328 = arith.constant 0 : index
    %612 = vector.load %arg8[%c0_325, %c1_326, %c0_327, %c0_328] : memref<1x2x32x32xbf16, #tpu.memory_space<vmem>>, vector<1x1x32x32xbf16>
    %613 = vector.shape_cast %612 : vector<1x1x32x32xbf16> to vector<32x32xbf16>
    %cst_329 = arith.constant dense<0.000000e+00> : vector<8x32xf32>
    %614 = tpu.matmul %611, %613, %cst_329 {dimension_numbers = #tpu.dot_dimension_numbers<[1], [0], [0], [1], [0, 0, 1, 1], [], []>} : vector<8x32xbf16>, vector<32x32xbf16>, vector<8x32xf32> -> vector<8x32xf32>
    %c0_330 = arith.constant 0 : index
    %c1_331 = arith.constant 1 : index
    %c0_332 = arith.constant 0 : index
    %c0_333 = arith.constant 0 : index
    %615 = vector.load %arg9[%c0_330, %c1_331, %c0_332, %c0_333] : memref<1x2x1x32xf32, #tpu.memory_space<vmem>>, vector<1x1x1x32xf32>
    %616 = vector.shape_cast %615 : vector<1x1x1x32xf32> to vector<1x32xf32>
    %617 = vector.broadcast %616 : vector<1x32xf32> to vector<8x32xf32>
    %618 = arith.addf %614, %617 : vector<8x32xf32>
    %619 = arith.addf %499, %618 : vector<8x32xf32>
    %c0_334 = arith.constant 0 : index
    %c1_335 = arith.constant 1 : index
    %c0_336 = arith.constant 0 : index
    %c0_337 = arith.constant 0 : index
    %620 = vector.load %arg14[%c0_334, %c1_335, %c0_336, %c0_337] : memref<1x3x1x32xf32, #tpu.memory_space<vmem>>, vector<1x1x1x32xf32>
    %621 = vector.shape_cast %620 : vector<1x1x1x32xf32> to vector<1x32xf32>
    %c0_338 = arith.constant 0 : index
    %c1_339 = arith.constant 1 : index
    %c0_340 = arith.constant 0 : index
    %c0_341 = arith.constant 0 : index
    %622 = vector.load %arg15[%c0_338, %c1_339, %c0_340, %c0_341] : memref<1x3x1x32xf32, #tpu.memory_space<vmem>>, vector<1x1x1x32xf32>
    %623 = vector.shape_cast %622 : vector<1x1x1x32xf32> to vector<1x32xf32>
    %cst_342 = arith.constant dense<0.000000e+00> : vector<8xf32>
    %624 = vector.multi_reduction <add>, %619, %cst_342 [1] : vector<8x32xf32> to vector<8xf32>
    %625 = vector.shape_cast %624 : vector<8xf32> to vector<8x1xf32>
    %cst_343 = arith.constant 3.200000e+01 : f32
    %626 = vector.broadcast %cst_343 : f32 to vector<8x1xf32>
    %627 = arith.divf %625, %626 : vector<8x1xf32>
    %628 = vector.broadcast %627 : vector<8x1xf32> to vector<8x32xf32>
    %629 = arith.subf %619, %628 : vector<8x32xf32>
    %630 = arith.mulf %629, %629 : vector<8x32xf32>
    %cst_344 = arith.constant dense<0.000000e+00> : vector<8xf32>
    %631 = vector.multi_reduction <add>, %630, %cst_344 [1] : vector<8x32xf32> to vector<8xf32>
    %632 = vector.shape_cast %631 : vector<8xf32> to vector<8x1xf32>
    %cst_345 = arith.constant 3.200000e+01 : f32
    %633 = vector.broadcast %cst_345 : f32 to vector<8x1xf32>
    %634 = arith.divf %632, %633 : vector<8x1xf32>
    %635 = vector.broadcast %627 : vector<8x1xf32> to vector<8x32xf32>
    %636 = arith.subf %619, %635 : vector<8x32xf32>
    %637 = vector.broadcast %621 : vector<1x32xf32> to vector<8x32xf32>
    %638 = arith.mulf %637, %636 : vector<8x32xf32>
    %cst_346 = arith.constant 9.99999997E-7 : f32
    %639 = vector.broadcast %cst_346 : f32 to vector<8x1xf32>
    %640 = arith.addf %634, %639 : vector<8x1xf32>
    %641 = math.rsqrt %640 : vector<8x1xf32>
    %642 = vector.broadcast %641 : vector<8x1xf32> to vector<8x32xf32>
    %643 = arith.mulf %638, %642 : vector<8x32xf32>
    %644 = vector.broadcast %623 : vector<1x32xf32> to vector<8x32xf32>
    %645 = arith.addf %643, %644 : vector<8x32xf32>
    %646 = arith.truncf %645 : vector<8x32xf32> to vector<8x32xbf16>
    %c0_347 = arith.constant 0 : index
    %c0_348 = arith.constant 0 : index
    %c0_349 = arith.constant 0 : index
    %647 = vector.load %arg10[%c0_347, %c0_348, %c0_349] : memref<1x32x64xbf16, #tpu.memory_space<vmem>>, vector<1x32x64xbf16>
    %648 = vector.shape_cast %647 : vector<1x32x64xbf16> to vector<32x64xbf16>
    %cst_350 = arith.constant dense<0.000000e+00> : vector<8x64xf32>
    %649 = tpu.matmul %646, %648, %cst_350 {dimension_numbers = #tpu.dot_dimension_numbers<[1], [0], [0], [1], [0, 0, 1, 1], [], []>} : vector<8x32xbf16>, vector<32x64xbf16>, vector<8x64xf32> -> vector<8x64xf32>
    %c0_351 = arith.constant 0 : index
    %c0_352 = arith.constant 0 : index
    %c0_353 = arith.constant 0 : index
    %650 = vector.load %arg11[%c0_351, %c0_352, %c0_353] : memref<1x1x64xf32, #tpu.memory_space<vmem>>, vector<1x1x64xf32>
    %651 = vector.shape_cast %650 : vector<1x1x64xf32> to vector<1x64xf32>
    %652 = vector.broadcast %651 : vector<1x64xf32> to vector<8x64xf32>
    %653 = arith.addf %649, %652 : vector<8x64xf32>
    %cst_354 = arith.constant 0.000000e+00 : f32
    %654 = vector.broadcast %cst_354 : f32 to vector<8x64xf32>
    %655 = arith.maximumf %653, %654 : vector<8x64xf32>
    %656 = arith.truncf %655 : vector<8x64xf32> to vector<8x64xbf16>
    %c0_355 = arith.constant 0 : index
    %c0_356 = arith.constant 0 : index
    %c0_357 = arith.constant 0 : index
    %657 = vector.load %arg12[%c0_355, %c0_356, %c0_357] : memref<1x64x32xbf16, #tpu.memory_space<vmem>>, vector<1x64x32xbf16>
    %658 = vector.shape_cast %657 : vector<1x64x32xbf16> to vector<64x32xbf16>
    %cst_358 = arith.constant dense<0.000000e+00> : vector<8x32xf32>
    %659 = tpu.matmul %656, %658, %cst_358 {dimension_numbers = #tpu.dot_dimension_numbers<[1], [0], [0], [1], [0, 0, 1, 1], [], []>} : vector<8x64xbf16>, vector<64x32xbf16>, vector<8x32xf32> -> vector<8x32xf32>
    %c0_359 = arith.constant 0 : index
    %c0_360 = arith.constant 0 : index
    %c0_361 = arith.constant 0 : index
    %660 = vector.load %arg13[%c0_359, %c0_360, %c0_361] : memref<1x1x32xf32, #tpu.memory_space<vmem>>, vector<1x1x32xf32>
    %661 = vector.shape_cast %660 : vector<1x1x32xf32> to vector<1x32xf32>
    %662 = vector.broadcast %661 : vector<1x32xf32> to vector<8x32xf32>
    %663 = arith.addf %659, %662 : vector<8x32xf32>
    %664 = arith.addf %645, %663 : vector<8x32xf32>
    %c0_362 = arith.constant 0 : index
    %c2_363 = arith.constant 2 : index
    %c0_364 = arith.constant 0 : index
    %c0_365 = arith.constant 0 : index
    %665 = vector.load %arg14[%c0_362, %c2_363, %c0_364, %c0_365] : memref<1x3x1x32xf32, #tpu.memory_space<vmem>>, vector<1x1x1x32xf32>
    %666 = vector.shape_cast %665 : vector<1x1x1x32xf32> to vector<1x32xf32>
    %c0_366 = arith.constant 0 : index
    %c2_367 = arith.constant 2 : index
    %c0_368 = arith.constant 0 : index
    %c0_369 = arith.constant 0 : index
    %667 = vector.load %arg15[%c0_366, %c2_367, %c0_368, %c0_369] : memref<1x3x1x32xf32, #tpu.memory_space<vmem>>, vector<1x1x1x32xf32>
    %668 = vector.shape_cast %667 : vector<1x1x1x32xf32> to vector<1x32xf32>
    %cst_370 = arith.constant dense<0.000000e+00> : vector<8xf32>
    %669 = vector.multi_reduction <add>, %664, %cst_370 [1] : vector<8x32xf32> to vector<8xf32>
    %670 = vector.shape_cast %669 : vector<8xf32> to vector<8x1xf32>
    %cst_371 = arith.constant 3.200000e+01 : f32
    %671 = vector.broadcast %cst_371 : f32 to vector<8x1xf32>
    %672 = arith.divf %670, %671 : vector<8x1xf32>
    %673 = vector.broadcast %672 : vector<8x1xf32> to vector<8x32xf32>
    %674 = arith.subf %664, %673 : vector<8x32xf32>
    %675 = arith.mulf %674, %674 : vector<8x32xf32>
    %cst_372 = arith.constant dense<0.000000e+00> : vector<8xf32>
    %676 = vector.multi_reduction <add>, %675, %cst_372 [1] : vector<8x32xf32> to vector<8xf32>
    %677 = vector.shape_cast %676 : vector<8xf32> to vector<8x1xf32>
    %cst_373 = arith.constant 3.200000e+01 : f32
    %678 = vector.broadcast %cst_373 : f32 to vector<8x1xf32>
    %679 = arith.divf %677, %678 : vector<8x1xf32>
    %680 = vector.broadcast %672 : vector<8x1xf32> to vector<8x32xf32>
    %681 = arith.subf %664, %680 : vector<8x32xf32>
    %682 = vector.broadcast %666 : vector<1x32xf32> to vector<8x32xf32>
    %683 = arith.mulf %682, %681 : vector<8x32xf32>
    %cst_374 = arith.constant 9.99999997E-7 : f32
    %684 = vector.broadcast %cst_374 : f32 to vector<8x1xf32>
    %685 = arith.addf %679, %684 : vector<8x1xf32>
    %686 = math.rsqrt %685 : vector<8x1xf32>
    %687 = vector.broadcast %686 : vector<8x1xf32> to vector<8x32xf32>
    %688 = arith.mulf %683, %687 : vector<8x32xf32>
    %689 = vector.broadcast %668 : vector<1x32xf32> to vector<8x32xf32>
    %690 = arith.addf %688, %689 : vector<8x32xf32>
    %c1_375 = arith.constant 1 : index
    %c0_376 = arith.constant 0 : index
    %c0_377 = arith.constant 0 : index
    %691 = vector.load %arg19[%c1_375, %c0_376, %c0_377] : memref<2x8x32xf32, #tpu.memory_space<vmem>>, vector<1x8x32xf32>
    %692 = vector.shape_cast %691 : vector<1x8x32xf32> to vector<8x32xf32>
    %693 = vector.shape_cast %690 : vector<8x32xf32> to vector<1x8x32xf32>
    tpu.vector_store %arg19[%c1_375, %c0_376, %c0_377], %693 {strides = array<i32>} : memref<2x8x32xf32, #tpu.memory_space<vmem>>, vector<1x8x32xf32>,
    %694 = arith.extui %0 : i1 to i32
    %c0_i32_378 = arith.constant 0 : i32
    %695 = arith.cmpi ne, %694, %c0_i32_378 : i32
    scf.if %695 {
      %c0_379 = arith.constant 0 : index
      %c0_380 = arith.constant 0 : index
      %696 = vector.load %arg16[%c0_379, %c0_380] : memref<1x32xf32, #tpu.memory_space<vmem>>, vector<1x32xf32>
      %c0_381 = arith.constant 0 : index
      %c0_382 = arith.constant 0 : index
      %697 = vector.load %arg17[%c0_381, %c0_382] : memref<1x32xf32, #tpu.memory_space<vmem>>, vector<1x32xf32>
      %cst_383 = arith.constant dense<0.000000e+00> : vector<8xf32>
      %698 = vector.multi_reduction <add>, %690, %cst_383 [1] : vector<8x32xf32> to vector<8xf32>
      %699 = vector.shape_cast %698 : vector<8xf32> to vector<8x1xf32>
      %cst_384 = arith.constant 3.200000e+01 : f32
      %700 = vector.broadcast %cst_384 : f32 to vector<8x1xf32>
      %701 = arith.divf %699, %700 : vector<8x1xf32>
      %702 = vector.broadcast %701 : vector<8x1xf32> to vector<8x32xf32>
      %703 = arith.subf %690, %702 : vector<8x32xf32>
      %704 = arith.mulf %703, %703 : vector<8x32xf32>
      %cst_385 = arith.constant dense<0.000000e+00> : vector<8xf32>
      %705 = vector.multi_reduction <add>, %704, %cst_385 [1] : vector<8x32xf32> to vector<8xf32>
      %706 = vector.shape_cast %705 : vector<8xf32> to vector<8x1xf32>
      %cst_386 = arith.constant 3.200000e+01 : f32
      %707 = vector.broadcast %cst_386 : f32 to vector<8x1xf32>
      %708 = arith.divf %706, %707 : vector<8x1xf32>
      %709 = vector.broadcast %701 : vector<8x1xf32> to vector<8x32xf32>
      %710 = arith.subf %690, %709 : vector<8x32xf32>
      %711 = vector.broadcast %696 : vector<1x32xf32> to vector<8x32xf32>
      %712 = arith.mulf %711, %710 : vector<8x32xf32>
      %cst_387 = arith.constant 9.99999997E-7 : f32
      %713 = vector.broadcast %cst_387 : f32 to vector<8x1xf32>
      %714 = arith.addf %708, %713 : vector<8x1xf32>
      %715 = math.rsqrt %714 : vector<8x1xf32>
      %716 = vector.broadcast %715 : vector<8x1xf32> to vector<8x32xf32>
      %717 = arith.mulf %712, %716 : vector<8x32xf32>
      %718 = vector.broadcast %697 : vector<1x32xf32> to vector<8x32xf32>
      %719 = arith.addf %717, %718 : vector<8x32xf32>
      %c1_388 = arith.constant 1 : index
      %c0_389 = arith.constant 0 : index
      %c0_390 = arith.constant 0 : index
      %720 = vector.load %arg18[%c1_388, %c0_389, %c0_390] : memref<2x8x32xf32, #tpu.memory_space<vmem>>, vector<1x8x32xf32>
      %721 = vector.shape_cast %720 : vector<1x8x32xf32> to vector<8x32xf32>
      %722 = vector.shape_cast %719 : vector<8x32xf32> to vector<1x8x32xf32>
      tpu.vector_store %arg18[%c1_388, %c0_389, %c0_390], %722 {strides = array<i32>} : memref<2x8x32xf32, #tpu.memory_space<vmem>>, vector<1x8x32xf32>,
    } else {
    }
    return
  }
  func.func @transform_0(%arg0: i32, %arg1: i32) -> (i32, i32, i32) {
    %c0_i32 = arith.constant 0 : i32
    %c0_i32_0 = arith.constant 0 : i32
    %c0_i32_1 = arith.constant 0 : i32
    return %arg0, %c0_i32, %c0_i32_0 : i32, i32, i32
  }
  func.func @transform_1(%arg0: i32, %arg1: i32) -> (i32, i32, i32) {
    %c0_i32 = arith.constant 0 : i32
    %c0_i32_0 = arith.constant 0 : i32
    %c0_i32_1 = arith.constant 0 : i32
    return %arg0, %c0_i32, %c0_i32_0 : i32, i32, i32
  }
  func.func @transform_2(%arg0: i32, %arg1: i32) -> (i32, i32, i32) {
    %c0_i32 = arith.constant 0 : i32
    %c0_i32_0 = arith.constant 0 : i32
    %c0_i32_1 = arith.constant 0 : i32
    return %arg0, %c0_i32, %c0_i32_0 : i32, i32, i32
  }
  func.func @transform_3(%arg0: i32, %arg1: i32) -> (i32, i32, i32) {
    %c0_i32 = arith.constant 0 : i32
    %c0_i32_0 = arith.constant 0 : i32
    %c0_i32_1 = arith.constant 0 : i32
    return %arg0, %c0_i32, %c0_i32_0 : i32, i32, i32
  }
  func.func @transform_4(%arg0: i32, %arg1: i32) -> (i32, i32, i32, i32) {
    %c0_i32 = arith.constant 0 : i32
    %c0_i32_0 = arith.constant 0 : i32
    %c0_i32_1 = arith.constant 0 : i32
    %c0_i32_2 = arith.constant 0 : i32
    return %arg1, %c0_i32, %c0_i32_0, %c0_i32_1 : i32, i32, i32, i32
  }
  func.func @transform_5(%arg0: i32, %arg1: i32) -> (i32, i32, i32, i32) {
    %c0_i32 = arith.constant 0 : i32
    %c0_i32_0 = arith.constant 0 : i32
    %c0_i32_1 = arith.constant 0 : i32
    %c0_i32_2 = arith.constant 0 : i32
    return %arg1, %c0_i32, %c0_i32_0, %c0_i32_1 : i32, i32, i32, i32
  }
  func.func @transform_6(%arg0: i32, %arg1: i32) -> (i32, i32, i32, i32) {
    %c0_i32 = arith.constant 0 : i32
    %c0_i32_0 = arith.constant 0 : i32
    %c0_i32_1 = arith.constant 0 : i32
    %c0_i32_2 = arith.constant 0 : i32
    return %arg1, %c0_i32, %c0_i32_0, %c0_i32_1 : i32, i32, i32, i32
  }
  func.func @transform_7(%arg0: i32, %arg1: i32) -> (i32, i32, i32, i32) {
    %c0_i32 = arith.constant 0 : i32
    %c0_i32_0 = arith.constant 0 : i32
    %c0_i32_1 = arith.constant 0 : i32
    %c0_i32_2 = arith.constant 0 : i32
    return %arg1, %c0_i32, %c0_i32_0, %c0_i32_1 : i32, i32, i32, i32
  }
  func.func @transform_8(%arg0: i32, %arg1: i32) -> (i32, i32, i32) {
    %c0_i32 = arith.constant 0 : i32
    %c0_i32_0 = arith.constant 0 : i32
    %c0_i32_1 = arith.constant 0 : i32
    return %arg1, %c0_i32, %c0_i32_0 : i32, i32, i32
  }
  func.func @transform_9(%arg0: i32, %arg1: i32) -> (i32, i32, i32) {
    %c0_i32 = arith.constant 0 : i32
    %c0_i32_0 = arith.constant 0 : i32
    %c0_i32_1 = arith.constant 0 : i32
    return %arg1, %c0_i32, %c0_i32_0 : i32, i32, i32
  }
  func.func @transform_10(%arg0: i32, %arg1: i32) -> (i32, i32, i32) {
    %c0_i32 = arith.constant 0 : i32
    %c0_i32_0 = arith.constant 0 : i32
    %c0_i32_1 = arith.constant 0 : i32
    return %arg1, %c0_i32, %c0_i32_0 : i32, i32, i32
  }
  func.func @transform_11(%arg0: i32, %arg1: i32) -> (i32, i32, i32) {
    %c0_i32 = arith.constant 0 : i32
    %c0_i32_0 = arith.constant 0 : i32
    %c0_i32_1 = arith.constant 0 : i32
    return %arg1, %c0_i32, %c0_i32_0 : i32, i32, i32
  }
  func.func @transform_12(%arg0: i32, %arg1: i32) -> (i32, i32, i32, i32) {
    %c0_i32 = arith.constant 0 : i32
    %c0_i32_0 = arith.constant 0 : i32
    %c0_i32_1 = arith.constant 0 : i32
    %c0_i32_2 = arith.constant 0 : i32
    return %arg1, %c0_i32, %c0_i32_0, %c0_i32_1 : i32, i32, i32, i32
  }
  func.func @transform_13(%arg0: i32, %arg1: i32) -> (i32, i32, i32, i32) {
    %c0_i32 = arith.constant 0 : i32
    %c0_i32_0 = arith.constant 0 : i32
    %c0_i32_1 = arith.constant 0 : i32
    %c0_i32_2 = arith.constant 0 : i32
    return %arg1, %c0_i32, %c0_i32_0, %c0_i32_1 : i32, i32, i32, i32
  }
  func.func @transform_14(%arg0: i32, %arg1: i32) -> (i32, i32) {
    %c0_i32 = arith.constant 0 : i32
    %c0_i32_0 = arith.constant 0 : i32
    %c0_i32_1 = arith.constant 0 : i32
    return %c0_i32, %c0_i32_0 : i32, i32
  }
  func.func @transform_15(%arg0: i32, %arg1: i32) -> (i32, i32) {
    %c0_i32 = arith.constant 0 : i32
    %c0_i32_0 = arith.constant 0 : i32
    %c0_i32_1 = arith.constant 0 : i32
    return %c0_i32, %c0_i32_0 : i32, i32
  }
  func.func @transform_16(%arg0: i32, %arg1: i32) -> (i32, i32, i32) {
    %c0_i32 = arith.constant 0 : i32
    %c0_i32_0 = arith.constant 0 : i32
    %c0_i32_1 = arith.constant 0 : i32
    return %arg0, %c0_i32, %c0_i32_0 : i32, i32, i32
  }
}

</mosaic_0001>

<llo_original>
// kernel: tpu_custom_call.1
$region0: #{tpu_custom_call.1}
  #allocation0 [shape = 'u32[]', space=smem, size = 0x4, offset = 0x4, fixed_abs, tag = 'smem constant byte address 0x4 - core index']
  #allocation1 [shape = 'u32[144,128]{1,0:T(1,128)}', space=vmem, size = 0x12000, scoped, tag = 'internal scratch']
  #allocation2 [shape = 'f32[2,8,32]{2,1,0:T(8,128)}', space=vmem, size = 0x2000, scoped, tag = 'scratch operand']
  #allocation3 [shape = 'f32[8,32]{1,0:T(8,128)}', space=vmem, size = 0x1000, scoped, tag = 'scratch operand']
  %s0 = inlined_call_operand.hbm [shape: f32[2,8,32], index: 0, kind: input, shape index: {}]
  %s1 = inlined_call_operand.hbm [shape: bf16[2,8,32], index: 1, kind: input, shape index: {}]
  %s2 = inlined_call_operand.hbm [shape: f32[2,1,8], index: 2, kind: input, shape index: {}]
  %s3 = inlined_call_operand.hbm [shape: f32[2,8,8], index: 3, kind: input, shape index: {}]
  %s4 = inlined_call_operand.hbm [shape: bf16[2,6,32,32], index: 4, kind: input, shape index: {}]
  %s5 = inlined_call_operand.hbm [shape: f32[2,6,1,32], index: 5, kind: input, shape index: {}]
  %s6 = inlined_call_operand.vmem [shape: bf16[2,2,32,32], index: 6, kind: input, shape index: {}]
  %s7 = inlined_call_operand.hbm [shape: f32[2,2,1,32], index: 7, kind: input, shape index: {}]
  %s8 = inlined_call_operand.vmem [shape: bf16[2,32,64], index: 8, kind: input, shape index: {}]
  %s9 = inlined_call_operand.hbm [shape: f32[2,1,64], index: 9, kind: input, shape index: {}]
  %s10 = inlined_call_operand.vmem [shape: bf16[2,64,32], index: 10, kind: input, shape index: {}]
  %s11 = inlined_call_operand.hbm [shape: f32[2,1,32], index: 11, kind: input, shape index: {}]
  %s12 = inlined_call_operand.vmem [shape: f32[2,3,1,32], index: 12, kind: input, shape index: {}]
  %s13 = inlined_call_operand.vmem [shape: f32[2,3,1,32], index: 13, kind: input, shape index: {}]
  %s14 = inlined_call_operand.vmem [shape: f32[1,32], index: 14, kind: input, shape index: {}]
  %s15 = inlined_call_operand.vmem [shape: f32[1,32], index: 15, kind: input, shape index: {}]
  %s16 = inlined_call_operand.hbm [shape: f32[2,8,32], index: 16, kind: output, shape index: {}]
  %s17 = sld [smem:[#allocation0]]
  $region145: #{tpu_custom_call.1} parent=0
    _
  %s19 = ssub.s32 1, %s17
  %s20 = scalar_select 0, %s19, %s17
  $region1: #{tpu_custom_call.1} parent=0
    #allocation4 [shape = 'u8[8192]{0}', space=vmem, size = 0x2000, scoped, tag = 'input window, operand 0, single buffered']
    #allocation5 [shape = 's32[2]{0}', space=sflag, size = 0x8, scoped, tag = 'scoped memory for tpu_custom_call.1']
    #allocation6 [shape = 's32[2]{0}', space=sflag, size = 0x8, scoped, tag = 'scoped memory for tpu_custom_call.1']
    #allocation7 [shape = 'u8[4096]{0}', space=vmem, size = 0x1000, scoped, tag = 'input window, operand 1, single buffered']
    #allocation8 [shape = 's32[1]{0}', space=sflag, size = 0x4, scoped, tag = 'scoped memory for tpu_custom_call.1']
    #allocation9 [shape = 'u8[1024]{0}', space=vmem, size = 0x400, scoped, tag = 'input window, operand 2, single buffered']
    #allocation10 [shape = 'u8[8192]{0}', space=vmem, size = 0x2000, scoped, tag = 'input window, operand 3, single buffered']
    #allocation11 [shape = 's32[1]{0}', space=sflag, size = 0x4, scoped, tag = 'scoped memory for tpu_custom_call.1']
    #allocation12 [shape = 'u8[98304]{0}', space=vmem, size = 0x18000, scoped, tag = 'input window, operand 4']
    #allocation13 [shape = 'u8[6144]{0}', space=vmem, size = 0x1800, scoped, tag = 'input window, operand 5']
    #allocation14 [shape = 'u8[2048]{0}', space=vmem, size = 0x800, scoped, tag = 'input window, operand 7']
    #allocation15 [shape = 'u8[1024]{0}', space=vmem, size = 0x400, scoped, tag = 'input window, operand 9']
    #allocation16 [shape = 'u8[1024]{0}', space=vmem, size = 0x400, scoped, tag = 'input window, operand 11']
    #allocation17 [shape = 'u8[8192]{0}', space=vmem, size = 0x2000, scoped, tag = 'output window, operand 0, single buffered']
    %21 = vsyncpa [#allocation5], 0
    %22 = vsyncpa [#allocation8], 0
    %23 = vsyncpa [#allocation11], 0
    %24 = vsyncpa [#allocation6], 0
    loop: start=0, step=1, limit=4
    $region2: #{tpu_custom_call.1} parent=1 // loop_pre_header
      _
    $region3: #{tpu_custom_call.1} parent=1 // loop_header
      %s26 = sphi 0, %s30
      %p27 = scmp.ge.s32.totalorder %s26, 4
      %s33 = sphi 0, %s45
      %s34 = sphi 0, %s41
      %s35 = sphi 0, %s33
      %s36 = sphi 0, %s34
      %s37 = sphi 0, %s35
      %s38 = sphi 0, %s36
      %s48 = sphi 0, %s50
      %s51 = sphi 0, %s48
      %s52 = sphi 0, %s51
      %s68 = sphi 0, %s52
      %s74 = sphi 0, %s76
      %s77 = sphi 0, %s74
      %s78 = sphi 0, %s77
      %s94 = sphi 0, %s78
      %s100 = sphi 0, %s102
      %s103 = sphi 0, %s100
      %s104 = sphi 0, %s103
      %s120 = sphi 0, %s104
      %s126 = sphi 0, %s128
      %s129 = sphi 0, %s126
      %s130 = sphi 0, %s129
      %s146 = sphi 0, %s130
      %s152 = sphi 0, %s154
      %s155 = sphi 0, %s152
      %s156 = sphi 0, %s155
      %s172 = sphi 0, %s156
      %s178 = sphi 0, %s180
      %s181 = sphi 0, %s178
      %s182 = sphi 0, %s181
      %s198 = sphi 0, %s182
      %s204 = sphi 0, %s206
      %s207 = sphi 0, %s204
      %s208 = sphi 0, %s207
      %s224 = sphi 0, %s208
      %s230 = sphi 0, %s232
      %s233 = sphi 0, %s230
      %s234 = sphi 0, %s233
      %s250 = sphi 0, %s234
      %s256 = sphi 0, %s258
      %s259 = sphi 0, %s256
      %s260 = sphi 0, %s259
      %s276 = sphi 0, %s260
      %s282 = sphi 0, %s284
      %s285 = sphi 0, %s282
      %s286 = sphi 0, %s285
      %s302 = sphi 0, %s286
      %s308 = sphi 0, %s310
      %s311 = sphi 0, %s308
      %s312 = sphi 0, %s311
      %s328 = sphi 0, %s312
      %s334 = sphi 0, %s336
      %s337 = sphi 0, %s334
      %s338 = sphi 0, %s337
      %s354 = sphi 0, %s338
      %s360 = sphi 0, %s362
      %s363 = sphi 0, %s360
      %s364 = sphi 0, %s363
      %s380 = sphi 0, %s364
      %s386 = sphi 0, %s388
      %s389 = sphi 0, %s386
      %s390 = sphi 0, %s389
      %s406 = sphi 0, %s390
      %s410 = sphi 0, %s410
      %s412 = sphi 0, %s410
      %s413 = sphi 0, %s412
      %s427 = sphi 0, %s413
      %s431 = sphi 0, %s431
      %s433 = sphi 0, %s431
      %s434 = sphi 0, %s433
      %s448 = sphi 0, %s434
      %s454 = sphi 0, %s456
      %s457 = sphi 0, %s454
      %s458 = sphi 0, %s457
      %s474 = sphi 0, %s458
    $region4: #{tpu_custom_call.1} parent=1 // loop_header_branch
      %29 = sbr.rel (%p27) target = $region8
    $region5: #{tpu_custom_call.1} parent=1 // loop_body
      %s31 = ssub.s32 %s26, 1
      %s32 = ssub.s32 %s26, 2
      %s39 = sadd.s32 1, %s34
      %p40 = scmp.ge.s32.totalorder %s39, 2
      %s41 = scalar_select %p40, 0, %s39
      %s42 = sadd.s32 1, %s33
      %s43 = scalar_select %p40, %s42, %s33
      %p44 = scmp.ge.s32.totalorder %s43, 1
      %s45 = scalar_select %p44, 0, %s43
      %s46 = ssub.s32 %s33, %s45
      %p47 = scmp.eq.s32.totalorder %s46, 0
      %s49 = sadd.s32 %s48, 1
      %s50 = scalar_select %p47, %s48, %s49
      %p53 = pneg %p47
      %p54 = scmp.eq.s32.totalorder %s26, 1
      %p55 = por %p53, %p54
      %p56 = scmp.ne.s32.totalorder %s48, %s51
      %p57 = scmp.eq.s32.totalorder %s26, 0
      %p58 = por %p56, %p57
      %p59 = scmp.ne.s32.totalorder %s48, %s51
      %p60 = scmp.eq.s32.totalorder %s31, 1
      %p61 = por %p59, %p60
      %p62 = scmp.ne.s32.totalorder %s51, %s52
      %p63 = scmp.eq.s32.totalorder %s31, 0
      %p64 = por %p62, %p63
      %p65 = scmp.ne.s32.totalorder %s51, %s52
      %p66 = scmp.eq.s32.totalorder %s32, 1
      %p67 = por %p65, %p66
      %p69 = scmp.ne.s32.totalorder %s52, %s68
      %p70 = scmp.eq.s32.totalorder %s32, 0
      %p71 = por %p69, %p70
      %s72 = ssub.s32 %s33, %s45
      %p73 = scmp.eq.s32.totalorder %s72, 0
      %s75 = sadd.s32 %s74, 1
      %s76 = scalar_select %p73, %s74, %s75
      %p79 = pneg %p73
      %p80 = scmp.eq.s32.totalorder %s26, 1
      %p81 = por %p79, %p80
      %p82 = scmp.ne.s32.totalorder %s74, %s77
      %p83 = scmp.eq.s32.totalorder %s26, 0
      %p84 = por %p82, %p83
      %p85 = scmp.ne.s32.totalorder %s74, %s77
      %p86 = scmp.eq.s32.totalorder %s31, 1
      %p87 = por %p85, %p86
      %p88 = scmp.ne.s32.totalorder %s77, %s78
      %p89 = scmp.eq.s32.totalorder %s31, 0
      %p90 = por %p88, %p89
      %p91 = scmp.ne.s32.totalorder %s77, %s78
      %p92 = scmp.eq.s32.totalorder %s32, 1
      %p93 = por %p91, %p92
      %p95 = scmp.ne.s32.totalorder %s78, %s94
      %p96 = scmp.eq.s32.totalorder %s32, 0
      %p97 = por %p95, %p96
      %s98 = ssub.s32 %s33, %s45
      %p99 = scmp.eq.s32.totalorder %s98, 0
      %s101 = sadd.s32 %s100, 1
      %s102 = scalar_select %p99, %s100, %s101
      %p105 = pneg %p99
      %p106 = scmp.eq.s32.totalorder %s26, 1
      %p107 = por %p105, %p106
      %p108 = scmp.ne.s32.totalorder %s100, %s103
      %p109 = scmp.eq.s32.totalorder %s26, 0
      %p110 = por %p108, %p109
      %p111 = scmp.ne.s32.totalorder %s100, %s103
      %p112 = scmp.eq.s32.totalorder %s31, 1
      %p113 = por %p111, %p112
      %p114 = scmp.ne.s32.totalorder %s103, %s104
      %p115 = scmp.eq.s32.totalorder %s31, 0
      %p116 = por %p114, %p115
      %p117 = scmp.ne.s32.totalorder %s103, %s104
      %p118 = scmp.eq.s32.totalorder %s32, 1
      %p119 = por %p117, %p118
      %p121 = scmp.ne.s32.totalorder %s104, %s120
      %p122 = scmp.eq.s32.totalorder %s32, 0
      %p123 = por %p121, %p122
      %s124 = ssub.s32 %s33, %s45
      %p125 = scmp.eq.s32.totalorder %s124, 0
      %s127 = sadd.s32 %s126, 1
      %s128 = scalar_select %p125, %s126, %s127
      %p131 = pneg %p125
      %p132 = scmp.eq.s32.totalorder %s26, 1
      %p133 = por %p131, %p132
      %p134 = scmp.ne.s32.totalorder %s126, %s129
      %p135 = scmp.eq.s32.totalorder %s26, 0
      %p136 = por %p134, %p135
      %p137 = scmp.ne.s32.totalorder %s126, %s129
      %p138 = scmp.eq.s32.totalorder %s31, 1
      %p139 = por %p137, %p138
      %p140 = scmp.ne.s32.totalorder %s129, %s130
      %p141 = scmp.eq.s32.totalorder %s31, 0
      %p142 = por %p140, %p141
      %p143 = scmp.ne.s32.totalorder %s129, %s130
      %p144 = scmp.eq.s32.totalorder %s32, 1
      %p145 = por %p143, %p144
      %p147 = scmp.ne.s32.totalorder %s130, %s146
      %p148 = scmp.eq.s32.totalorder %s32, 0
      %p149 = por %p147, %p148
      %s150 = ssub.s32 %s34, %s41
      %p151 = scmp.eq.s32.totalorder %s150, 0
      %s153 = sadd.s32 %s152, 1
      %s154 = scalar_select %p151, %s152, %s153
      %p157 = pneg %p151
      %p158 = scmp.eq.s32.totalorder %s26, 1
      %p159 = por %p157, %p158
      %p160 = scmp.ne.s32.totalorder %s152, %s155
      %p161 = scmp.eq.s32.totalorder %s26, 0
      %p162 = por %p160, %p161
      %p163 = scmp.ne.s32.totalorder %s152, %s155
      %p164 = scmp.eq.s32.totalorder %s31, 1
      %p165 = por %p163, %p164
      %p166 = scmp.ne.s32.totalorder %s155, %s156
      %p167 = scmp.eq.s32.totalorder %s31, 0
      %p168 = por %p166, %p167
      %p169 = scmp.ne.s32.totalorder %s155, %s156
      %p170 = scmp.eq.s32.totalorder %s32, 1
      %p171 = por %p169, %p170
      %p173 = scmp.ne.s32.totalorder %s156, %s172
      %p174 = scmp.eq.s32.totalorder %s32, 0
      %p175 = por %p173, %p174
      %s176 = ssub.s32 %s34, %s41
      %p177 = scmp.eq.s32.totalorder %s176, 0
      %s179 = sadd.s32 %s178, 1
      %s180 = scalar_select %p177, %s178, %s179
      %p183 = pneg %p177
      %p184 = scmp.eq.s32.totalorder %s26, 1
      %p185 = por %p183, %p184
      %p186 = scmp.ne.s32.totalorder %s178, %s181
      %p187 = scmp.eq.s32.totalorder %s26, 0
      %p188 = por %p186, %p187
      %p189 = scmp.ne.s32.totalorder %s178, %s181
      %p190 = scmp.eq.s32.totalorder %s31, 1
      %p191 = por %p189, %p190
      %p192 = scmp.ne.s32.totalorder %s181, %s182
      %p193 = scmp.eq.s32.totalorder %s31, 0
      %p194 = por %p192, %p193
      %p195 = scmp.ne.s32.totalorder %s181, %s182
      %p196 = scmp.eq.s32.totalorder %s32, 1
      %p197 = por %p195, %p196
      %p199 = scmp.ne.s32.totalorder %s182, %s198
      %p200 = scmp.eq.s32.totalorder %s32, 0
      %p201 = por %p199, %p200
      %s202 = ssub.s32 %s34, %s41
      %p203 = scmp.eq.s32.totalorder %s202, 0
      %s205 = sadd.s32 %s204, 1
      %s206 = scalar_select %p203, %s204, %s205
      %p209 = pneg %p203
      %p210 = scmp.eq.s32.totalorder %s26, 1
      %p211 = por %p209, %p210
      %p212 = scmp.ne.s32.totalorder %s204, %s207
      %p213 = scmp.eq.s32.totalorder %s26, 0
      %p214 = por %p212, %p213
      %p215 = scmp.ne.s32.totalorder %s204, %s207
      %p216 = scmp.eq.s32.totalorder %s31, 1
      %p217 = por %p215, %p216
      %p218 = scmp.ne.s32.totalorder %s207, %s208
      %p219 = scmp.eq.s32.totalorder %s31, 0
      %p220 = por %p218, %p219
      %p221 = scmp.ne.s32.totalorder %s207, %s208
      %p222 = scmp.eq.s32.totalorder %s32, 1
      %p223 = por %p221, %p222
      %p225 = scmp.ne.s32.totalorder %s208, %s224
      %p226 = scmp.eq.s32.totalorder %s32, 0
      %p227 = por %p225, %p226
      %s228 = ssub.s32 %s34, %s41
      %p229 = scmp.eq.s32.totalorder %s228, 0
      %s231 = sadd.s32 %s230, 1
      %s232 = scalar_select %p229, %s230, %s231
      %p235 = pneg %p229
      %p236 = scmp.eq.s32.totalorder %s26, 1
      %p237 = por %p235, %p236
      %p238 = scmp.ne.s32.totalorder %s230, %s233
      %p239 = scmp.eq.s32.totalorder %s26, 0
      %p240 = por %p238, %p239
      %p241 = scmp.ne.s32.totalorder %s230, %s233
      %p242 = scmp.eq.s32.totalorder %s31, 1
      %p243 = por %p241, %p242
      %p244 = scmp.ne.s32.totalorder %s233, %s234
      %p245 = scmp.eq.s32.totalorder %s31, 0
      %p246 = por %p244, %p245
      %p247 = scmp.ne.s32.totalorder %s233, %s234
      %p248 = scmp.eq.s32.totalorder %s32, 1
      %p249 = por %p247, %p248
      %p251 = scmp.ne.s32.totalorder %s234, %s250
      %p252 = scmp.eq.s32.totalorder %s32, 0
      %p253 = por %p251, %p252
      %s254 = ssub.s32 %s34, %s41
      %p255 = scmp.eq.s32.totalorder %s254, 0
      %s257 = sadd.s32 %s256, 1
      %s258 = scalar_select %p255, %s256, %s257
      %p261 = pneg %p255
      %p262 = scmp.eq.s32.totalorder %s26, 1
      %p263 = por %p261, %p262
      %p264 = scmp.ne.s32.totalorder %s256, %s259
      %p265 = scmp.eq.s32.totalorder %s26, 0
      %p266 = por %p264, %p265
      %p267 = scmp.ne.s32.totalorder %s256, %s259
      %p268 = scmp.eq.s32.totalorder %s31, 1
      %p269 = por %p267, %p268
      %p270 = scmp.ne.s32.totalorder %s259, %s260
      %p271 = scmp.eq.s32.totalorder %s31, 0
      %p272 = por %p270, %p271
      %p273 = scmp.ne.s32.totalorder %s259, %s260
      %p274 = scmp.eq.s32.totalorder %s32, 1
      %p275 = por %p273, %p274
      %p277 = scmp.ne.s32.totalorder %s260, %s276
      %p278 = scmp.eq.s32.totalorder %s32, 0
      %p279 = por %p277, %p278
      %s280 = ssub.s32 %s34, %s41
      %p281 = scmp.eq.s32.totalorder %s280, 0
      %s283 = sadd.s32 %s282, 1
      %s284 = scalar_select %p281, %s282, %s283
      %p287 = pneg %p281
      %p288 = scmp.eq.s32.totalorder %s26, 1
      %p289 = por %p287, %p288
      %p290 = scmp.ne.s32.totalorder %s282, %s285
      %p291 = scmp.eq.s32.totalorder %s26, 0
      %p292 = por %p290, %p291
      %p293 = scmp.ne.s32.totalorder %s282, %s285
      %p294 = scmp.eq.s32.totalorder %s31, 1
      %p295 = por %p293, %p294
      %p296 = scmp.ne.s32.totalorder %s285, %s286
      %p297 = scmp.eq.s32.totalorder %s31, 0
      %p298 = por %p296, %p297
      %p299 = scmp.ne.s32.totalorder %s285, %s286
      %p300 = scmp.eq.s32.totalorder %s32, 1
      %p301 = por %p299, %p300
      %p303 = scmp.ne.s32.totalorder %s286, %s302
      %p304 = scmp.eq.s32.totalorder %s32, 0
      %p305 = por %p303, %p304
      %s306 = ssub.s32 %s34, %s41
      %p307 = scmp.eq.s32.totalorder %s306, 0
      %s309 = sadd.s32 %s308, 1
      %s310 = scalar_select %p307, %s308, %s309
      %p313 = pneg %p307
      %p314 = scmp.eq.s32.totalorder %s26, 1
      %p315 = por %p313, %p314
      %p316 = scmp.ne.s32.totalorder %s308, %s311
      %p317 = scmp.eq.s32.totalorder %s26, 0
      %p318 = por %p316, %p317
      %p319 = scmp.ne.s32.totalorder %s308, %s311
      %p320 = scmp.eq.s32.totalorder %s31, 1
      %p321 = por %p319, %p320
      %p322 = scmp.ne.s32.totalorder %s311, %s312
      %p323 = scmp.eq.s32.totalorder %s31, 0
      %p324 = por %p322, %p323
      %p325 = scmp.ne.s32.totalorder %s311, %s312
      %p326 = scmp.eq.s32.totalorder %s32, 1
      %p327 = por %p325, %p326
      %p329 = scmp.ne.s32.totalorder %s312, %s328
      %p330 = scmp.eq.s32.totalorder %s32, 0
      %p331 = por %p329, %p330
      %s332 = ssub.s32 %s34, %s41
      %p333 = scmp.eq.s32.totalorder %s332, 0
      %s335 = sadd.s32 %s334, 1
      %s336 = scalar_select %p333, %s334, %s335
      %p339 = pneg %p333
      %p340 = scmp.eq.s32.totalorder %s26, 1
      %p341 = por %p339, %p340
      %p342 = scmp.ne.s32.totalorder %s334, %s337
      %p343 = scmp.eq.s32.totalorder %s26, 0
      %p344 = por %p342, %p343
      %p345 = scmp.ne.s32.totalorder %s334, %s337
      %p346 = scmp.eq.s32.totalorder %s31, 1
      %p347 = por %p345, %p346
      %p348 = scmp.ne.s32.totalorder %s337, %s338
      %p349 = scmp.eq.s32.totalorder %s31, 0
      %p350 = por %p348, %p349
      %p351 = scmp.ne.s32.totalorder %s337, %s338
      %p352 = scmp.eq.s32.totalorder %s32, 1
      %p353 = por %p351, %p352
      %p355 = scmp.ne.s32.totalorder %s338, %s354
      %p356 = scmp.eq.s32.totalorder %s32, 0
      %p357 = por %p355, %p356
      %s358 = ssub.s32 %s34, %s41
      %p359 = scmp.eq.s32.totalorder %s358, 0
      %s361 = sadd.s32 %s360, 1
      %s362 = scalar_select %p359, %s360, %s361
      %p365 = pneg %p359
      %p366 = scmp.eq.s32.totalorder %s26, 1
      %p367 = por %p365, %p366
      %p368 = scmp.ne.s32.totalorder %s360, %s363
      %p369 = scmp.eq.s32.totalorder %s26, 0
      %p370 = por %p368, %p369
      %p371 = scmp.ne.s32.totalorder %s360, %s363
      %p372 = scmp.eq.s32.totalorder %s31, 1
      %p373 = por %p371, %p372
      %p374 = scmp.ne.s32.totalorder %s363, %s364
      %p375 = scmp.eq.s32.totalorder %s31, 0
      %p376 = por %p374, %p375
      %p377 = scmp.ne.s32.totalorder %s363, %s364
      %p378 = scmp.eq.s32.totalorder %s32, 1
      %p379 = por %p377, %p378
      %p381 = scmp.ne.s32.totalorder %s364, %s380
      %p382 = scmp.eq.s32.totalorder %s32, 0
      %p383 = por %p381, %p382
      %s384 = ssub.s32 %s34, %s41
      %p385 = scmp.eq.s32.totalorder %s384, 0
      %s387 = sadd.s32 %s386, 1
      %s388 = scalar_select %p385, %s386, %s387
      %p391 = pneg %p385
      %p392 = scmp.eq.s32.totalorder %s26, 1
      %p393 = por %p391, %p392
      %p394 = scmp.ne.s32.totalorder %s386, %s389
      %p395 = scmp.eq.s32.totalorder %s26, 0
      %p396 = por %p394, %p395
      %p397 = scmp.ne.s32.totalorder %s386, %s389
      %p398 = scmp.eq.s32.totalorder %s31, 1
      %p399 = por %p397, %p398
      %p400 = scmp.ne.s32.totalorder %s389, %s390
      %p401 = scmp.eq.s32.totalorder %s31, 0
      %p402 = por %p400, %p401
      %p403 = scmp.ne.s32.totalorder %s389, %s390
      %p404 = scmp.eq.s32.totalorder %s32, 1
      %p405 = por %p403, %p404
      %p407 = scmp.ne.s32.totalorder %s390, %s406
      %p408 = scmp.eq.s32.totalorder %s32, 0
      %p409 = por %p407, %p408
      %s411 = sadd.s32 %s410, 1
      %p414 = scmp.eq.s32.totalorder %s26, 1
      %p415 = scmp.ne.s32.totalorder %s410, %s412
      %p416 = scmp.eq.s32.totalorder %s26, 0
      %p417 = por %p415, %p416
      %p418 = scmp.ne.s32.totalorder %s410, %s412
      %p419 = scmp.eq.s32.totalorder %s31, 1
      %p420 = por %p418, %p419
      %p421 = scmp.ne.s32.totalorder %s412, %s413
      %p422 = scmp.eq.s32.totalorder %s31, 0
      %p423 = por %p421, %p422
      %p424 = scmp.ne.s32.totalorder %s412, %s413
      %p425 = scmp.eq.s32.totalorder %s32, 1
      %p426 = por %p424, %p425
      %p428 = scmp.ne.s32.totalorder %s413, %s427
      %p429 = scmp.eq.s32.totalorder %s32, 0
      %p430 = por %p428, %p429
      %s432 = sadd.s32 %s431, 1
      %p435 = scmp.eq.s32.totalorder %s26, 1
      %p436 = scmp.ne.s32.totalorder %s431, %s433
      %p437 = scmp.eq.s32.totalorder %s26, 0
      %p438 = por %p436, %p437
      %p439 = scmp.ne.s32.totalorder %s431, %s433
      %p440 = scmp.eq.s32.totalorder %s31, 1
      %p441 = por %p439, %p440
      %p442 = scmp.ne.s32.totalorder %s433, %s434
      %p443 = scmp.eq.s32.totalorder %s31, 0
      %p444 = por %p442, %p443
      %p445 = scmp.ne.s32.totalorder %s433, %s434
      %p446 = scmp.eq.s32.totalorder %s32, 1
      %p447 = por %p445, %p446
      %p449 = scmp.ne.s32.totalorder %s434, %s448
      %p450 = scmp.eq.s32.totalorder %s32, 0
      %p451 = por %p449, %p450
      %s452 = ssub.s32 %s33, %s45
      %p453 = scmp.eq.s32.totalorder %s452, 0
      %s455 = sadd.s32 %s454, 1
      %s456 = scalar_select %p453, %s454, %s455
      %p459 = pneg %p453
      %p460 = scmp.eq.s32.totalorder %s26, 1
      %p461 = por %p459, %p460
      %p462 = scmp.ne.s32.totalorder %s454, %s457
      %p463 = scmp.eq.s32.totalorder %s26, 0
      %p464 = por %p462, %p463
      %p465 = scmp.ne.s32.totalorder %s454, %s457
      %p466 = scmp.eq.s32.totalorder %s31, 1
      %p467 = por %p465, %p466
      %p468 = scmp.ne.s32.totalorder %s457, %s458
      %p469 = scmp.eq.s32.totalorder %s31, 0
      %p470 = por %p468, %p469
      %p471 = scmp.ne.s32.totalorder %s457, %s458
      %p472 = scmp.eq.s32.totalorder %s32, 1
      %p473 = por %p471, %p472
      %p475 = scmp.ne.s32.totalorder %s458, %s474
      %p476 = scmp.eq.s32.totalorder %s32, 0
      %p477 = por %p475, %p476
      %p478 = scmp.le.s32.totalorder 1, %s26
      %p479 = scmp.lt.s32.totalorder %s26, 3
      %p480 = pnand %p478, %p479
      %p481 = pneg %p480
      // Predicated region
      $region9: #{tpu_custom_call.1} parent=5 // pred_check
        _
      $region10: #{tpu_custom_call.1} parent=5 // pred_check_branch
        %483 = sbr.rel (%p480) target = $region12
      $region11: #{tpu_custom_call.1} parent=5 // pred_region
        %s484 = ssub.s32 %s26, 1
        // Predicated region
        $region13: #{tpu_custom_call.1} parent=11 // pred_check
          %p485 = pneg %p64
        $region14: #{tpu_custom_call.1} parent=11 // pred_check_branch
          %487 = sbr.rel (%p485) target = $region16
        $region15: #{tpu_custom_call.1} parent=11 // pred_region
          %s488 = smul.u32 2, %s35
          %s490 = ssub.s32 256, 256
          %491 = vsyncadd [#allocation5], %s490
          %s492 = smul.addr %s488, 128
          %s493 = scalar_lea.hbm %s0, %s492
          %s494 = sshll.u32 [#allocation4], 4
          %s495 = int_to_ptr.vmem [resolvable:$true] %s494
          %500 = dma.hbm_to_vmem [thread:$0]  %s493, 256, %s495, [#allocation5], 128, 128, 8
        $region16: #{tpu_custom_call.1} parent=11 // pred_fallthru
          _
        // Predicated region
        $region17: #{tpu_custom_call.1} parent=11 // pred_check
          %p501 = pneg %p90
        $region18: #{tpu_custom_call.1} parent=11 // pred_check_branch
          %503 = sbr.rel (%p501) target = $region20
        $region19: #{tpu_custom_call.1} parent=11 // pred_region
          %s504 = smul.u32 2, %s35
          %s506 = ssub.s32 128, 128
          %507 = vsyncadd [#allocation8], %s506
          %s508 = smul.addr %s504, 64
          %s509 = scalar_lea.hbm %s1, %s508
          %s510 = sshll.u32 [#allocation7], 4
          %s511 = int_to_ptr.vmem [resolvable:$true] %s510
          %516 = dma.hbm_to_vmem [thread:$0]  %s509, 128, %s511, [#allocation8], 64, 64, 4
        $region20: #{tpu_custom_call.1} parent=11 // pred_fallthru
          _
        // Predicated region
        $region21: #{tpu_custom_call.1} parent=11 // pred_check
          %p517 = pneg %p116
        $region22: #{tpu_custom_call.1} parent=11 // pred_check_branch
          %519 = sbr.rel (%p517) target = $region24
        $region23: #{tpu_custom_call.1} parent=11 // pred_region
          %s520 = smul.u32 2, %s35
          %s522 = ssub.s32 32, 32
          %523 = vsyncadd [#allocation8], %s522
          %s524 = smul.addr %s520, 16
          %s525 = scalar_lea.hbm %s2, %s524
          %s526 = sshll.u32 [#allocation9], 4
          %s527 = int_to_ptr.vmem [resolvable:$true] %s526
          %532 = dma.hbm_to_vmem [thread:$0]  %s525, 32, %s527, [#allocation8], 16, 16, 1
        $region24: #{tpu_custom_call.1} parent=11 // pred_fallthru
          _
        // Predicated region
        $region25: #{tpu_custom_call.1} parent=11 // pred_check
          %p533 = pneg %p142
        $region26: #{tpu_custom_call.1} parent=11 // pred_check_branch
          %535 = sbr.rel (%p533) target = $region28
        $region27: #{tpu_custom_call.1} parent=11 // pred_region
          %s536 = smul.u32 2, %s35
          %s538 = ssub.s32 256, 256
          %539 = vsyncadd [#allocation11], %s538
          %s540 = smul.addr %s536, 128
          %s541 = scalar_lea.hbm %s3, %s540
          %s542 = sshll.u32 [#allocation10], 4
          %s543 = int_to_ptr.vmem [resolvable:$true] %s542
          %548 = dma.hbm_to_vmem [thread:$0]  %s541, 256, %s543, [#allocation11], 128, 128, 8
        $region28: #{tpu_custom_call.1} parent=11 // pred_fallthru
          _
        // Predicated region
        $region29: #{tpu_custom_call.1} parent=11 // pred_check
          %p549 = pneg %p423
        $region30: #{tpu_custom_call.1} parent=11 // pred_check_branch
          %551 = sbr.rel (%p549) target = $region32
        $region31: #{tpu_custom_call.1} parent=11 // pred_region
          _
        $region32: #{tpu_custom_call.1} parent=11 // pred_fallthru
          _
        // Predicated region
        $region33: #{tpu_custom_call.1} parent=11 // pred_check
          %p552 = pneg %p444
        $region34: #{tpu_custom_call.1} parent=11 // pred_check_branch
          %554 = sbr.rel (%p552) target = $region36
        $region35: #{tpu_custom_call.1} parent=11 // pred_region
          _
        $region36: #{tpu_custom_call.1} parent=11 // pred_fallthru
          _
      $region12: #{tpu_custom_call.1} parent=5 // pred_fallthru
        _
      %p555 = scmp.lt.s32.totalorder %s26, 2
      // Predicated region
      $region37: #{tpu_custom_call.1} parent=5 // pred_check
        %p556 = pneg %p555
      $region38: #{tpu_custom_call.1} parent=5 // pred_check_branch
        %558 = sbr.rel (%p556) target = $region40
      $region39: #{tpu_custom_call.1} parent=5 // pred_region
        // Predicated region
        $region41: #{tpu_custom_call.1} parent=39 // pred_check
          %p559 = pneg %p162
        $region42: #{tpu_custom_call.1} parent=39 // pred_check_branch
          %561 = sbr.rel (%p559) target = $region44
        $region43: #{tpu_custom_call.1} parent=39 // pred_region
          %s562 = sand.u32 %s26, 1
          %s563 = scalar_lea.sflag [#allocation5], %s562
          %s564 = sand.u32 %s152, 1
          %s565 = smul.addr %s564, 96
          %s566 = scalar_lea.vmem [#allocation12], %s565
          %s568 = ssub.s32 1536, 1536
          %569 = vsyncadd %s563, %s568
          %s570 = smul.addr %s34, 24
          %s571 = smul.addr %s570, 64
          %s572 = scalar_lea.hbm %s4, %s571
          %s573 = sshll.u32 %s566, 4
          %s574 = int_to_ptr.vmem [resolvable:$true] %s573
          %579 = dma.hbm_to_vmem [thread:$0]  %s572, 1536, %s574, %s563, 64, 64, 4
        $region44: #{tpu_custom_call.1} parent=39 // pred_fallthru
          _
        // Predicated region
        $region45: #{tpu_custom_call.1} parent=39 // pred_check
          %p580 = pneg %p188
        $region46: #{tpu_custom_call.1} parent=39 // pred_check_branch
          %582 = sbr.rel (%p580) target = $region48
        $region47: #{tpu_custom_call.1} parent=39 // pred_region
          %s583 = sand.u32 %s26, 1
          %s584 = scalar_lea.sflag [#allocation5], %s583
          %s585 = sand.u32 %s178, 1
          %s586 = smul.addr %s585, 6
          %s587 = scalar_lea.vmem [#allocation13], %s586
          %s589 = ssub.s32 96, 96
          %590 = vsyncadd %s584, %s589
          %s591 = smul.addr %s34, 6
          %s592 = smul.addr %s591, 16
          %s593 = scalar_lea.hbm %s5, %s592
          %s594 = sshll.u32 %s587, 4
          %s595 = int_to_ptr.vmem [resolvable:$true] %s594
          %600 = dma.hbm_to_vmem [thread:$0]  %s593, 96, %s595, %s584, 16, 16, 1
        $region48: #{tpu_custom_call.1} parent=39 // pred_fallthru
          _
        // Predicated region
        $region49: #{tpu_custom_call.1} parent=39 // pred_check
          %p601 = pneg %p214
        $region50: #{tpu_custom_call.1} parent=39 // pred_check_branch
          %603 = sbr.rel (%p601) target = $region52
        $region51: #{tpu_custom_call.1} parent=39 // pred_region
          %p604 = scmp.lt.s32.totalorder %s34, 1
          %s605 = scalar_select %p604, %s34, 1
          %s606 = smul.addr %s605, 8
          %s607 = smul.addr %s606, 4
          %s608 = scalar_lea.vmem %s6, %s607
        $region52: #{tpu_custom_call.1} parent=39 // pred_fallthru
          _
        // Predicated region
        $region53: #{tpu_custom_call.1} parent=39 // pred_check
          %p609 = pneg %p240
        $region54: #{tpu_custom_call.1} parent=39 // pred_check_branch
          %611 = sbr.rel (%p609) target = $region56
        $region55: #{tpu_custom_call.1} parent=39 // pred_region
          %s612 = sand.u32 %s26, 1
          %s613 = scalar_lea.sflag [#allocation5], %s612
          %s614 = sand.u32 %s230, 1
          %s615 = smul.addr %s614, 2
          %s616 = scalar_lea.vmem [#allocation14], %s615
          %s618 = ssub.s32 32, 32
          %619 = vsyncadd %s613, %s618
          %s620 = smul.addr %s34, 2
          %s621 = smul.addr %s620, 16
          %s622 = scalar_lea.hbm %s7, %s621
          %s623 = sshll.u32 %s616, 4
          %s624 = int_to_ptr.vmem [resolvable:$true] %s623
          %629 = dma.hbm_to_vmem [thread:$0]  %s622, 32, %s624, %s613, 16, 16, 1
        $region56: #{tpu_custom_call.1} parent=39 // pred_fallthru
          _
        // Predicated region
        $region57: #{tpu_custom_call.1} parent=39 // pred_check
          %p630 = pneg %p266
        $region58: #{tpu_custom_call.1} parent=39 // pred_check_branch
          %632 = sbr.rel (%p630) target = $region60
        $region59: #{tpu_custom_call.1} parent=39 // pred_region
          %p633 = scmp.lt.s32.totalorder %s34, 1
          %s634 = scalar_select %p633, %s34, 1
          %s635 = smul.addr %s634, 4
          %s636 = smul.addr %s635, 4
          %s637 = scalar_lea.vmem %s8, %s636
        $region60: #{tpu_custom_call.1} parent=39 // pred_fallthru
          _
        // Predicated region
        $region61: #{tpu_custom_call.1} parent=39 // pred_check
          %p638 = pneg %p292
        $region62: #{tpu_custom_call.1} parent=39 // pred_check_branch
          %640 = sbr.rel (%p638) target = $region64
        $region63: #{tpu_custom_call.1} parent=39 // pred_region
          %s641 = sand.u32 %s26, 1
          %s642 = scalar_lea.sflag [#allocation5], %s641
          %s643 = sand.u32 %s282, 1
          %s644 = scalar_lea.vmem [#allocation15], %s643
          %s646 = ssub.s32 16, 16
          %647 = vsyncadd %s642, %s646
          %s648 = smul.addr %s34, 16
          %s649 = scalar_lea.hbm %s9, %s648
          %s651 = sshll.u32 %s644, 4
          %s652 = int_to_ptr.vmem [resolvable:$true] %s651
          %654 = dma.hbm_to_vmem [thread:$0]  %s649, 16, %s652, %s642
        $region64: #{tpu_custom_call.1} parent=39 // pred_fallthru
          _
        // Predicated region
        $region65: #{tpu_custom_call.1} parent=39 // pred_check
          %p655 = pneg %p318
        $region66: #{tpu_custom_call.1} parent=39 // pred_check_branch
          %657 = sbr.rel (%p655) target = $region68
        $region67: #{tpu_custom_call.1} parent=39 // pred_region
          %p658 = scmp.lt.s32.totalorder %s34, 1
          %s659 = scalar_select %p658, %s34, 1
          %s660 = smul.addr %s659, 8
          %s661 = smul.addr %s660, 4
          %s662 = scalar_lea.vmem %s10, %s661
        $region68: #{tpu_custom_call.1} parent=39 // pred_fallthru
          _
        // Predicated region
        $region69: #{tpu_custom_call.1} parent=39 // pred_check
          %p663 = pneg %p344
        $region70: #{tpu_custom_call.1} parent=39 // pred_check_branch
          %665 = sbr.rel (%p663) target = $region72
        $region71: #{tpu_custom_call.1} parent=39 // pred_region
          %s666 = sand.u32 %s26, 1
          %s667 = scalar_lea.sflag [#allocation5], %s666
          %s668 = sand.u32 %s334, 1
          %s669 = scalar_lea.vmem [#allocation16], %s668
          %s671 = ssub.s32 16, 16
          %672 = vsyncadd %s667, %s671
          %s673 = smul.addr %s34, 16
          %s674 = scalar_lea.hbm %s11, %s673
          %s676 = sshll.u32 %s669, 4
          %s677 = int_to_ptr.vmem [resolvable:$true] %s676
          %679 = dma.hbm_to_vmem [thread:$0]  %s674, 16, %s677, %s667
        $region72: #{tpu_custom_call.1} parent=39 // pred_fallthru
          _
        // Predicated region
        $region73: #{tpu_custom_call.1} parent=39 // pred_check
          %p680 = pneg %p370
        $region74: #{tpu_custom_call.1} parent=39 // pred_check_branch
          %682 = sbr.rel (%p680) target = $region76
        $region75: #{tpu_custom_call.1} parent=39 // pred_region
          %p683 = scmp.lt.s32.totalorder %s34, 1
          %s684 = scalar_select %p683, %s34, 1
          %s685 = smul.addr %s684, 3
          %s686 = scalar_lea.vmem %s12, %s685
        $region76: #{tpu_custom_call.1} parent=39 // pred_fallthru
          _
        // Predicated region
        $region77: #{tpu_custom_call.1} parent=39 // pred_check
          %p687 = pneg %p396
        $region78: #{tpu_custom_call.1} parent=39 // pred_check_branch
          %689 = sbr.rel (%p687) target = $region80
        $region79: #{tpu_custom_call.1} parent=39 // pred_region
          %p690 = scmp.lt.s32.totalorder %s34, 1
          %s691 = scalar_select %p690, %s34, 1
          %s692 = smul.addr %s691, 3
          %s693 = scalar_lea.vmem %s13, %s692
        $region80: #{tpu_custom_call.1} parent=39 // pred_fallthru
          _
      $region40: #{tpu_custom_call.1} parent=5 // pred_fallthru
        _
      %p694 = scmp.le.s32.totalorder 1, %s26
      %p695 = scmp.lt.s32.totalorder %s26, 3
      %p696 = pnand %p694, %p695
      %p697 = pneg %p696
      // Predicated region
      $region81: #{tpu_custom_call.1} parent=5 // pred_check
        _
      $region82: #{tpu_custom_call.1} parent=5 // pred_check_branch
        %699 = sbr.rel (%p696) target = $region84
      $region83: #{tpu_custom_call.1} parent=5 // pred_region
        %s700 = ssub.s32 %s26, 1
        // Predicated region
        $region85: #{tpu_custom_call.1} parent=83 // pred_check
          %p701 = pneg %p64
        $region86: #{tpu_custom_call.1} parent=83 // pred_check_branch
          %703 = sbr.rel (%p701) target = $region88
        $region87: #{tpu_custom_call.1} parent=83 // pred_region
          %704 = dma.done [#allocation5], 256
        $region88: #{tpu_custom_call.1} parent=83 // pred_fallthru
          _
        // Predicated region
        $region89: #{tpu_custom_call.1} parent=83 // pred_check
          %p705 = pneg %p90
        $region90: #{tpu_custom_call.1} parent=83 // pred_check_branch
          %707 = sbr.rel (%p705) target = $region92
        $region91: #{tpu_custom_call.1} parent=83 // pred_region
          %708 = dma.done [#allocation8], 128
        $region92: #{tpu_custom_call.1} parent=83 // pred_fallthru
          _
        // Predicated region
        $region93: #{tpu_custom_call.1} parent=83 // pred_check
          %p709 = pneg %p116
        $region94: #{tpu_custom_call.1} parent=83 // pred_check_branch
          %711 = sbr.rel (%p709) target = $region96
        $region95: #{tpu_custom_call.1} parent=83 // pred_region
          %712 = dma.done [#allocation8], 32
        $region96: #{tpu_custom_call.1} parent=83 // pred_fallthru
          _
        // Predicated region
        $region97: #{tpu_custom_call.1} parent=83 // pred_check
          %p713 = pneg %p142
        $region98: #{tpu_custom_call.1} parent=83 // pred_check_branch
          %715 = sbr.rel (%p713) target = $region100
        $region99: #{tpu_custom_call.1} parent=83 // pred_region
          %716 = dma.done [#allocation11], 256
        $region100: #{tpu_custom_call.1} parent=83 // pred_fallthru
          _
        %s717 = sand.u32 %s31, 1
        %s718 = scalar_lea.sflag [#allocation5], %s717
        %s719 = sand.u32 %s155, 1
        %s720 = smul.addr %s719, 96
        %s721 = scalar_lea.vmem [#allocation12], %s720
        // Predicated region
        $region101: #{tpu_custom_call.1} parent=83 // pred_check
          %p722 = pneg %p168
        $region102: #{tpu_custom_call.1} parent=83 // pred_check_branch
          %724 = sbr.rel (%p722) target = $region104
        $region103: #{tpu_custom_call.1} parent=83 // pred_region
          %725 = dma.done %s718, 1536
        $region104: #{tpu_custom_call.1} parent=83 // pred_fallthru
          _
        %s726 = sand.u32 %s31, 1
        %s727 = scalar_lea.sflag [#allocation5], %s726
        %s728 = sand.u32 %s181, 1
        %s729 = smul.addr %s728, 6
        %s730 = scalar_lea.vmem [#allocation13], %s729
        // Predicated region
        $region105: #{tpu_custom_call.1} parent=83 // pred_check
          %p731 = pneg %p194
        $region106: #{tpu_custom_call.1} parent=83 // pred_check_branch
          %733 = sbr.rel (%p731) target = $region108
        $region107: #{tpu_custom_call.1} parent=83 // pred_region
          %734 = dma.done %s727, 96
        $region108: #{tpu_custom_call.1} parent=83 // pred_fallthru
          _
        %s735 = sand.u32 %s31, 1
        %s736 = scalar_lea.sflag [#allocation5], %s735
        %s737 = sand.u32 %s233, 1
        %s738 = smul.addr %s737, 2
        %s739 = scalar_lea.vmem [#allocation14], %s738
        // Predicated region
        $region109: #{tpu_custom_call.1} parent=83 // pred_check
          %p740 = pneg %p246
        $region110: #{tpu_custom_call.1} parent=83 // pred_check_branch
          %742 = sbr.rel (%p740) target = $region112
        $region111: #{tpu_custom_call.1} parent=83 // pred_region
          %743 = dma.done %s736, 32
        $region112: #{tpu_custom_call.1} parent=83 // pred_fallthru
          _
        %s744 = sand.u32 %s31, 1
        %s745 = scalar_lea.sflag [#allocation5], %s744
        %s746 = sand.u32 %s285, 1
        %s747 = scalar_lea.vmem [#allocation15], %s746
        // Predicated region
        $region113: #{tpu_custom_call.1} parent=83 // pred_check
          %p748 = pneg %p298
        $region114: #{tpu_custom_call.1} parent=83 // pred_check_branch
          %750 = sbr.rel (%p748) target = $region116
        $region115: #{tpu_custom_call.1} parent=83 // pred_region
          %751 = dma.done %s745, 16
        $region116: #{tpu_custom_call.1} parent=83 // pred_fallthru
          _
        %s752 = sand.u32 %s31, 1
        %s753 = scalar_lea.sflag [#allocation5], %s752
        %s754 = sand.u32 %s337, 1
        %s755 = scalar_lea.vmem [#allocation16], %s754
        // Predicated region
        $region117: #{tpu_custom_call.1} parent=83 // pred_check
          %p756 = pneg %p350
        $region118: #{tpu_custom_call.1} parent=83 // pred_check_branch
          %758 = sbr.rel (%p756) target = $region120
        $region119: #{tpu_custom_call.1} parent=83 // pred_region
          %759 = dma.done %s753, 16
        $region120: #{tpu_custom_call.1} parent=83 // pred_fallthru
          _
        %p760 = pneg %p64
        %p761 = pneg %p61
        %p762 = pneg %p90
        %p763 = pneg %p87
        %p764 = pneg %p116
        %p765 = pneg %p113
        %p766 = pneg %p142
        %p767 = pneg %p139
        %s768 = sand.u32 %s31, 1
        %s769 = scalar_lea.sflag [#allocation5], %s768
        %s770 = sand.u32 %s155, 1
        %s771 = smul.addr %s770, 96
        %s772 = scalar_lea.vmem [#allocation12], %s771
        %p773 = pneg %p168
        %p774 = pneg %p165
        %s775 = sand.u32 %s31, 1
        %s776 = scalar_lea.sflag [#allocation5], %s775
        %s777 = sand.u32 %s181, 1
        %s778 = smul.addr %s777, 6
        %s779 = scalar_lea.vmem [#allocation13], %s778
        %p780 = pneg %p194
        %p781 = pneg %p191
        %p782 = scmp.lt.s32.totalorder %s36, 1
        %s783 = scalar_select %p782, %s36, 1
        %s784 = smul.addr %s783, 8
        %s785 = smul.addr %s784, 4
        %s786 = scalar_lea.vmem %s6, %s785
        %p787 = pneg %p220
        %p788 = pneg %p217
        %s789 = sand.u32 %s31, 1
        %s790 = scalar_lea.sflag [#allocation5], %s789
        %s791 = sand.u32 %s233, 1
        %s792 = smul.addr %s791, 2
        %s793 = scalar_lea.vmem [#allocation14], %s792
        %p794 = pneg %p246
        %p795 = pneg %p243
        %p796 = scmp.lt.s32.totalorder %s36, 1
        %s797 = scalar_select %p796, %s36, 1
        %s798 = smul.addr %s797, 4
        %s799 = smul.addr %s798, 4
        %s800 = scalar_lea.vmem %s8, %s799
        %p801 = pneg %p272
        %p802 = pneg %p269
        %s803 = sand.u32 %s31, 1
        %s804 = scalar_lea.sflag [#allocation5], %s803
        %s805 = sand.u32 %s285, 1
        %s806 = scalar_lea.vmem [#allocation15], %s805
        %p807 = pneg %p298
        %p808 = pneg %p295
        %p809 = scmp.lt.s32.totalorder %s36, 1
        %s810 = scalar_select %p809, %s36, 1
        %s811 = smul.addr %s810, 8
        %s812 = smul.addr %s811, 4
        %s813 = scalar_lea.vmem %s10, %s812
        %p814 = pneg %p324
        %p815 = pneg %p321
        %s816 = sand.u32 %s31, 1
        %s817 = scalar_lea.sflag [#allocation5], %s816
        %s818 = sand.u32 %s337, 1
        %s819 = scalar_lea.vmem [#allocation16], %s818
        %p820 = pneg %p350
        %p821 = pneg %p347
        %p822 = scmp.lt.s32.totalorder %s36, 1
        %s823 = scalar_select %p822, %s36, 1
        %s824 = smul.addr %s823, 3
        %s825 = scalar_lea.vmem %s12, %s824
        %p826 = pneg %p376
        %p827 = pneg %p373
        %p828 = scmp.lt.s32.totalorder %s36, 1
        %s829 = scalar_select %p828, %s36, 1
        %s830 = smul.addr %s829, 3
        %s831 = scalar_lea.vmem %s13, %s830
        %p832 = pneg %p402
        %p833 = pneg %p399
        %p834 = pneg %p423
        %p835 = pneg %p420
        %p836 = pneg %p444
        %p837 = pneg %p441
        %p838 = pneg %p470
        %p839 = pneg %p467
        %s840 = smul.u32 2, %s35
        %s841 = smul.u32 2, %s35
        %s842 = smul.u32 2, %s35
        %s843 = smul.u32 2, %s35
        %p844 = scmp.lt.s32.totalorder %s36, 1
        %s845 = scalar_select %p844, %s36, 1
        %s846 = smul.addr %s845, 8
        %s847 = smul.addr %s846, 4
        %s848 = scalar_lea.vmem %s6, %s847
        %p849 = scmp.lt.s32.totalorder %s36, 1
        %s850 = scalar_select %p849, %s36, 1
        %s851 = smul.addr %s850, 4
        %s852 = smul.addr %s851, 4
        %s853 = scalar_lea.vmem %s8, %s852
        %p854 = scmp.lt.s32.totalorder %s36, 1
        %s855 = scalar_select %p854, %s36, 1
        %s856 = smul.addr %s855, 8
        %s857 = smul.addr %s856, 4
        %s858 = scalar_lea.vmem %s10, %s857
        %p859 = scmp.lt.s32.totalorder %s36, 1
        %s860 = scalar_select %p859, %s36, 1
        %s861 = smul.addr %s860, 3
        %s862 = scalar_lea.vmem %s12, %s861
        %p863 = scmp.lt.s32.totalorder %s36, 1
        %s864 = scalar_select %p863, %s36, 1
        %s865 = smul.addr %s864, 3
        %s866 = scalar_lea.vmem %s13, %s865
        %s867 = smul.u32 2, %s35
        %p869 = scmp.eq.s32.totalorder %s36, 1
        %p870 = scmp.eq.s32.totalorder %s36, 0
        // Predicated region
        $region121: #{tpu_custom_call.1} parent=83 // pred_check
          %p871 = pneg %p870
        $region122: #{tpu_custom_call.1} parent=83 // pred_check_branch
          %873 = sbr.rel (%p871) target = $region124
        $region123: #{tpu_custom_call.1} parent=83 // pred_region
          %v874 = vld [vmem:[#allocation4] sm:$0xff]
          %v875 = vld [vmem:[#allocation4 + $0x8] sm:$0xff]
          %vm876 = vcmask 261120
          %877 = vst.msk [vmem:[#allocation2] sm:$0xff] %vm876, %v874
          %878 = vst.msk [vmem:[#allocation2 + $0x8] sm:$0xff] %vm876, %v875
        $region124: #{tpu_custom_call.1} parent=83 // pred_fallthru
          _
        %v879 = vld [vmem:[#allocation2] sm:$0xff]
        %v880 = vpack.c.bf16 %v879, %v879
        %v881 = vld [vmem:[#allocation10] sm:$0xff]
        %v882 = vld [vmem:[#allocation9] sm:$0x1]
        %v883 = vld [vmem:[#allocation7] sm:$0xf]
        %v884 = vld [vmem:[%s721] sm:$0xf]
        %v885 = vld [vmem:[%s721 + $0x4] sm:$0xf]
        %v886 = vld [vmem:[%s721 + $0x8] sm:$0xf]
        %v887 = vld [vmem:[%s721 + $0xc] sm:$0xf]
        %v888 = vld [vmem:[%s730] sm:$0x1]
        %v890 = vlaneseq
        %v891 = vshrl.u32 %v890, 7
        %v892 = vsub.s32 0, %v891
        %v893 = vrot.slane %v888, %v892
        %v899 = vunpack.c.l.b16 %v884
        %v900 = vunpack.c.l.b16 %v885
        %v901 = vunpack.c.l.b16 %v886
        %v902 = vunpack.c.l.b16 %v887
        %v903 = vpack.c.b16 %v900, %v899
        %v904 = vpack.c.b16 %v902, %v901
        %vm907 = vcmask 261120
        %v909 = vsel %vm907, %v880, 0
        %911 = vmatprep.subr.bf16.mxu0 0
        %912 = vmatpush1.bf16.msra.mxu0 %v903
        %913 = vmatprep.subr.bf16.mxu0 0
        %914 = vmatpush1.bf16.msra.mxu0 %v904
        %915 = vmatprep.subr.bf16.mxu0 0
        %916 = vmatpush1.bf16.msra.mxu0 0
        %917 = vmatprep.subr.bf16.mxu0 0
        %918 = vmatpush1.bf16.msra.mxu0 0
        %919 = vmatprep.subr.bf16.mxu0 0
        %920 = vmatpush1.bf16.msra.mxu0 0
        %921 = vmatprep.subr.bf16.mxu0 0
        %922 = vmatpush1.bf16.msra.mxu0 0
        %923 = vmatprep.subr.bf16.mxu0 0
        %924 = vmatpush1.bf16.msra.mxu0 0
        %925 = vmatprep.subr.bf16.mxu0 0
        %926 = vmatpush1.bf16.msra.mxu0 0
        %927 = vmatprep.subr.bf16.mxu0 0
        %928 = vmatpush1.bf16.msra.mxu0 0
        %929 = vmatprep.subr.bf16.mxu0 0
        %930 = vmatpush1.bf16.msra.mxu0 0
        %931 = vmatprep.subr.bf16.mxu0 0
        %932 = vmatpush1.bf16.msra.mxu0 0
        %933 = vmatprep.subr.bf16.mxu0 0
        %934 = vmatpush1.bf16.msra.mxu0 0
        %935 = vmatprep.subr.bf16.mxu0 0
        %936 = vmatpush1.bf16.msra.mxu0 0
        %937 = vmatprep.subr.bf16.mxu0 0
        %938 = vmatpush1.bf16.msra.mxu0 0
        %939 = vmatprep.subr.bf16.mxu0 0
        %940 = vmatpush1.bf16.msra.mxu0 0
        %941 = vmatprep.subr.bf16.mxu0 0
        %942 = vmatpush1.bf16.msra.mxu0 0
        %943 = vmatprep.mubr.bf16.mxu0 0
        %944 = vmatmul.mubr.bf16.gmra.mrb[0].mxu0 %v909
        %v945 = vpop.f32.mrb[0].mxu0
        %v946 = vadd.f32 %v893, %v945
        %v947 = vpop.f32.mrb[0].mxu0
        %v948 = vpop.f32.mrb[0].mxu0
        %v949 = vpop.f32.mrb[0].mxu0
        %950 = vdwg.mxu0
        %s951 = scalar_lea.vmem %s721, 16 [#allocation12]
        %v952 = vld [vmem:[%s951] sm:$0xf]
        %v953 = vld [vmem:[%s951 + $0x4] sm:$0xf]
        %v954 = vld [vmem:[%s951 + $0x8] sm:$0xf]
        %v955 = vld [vmem:[%s951 + $0xc] sm:$0xf]
        %s956 = scalar_lea.vmem %s730, 1 [#allocation13]
        %v957 = vld [vmem:[%s956] sm:$0x1]
        %v959 = vlaneseq
        %v960 = vshrl.u32 %v959, 7
        %v961 = vsub.s32 0, %v960
        %v962 = vrot.slane %v957, %v961
        %v968 = vunpack.c.l.b16 %v952
        %v969 = vunpack.c.l.b16 %v953
        %v970 = vunpack.c.l.b16 %v954
        %v971 = vunpack.c.l.b16 %v955
        %v972 = vpack.c.b16 %v969, %v968
        %v973 = vpack.c.b16 %v971, %v970
        %976 = vmatprep.subr.bf16.mxu0 0
        %977 = vmatpush1.bf16.msra.mxu0 %v972
        %978 = vmatprep.subr.bf16.mxu0 0
        %979 = vmatpush1.bf16.msra.mxu0 %v973
        %980 = vmatprep.subr.bf16.mxu0 0
        %981 = vmatpush1.bf16.msra.mxu0 0
        %982 = vmatprep.subr.bf16.mxu0 0
        %983 = vmatpush1.bf16.msra.mxu0 0
        %984 = vmatprep.subr.bf16.mxu0 0
        %985 = vmatpush1.bf16.msra.mxu0 0
        %986 = vmatprep.subr.bf16.mxu0 0
        %987 = vmatpush1.bf16.msra.mxu0 0
        %988 = vmatprep.subr.bf16.mxu0 0
        %989 = vmatpush1.bf16.msra.mxu0 0
        %990 = vmatprep.subr.bf16.mxu0 0
        %991 = vmatpush1.bf16.msra.mxu0 0
        %992 = vmatprep.subr.bf16.mxu0 0
        %993 = vmatpush1.bf16.msra.mxu0 0
        %994 = vmatprep.subr.bf16.mxu0 0
        %995 = vmatpush1.bf16.msra.mxu0 0
        %996 = vmatprep.subr.bf16.mxu0 0
        %997 = vmatpush1.bf16.msra.mxu0 0
        %998 = vmatprep.subr.bf16.mxu0 0
        %999 = vmatpush1.bf16.msra.mxu0 0
        %1000 = vmatprep.subr.bf16.mxu0 0
        %1001 = vmatpush1.bf16.msra.mxu0 0
        %1002 = vmatprep.subr.bf16.mxu0 0
        %1003 = vmatpush1.bf16.msra.mxu0 0
        %1004 = vmatprep.subr.bf16.mxu0 0
        %1005 = vmatpush1.bf16.msra.mxu0 0
        %1006 = vmatprep.subr.bf16.mxu0 0
        %1007 = vmatpush1.bf16.msra.mxu0 0
        %1008 = vmatprep.mubr.bf16.mxu0 0
        %1009 = vmatmul.mubr.bf16.gmra.mrb[0].mxu0 %v909
        %v1010 = vpop.f32.mrb[0].mxu0
        %v1011 = vadd.f32 %v962, %v1010
        %v1012 = vpop.f32.mrb[0].mxu0
        %v1013 = vpop.f32.mrb[0].mxu0
        %v1014 = vpop.f32.mrb[0].mxu0
        %1015 = vdwg.mxu0
        %s1016 = scalar_lea.vmem %s721, 32 [#allocation12]
        %v1017 = vld [vmem:[%s1016] sm:$0xf]
        %v1018 = vld [vmem:[%s1016 + $0x4] sm:$0xf]
        %v1019 = vld [vmem:[%s1016 + $0x8] sm:$0xf]
        %v1020 = vld [vmem:[%s1016 + $0xc] sm:$0xf]
        %s1021 = scalar_lea.vmem %s730, 2 [#allocation13]
        %v1022 = vld [vmem:[%s1021] sm:$0x1]
        %v1024 = vlaneseq
        %v1025 = vshrl.u32 %v1024, 7
        %v1026 = vsub.s32 0, %v1025
        %v1027 = vrot.slane %v1022, %v1026
        %v1033 = vunpack.c.l.b16 %v1017
        %v1034 = vunpack.c.l.b16 %v1018
        %v1035 = vunpack.c.l.b16 %v1019
        %v1036 = vunpack.c.l.b16 %v1020
        %v1037 = vpack.c.b16 %v1034, %v1033
        %v1038 = vpack.c.b16 %v1036, %v1035
        %1041 = vmatprep.subr.bf16.mxu0 0
        %1042 = vmatpush1.bf16.msra.mxu0 %v1037
        %1043 = vmatprep.subr.bf16.mxu0 0
        %1044 = vmatpush1.bf16.msra.mxu0 %v1038
        %1045 = vmatprep.subr.bf16.mxu0 0
        %1046 = vmatpush1.bf16.msra.mxu0 0
        %1047 = vmatprep.subr.bf16.mxu0 0
        %1048 = vmatpush1.bf16.msra.mxu0 0
        %1049 = vmatprep.subr.bf16.mxu0 0
        %1050 = vmatpush1.bf16.msra.mxu0 0
        %1051 = vmatprep.subr.bf16.mxu0 0
        %1052 = vmatpush1.bf16.msra.mxu0 0
        %1053 = vmatprep.subr.bf16.mxu0 0
        %1054 = vmatpush1.bf16.msra.mxu0 0
        %1055 = vmatprep.subr.bf16.mxu0 0
        %1056 = vmatpush1.bf16.msra.mxu0 0
        %1057 = vmatprep.subr.bf16.mxu0 0
        %1058 = vmatpush1.bf16.msra.mxu0 0
        %1059 = vmatprep.subr.bf16.mxu0 0
        %1060 = vmatpush1.bf16.msra.mxu0 0
        %1061 = vmatprep.subr.bf16.mxu0 0
        %1062 = vmatpush1.bf16.msra.mxu0 0
        %1063 = vmatprep.subr.bf16.mxu0 0
        %1064 = vmatpush1.bf16.msra.mxu0 0
        %1065 = vmatprep.subr.bf16.mxu0 0
        %1066 = vmatpush1.bf16.msra.mxu0 0
        %1067 = vmatprep.subr.bf16.mxu0 0
        %1068 = vmatpush1.bf16.msra.mxu0 0
        %1069 = vmatprep.subr.bf16.mxu0 0
        %1070 = vmatpush1.bf16.msra.mxu0 0
        %1071 = vmatprep.subr.bf16.mxu0 0
        %1072 = vmatpush1.bf16.msra.mxu0 0
        %1073 = vmatprep.mubr.bf16.mxu0 0
        %1074 = vmatmul.mubr.bf16.gmra.mrb[0].mxu0 %v909
        %v1075 = vpop.f32.mrb[0].mxu0
        %v1076 = vadd.f32 %v1027, %v1075
        %v1077 = vpop.f32.mrb[0].mxu0
        %v1078 = vpop.f32.mrb[0].mxu0
        %v1079 = vpop.f32.mrb[0].mxu0
        %1080 = vdwg.mxu0
        %v1081 = vpack.c.bf16 %v946, %v946
        %v1082 = vpack.c.bf16 %v1011, %v1011
        %v1083 = vpack.c.bf16 %v1076, %v1076
        %vm1084 = vcmask 64512
        %v1086 = vsel %vm1084, %v1081, 0
        %v1089 = vsel %vm1084, %v1082, 0
        %1091 = vmatprep.subr.bf16.mxu0 0
        %1092 = vmatpush1.bf16.xpose.msra.mxu0 %v1089
        %1093 = vmatprep.subr.bf16.mxu0 0
        %1094 = vmatpush1.bf16.xpose.msra.mxu0 0
        %1095 = vmatprep.subr.bf16.mxu0 0
        %1096 = vmatpush1.bf16.xpose.msra.mxu0 0
        %1097 = vmatprep.subr.bf16.mxu0 0
        %1098 = vmatpush1.bf16.xpose.msra.mxu0 0
        %1099 = vmatprep.subr.bf16.mxu0 0
        %1100 = vmatpush1.bf16.xpose.msra.mxu0 0
        %1101 = vmatprep.subr.bf16.mxu0 0
        %1102 = vmatpush1.bf16.xpose.msra.mxu0 0
        %1103 = vmatprep.subr.bf16.mxu0 0
        %1104 = vmatpush1.bf16.xpose.msra.mxu0 0
        %1105 = vmatprep.subr.bf16.mxu0 0
        %1106 = vmatpush1.bf16.xpose.msra.mxu0 0
        %1107 = vmatprep.subr.bf16.mxu0 0
        %1108 = vmatpush1.bf16.xpose.msra.mxu0 0
        %1109 = vmatprep.subr.bf16.mxu0 0
        %1110 = vmatpush1.bf16.xpose.msra.mxu0 0
        %1111 = vmatprep.subr.bf16.mxu0 0
        %1112 = vmatpush1.bf16.xpose.msra.mxu0 0
        %1113 = vmatprep.subr.bf16.mxu0 0
        %1114 = vmatpush1.bf16.xpose.msra.mxu0 0
        %1115 = vmatprep.subr.bf16.mxu0 0
        %1116 = vmatpush1.bf16.xpose.msra.mxu0 0
        %1117 = vmatprep.subr.bf16.mxu0 0
        %1118 = vmatpush1.bf16.xpose.msra.mxu0 0
        %1119 = vmatprep.subr.bf16.mxu0 0
        %1120 = vmatpush1.bf16.xpose.msra.mxu0 0
        %1121 = vmatprep.subr.bf16.mxu0 0
        %1122 = vmatpush1.bf16.xpose.msra.mxu0 0
        %1123 = vmatprep.mubr.bf16.mxu0 0
        %1124 = vmatmul.mubr.bf16.gmra.mrb[0].mxu0 %v1086
        %v1125 = vpop.f32.mrb[0].mxu0
        %v1126 = vadd.f32 %v881, %v1125
        %v1127 = vpop.f32.mrb[0].mxu0
        %v1128 = vpop.f32.mrb[0].mxu0
        %v1129 = vpop.f32.mrb[0].mxu0
        %1130 = vdwg.mxu0
        %v1131 = vsel %vm1084, %v1126, -inf
        %1132 = vmax.xlane.f32.xlu0 %v1131
        %v1133 = vpop.xlane.xlu0 %1132
        %v1134 = vsub.f32 %v1126, %v1133
        %v1135 = vmul.f32 %v1134, 1.442695
        %v1136 = vpow.pop %v1135
        %v1137 = vsel %vm1084, %v1136, 0.0
        %1138 = vadd.xlane.f32.xlu0 %v1137
        %v1139 = vpop.xlane.xlu0 %1138
        %v1140 = vrcp.pop %v1139
        %v1141 = vmul.f32 %v1136, %v1140
        %v1142 = vpack.c.bf16 %v1141, %v1141
        %v1144 = vsel %vm1084, %v1142, 0
        %vm1146 = vcmask 1043456
        %v1148 = vsel %vm1146, %v1083, 0
        %1150 = vmatprep.subr.bf16.mxu0 0
        %1151 = vmatpush1.bf16.msra.mxu0 %v1148
        %1152 = vmatprep.subr.bf16.mxu0 0
        %1153 = vmatpush1.bf16.msra.mxu0 0
        %1154 = vmatprep.subr.bf16.mxu0 0
        %1155 = vmatpush1.bf16.msra.mxu0 0
        %1156 = vmatprep.subr.bf16.mxu0 0
        %1157 = vmatpush1.bf16.msra.mxu0 0
        %1158 = vmatprep.subr.bf16.mxu0 0
        %1159 = vmatpush1.bf16.msra.mxu0 0
        %1160 = vmatprep.subr.bf16.mxu0 0
        %1161 = vmatpush1.bf16.msra.mxu0 0
        %1162 = vmatprep.subr.bf16.mxu0 0
        %1163 = vmatpush1.bf16.msra.mxu0 0
        %1164 = vmatprep.subr.bf16.mxu0 0
        %1165 = vmatpush1.bf16.msra.mxu0 0
        %1166 = vmatprep.subr.bf16.mxu0 0
        %1167 = vmatpush1.bf16.msra.mxu0 0
        %1168 = vmatprep.subr.bf16.mxu0 0
        %1169 = vmatpush1.bf16.msra.mxu0 0
        %1170 = vmatprep.subr.bf16.mxu0 0
        %1171 = vmatpush1.bf16.msra.mxu0 0
        %1172 = vmatprep.subr.bf16.mxu0 0
        %1173 = vmatpush1.bf16.msra.mxu0 0
        %1174 = vmatprep.subr.bf16.mxu0 0
        %1175 = vmatpush1.bf16.msra.mxu0 0
        %1176 = vmatprep.subr.bf16.mxu0 0
        %1177 = vmatpush1.bf16.msra.mxu0 0
        %1178 = vmatprep.subr.bf16.mxu0 0
        %1179 = vmatpush1.bf16.msra.mxu0 0
        %1180 = vmatprep.subr.bf16.mxu0 0
        %1181 = vmatpush1.bf16.msra.mxu0 0
        %1182 = vmatprep.mubr.bf16.mxu0 0
        %1183 = vmatmul.mubr.bf16.gmra.mrb[0].mxu0 %v1144
        %v1184 = vpop.f32.mrb[0].mxu0
        %v1185 = vadd.f32 0.0, %v1184
        %v1186 = vpop.f32.mrb[0].mxu0
        %v1187 = vpop.f32.mrb[0].mxu0
        %v1188 = vpop.f32.mrb[0].mxu0
        %1189 = vdwg.mxu0
        %1190 = vst.msk [vmem:[#allocation3] sm:$0xff] %vm1084, %v1185
        %1192 = vrot.lane.b32.xlu0 %v1081, 120
        %v1193 = vpop.permute.xlu0 %1192
        %1195 = vrot.lane.b32.xlu0 %v1082, 120
        %v1196 = vpop.permute.xlu0 %1195
        %v1198 = vsel %vm1084, %v1193, 0
        %v1201 = vsel %vm1084, %v1196, 0
        %1203 = vmatprep.subr.bf16.mxu0 0
        %1204 = vmatpush1.bf16.xpose.msra.mxu0 %v1201
        %1205 = vmatprep.subr.bf16.mxu0 0
        %1206 = vmatpush1.bf16.xpose.msra.mxu0 0
        %1207 = vmatprep.subr.bf16.mxu0 0
        %1208 = vmatpush1.bf16.xpose.msra.mxu0 0
        %1209 = vmatprep.subr.bf16.mxu0 0
        %1210 = vmatpush1.bf16.xpose.msra.mxu0 0
        %1211 = vmatprep.subr.bf16.mxu0 0
        %1212 = vmatpush1.bf16.xpose.msra.mxu0 0
        %1213 = vmatprep.subr.bf16.mxu0 0
        %1214 = vmatpush1.bf16.xpose.msra.mxu0 0
        %1215 = vmatprep.subr.bf16.mxu0 0
        %1216 = vmatpush1.bf16.xpose.msra.mxu0 0
        %1217 = vmatprep.subr.bf16.mxu0 0
        %1218 = vmatpush1.bf16.xpose.msra.mxu0 0
        %1219 = vmatprep.subr.bf16.mxu0 0
        %1220 = vmatpush1.bf16.xpose.msra.mxu0 0
        %1221 = vmatprep.subr.bf16.mxu0 0
        %1222 = vmatpush1.bf16.xpose.msra.mxu0 0
        %1223 = vmatprep.subr.bf16.mxu0 0
        %1224 = vmatpush1.bf16.xpose.msra.mxu0 0
        %1225 = vmatprep.subr.bf16.mxu0 0
        %1226 = vmatpush1.bf16.xpose.msra.mxu0 0
        %1227 = vmatprep.subr.bf16.mxu0 0
        %1228 = vmatpush1.bf16.xpose.msra.mxu0 0
        %1229 = vmatprep.subr.bf16.mxu0 0
        %1230 = vmatpush1.bf16.xpose.msra.mxu0 0
        %1231 = vmatprep.subr.bf16.mxu0 0
        %1232 = vmatpush1.bf16.xpose.msra.mxu0 0
        %1233 = vmatprep.subr.bf16.mxu0 0
        %1234 = vmatpush1.bf16.xpose.msra.mxu0 0
        %1235 = vmatprep.mubr.bf16.mxu0 0
        %1236 = vmatmul.mubr.bf16.gmra.mrb[0].mxu0 %v1198
        %v1237 = vpop.f32.mrb[0].mxu0
        %v1238 = vadd.f32 %v881, %v1237
        %v1239 = vpop.f32.mrb[0].mxu0
        %v1240 = vpop.f32.mrb[0].mxu0
        %v1241 = vpop.f32.mrb[0].mxu0
        %1242 = vdwg.mxu0
        %v1243 = vsel %vm1084, %v1238, -inf
        %1244 = vmax.xlane.f32.xlu0 %v1243
        %v1245 = vpop.xlane.xlu0 %1244
        %v1246 = vsub.f32 %v1238, %v1245
        %v1247 = vmul.f32 %v1246, 1.442695
        %v1248 = vpow.pop %v1247
        %v1249 = vsel %vm1084, %v1248, 0.0
        %1250 = vadd.xlane.f32.xlu0 %v1249
        %v1251 = vpop.xlane.xlu0 %1250
        %v1252 = vrcp.pop %v1251
        %v1253 = vmul.f32 %v1248, %v1252
        %v1254 = vpack.c.bf16 %v1253, %v1253
        %1256 = vrot.lane.b32.xlu0 %v1083, 120
        %v1257 = vpop.permute.xlu0 %1256
        %v1259 = vsel %vm1084, %v1254, 0
        %v1262 = vsel %vm1146, %v1257, 0
        %1264 = vmatprep.subr.bf16.mxu0 0
        %1265 = vmatpush1.bf16.msra.mxu0 %v1262
        %1266 = vmatprep.subr.bf16.mxu0 0
        %1267 = vmatpush1.bf16.msra.mxu0 0
        %1268 = vmatprep.subr.bf16.mxu0 0
        %1269 = vmatpush1.bf16.msra.mxu0 0
        %1270 = vmatprep.subr.bf16.mxu0 0
        %1271 = vmatpush1.bf16.msra.mxu0 0
        %1272 = vmatprep.subr.bf16.mxu0 0
        %1273 = vmatpush1.bf16.msra.mxu0 0
        %1274 = vmatprep.subr.bf16.mxu0 0
        %1275 = vmatpush1.bf16.msra.mxu0 0
        %1276 = vmatprep.subr.bf16.mxu0 0
        %1277 = vmatpush1.bf16.msra.mxu0 0
        %1278 = vmatprep.subr.bf16.mxu0 0
        %1279 = vmatpush1.bf16.msra.mxu0 0
        %1280 = vmatprep.subr.bf16.mxu0 0
        %1281 = vmatpush1.bf16.msra.mxu0 0
        %1282 = vmatprep.subr.bf16.mxu0 0
        %1283 = vmatpush1.bf16.msra.mxu0 0
        %1284 = vmatprep.subr.bf16.mxu0 0
        %1285 = vmatpush1.bf16.msra.mxu0 0
        %1286 = vmatprep.subr.bf16.mxu0 0
        %1287 = vmatpush1.bf16.msra.mxu0 0
        %1288 = vmatprep.subr.bf16.mxu0 0
        %1289 = vmatpush1.bf16.msra.mxu0 0
        %1290 = vmatprep.subr.bf16.mxu0 0
        %1291 = vmatpush1.bf16.msra.mxu0 0
        %1292 = vmatprep.subr.bf16.mxu0 0
        %1293 = vmatpush1.bf16.msra.mxu0 0
        %1294 = vmatprep.subr.bf16.mxu0 0
        %1295 = vmatpush1.bf16.msra.mxu0 0
        %1296 = vmatprep.mubr.bf16.mxu0 0
        %1297 = vmatmul.mubr.bf16.gmra.mrb[0].mxu0 %v1259
        %v1298 = vpop.f32.mrb[0].mxu0
        %v1299 = vadd.f32 0.0, %v1298
        %v1300 = vpop.f32.mrb[0].mxu0
        %v1301 = vpop.f32.mrb[0].mxu0
        %v1302 = vpop.f32.mrb[0].mxu0
        %1303 = vdwg.mxu0
        %1305 = vrot.lane.b32.xlu0 %v1299, 8
        %v1306 = vpop.permute.xlu0 %1305
        %vm1308 = vcmask 130112
        %1309 = vst.msk [vmem:[#allocation3] sm:$0xff] %vm1308, %v1306
        %1310 = vrot.lane.b32.xlu0 %v1081, 112
        %v1311 = vpop.permute.xlu0 %1310
        %1312 = vrot.lane.b32.xlu0 %v1082, 112
        %v1313 = vpop.permute.xlu0 %1312
        %v1315 = vsel %vm1084, %v1311, 0
        %v1318 = vsel %vm1084, %v1313, 0
        %1320 = vmatprep.subr.bf16.mxu0 0
        %1321 = vmatpush1.bf16.xpose.msra.mxu0 %v1318
        %1322 = vmatprep.subr.bf16.mxu0 0
        %1323 = vmatpush1.bf16.xpose.msra.mxu0 0
        %1324 = vmatprep.subr.bf16.mxu0 0
        %1325 = vmatpush1.bf16.xpose.msra.mxu0 0
        %1326 = vmatprep.subr.bf16.mxu0 0
        %1327 = vmatpush1.bf16.xpose.msra.mxu0 0
        %1328 = vmatprep.subr.bf16.mxu0 0
        %1329 = vmatpush1.bf16.xpose.msra.mxu0 0
        %1330 = vmatprep.subr.bf16.mxu0 0
        %1331 = vmatpush1.bf16.xpose.msra.mxu0 0
        %1332 = vmatprep.subr.bf16.mxu0 0
        %1333 = vmatpush1.bf16.xpose.msra.mxu0 0
        %1334 = vmatprep.subr.bf16.mxu0 0
        %1335 = vmatpush1.bf16.xpose.msra.mxu0 0
        %1336 = vmatprep.subr.bf16.mxu0 0
        %1337 = vmatpush1.bf16.xpose.msra.mxu0 0
        %1338 = vmatprep.subr.bf16.mxu0 0
        %1339 = vmatpush1.bf16.xpose.msra.mxu0 0
        %1340 = vmatprep.subr.bf16.mxu0 0
        %1341 = vmatpush1.bf16.xpose.msra.mxu0 0
        %1342 = vmatprep.subr.bf16.mxu0 0
        %1343 = vmatpush1.bf16.xpose.msra.mxu0 0
        %1344 = vmatprep.subr.bf16.mxu0 0
        %1345 = vmatpush1.bf16.xpose.msra.mxu0 0
        %1346 = vmatprep.subr.bf16.mxu0 0
        %1347 = vmatpush1.bf16.xpose.msra.mxu0 0
        %1348 = vmatprep.subr.bf16.mxu0 0
        %1349 = vmatpush1.bf16.xpose.msra.mxu0 0
        %1350 = vmatprep.subr.bf16.mxu0 0
        %1351 = vmatpush1.bf16.xpose.msra.mxu0 0
        %1352 = vmatprep.mubr.bf16.mxu0 0
        %1353 = vmatmul.mubr.bf16.gmra.mrb[0].mxu0 %v1315
        %v1354 = vpop.f32.mrb[0].mxu0
        %v1355 = vadd.f32 %v881, %v1354
        %v1356 = vpop.f32.mrb[0].mxu0
        %v1357 = vpop.f32.mrb[0].mxu0
        %v1358 = vpop.f32.mrb[0].mxu0
        %1359 = vdwg.mxu0
        %v1360 = vsel %vm1084, %v1355, -inf
        %1361 = vmax.xlane.f32.xlu0 %v1360
        %v1362 = vpop.xlane.xlu0 %1361
        %v1363 = vsub.f32 %v1355, %v1362
        %v1364 = vmul.f32 %v1363, 1.442695
        %v1365 = vpow.pop %v1364
        %v1366 = vsel %vm1084, %v1365, 0.0
        %1367 = vadd.xlane.f32.xlu0 %v1366
        %v1368 = vpop.xlane.xlu0 %1367
        %v1369 = vrcp.pop %v1368
        %v1370 = vmul.f32 %v1365, %v1369
        %v1371 = vpack.c.bf16 %v1370, %v1370
        %1372 = vrot.lane.b32.xlu0 %v1083, 112
        %v1373 = vpop.permute.xlu0 %1372
        %v1375 = vsel %vm1084, %v1371, 0
        %v1378 = vsel %vm1146, %v1373, 0
        %1380 = vmatprep.subr.bf16.mxu0 0
        %1381 = vmatpush1.bf16.msra.mxu0 %v1378
        %1382 = vmatprep.subr.bf16.mxu0 0
        %1383 = vmatpush1.bf16.msra.mxu0 0
        %1384 = vmatprep.subr.bf16.mxu0 0
        %1385 = vmatpush1.bf16.msra.mxu0 0
        %1386 = vmatprep.subr.bf16.mxu0 0
        %1387 = vmatpush1.bf16.msra.mxu0 0
        %1388 = vmatprep.subr.bf16.mxu0 0
        %1389 = vmatpush1.bf16.msra.mxu0 0
        %1390 = vmatprep.subr.bf16.mxu0 0
        %1391 = vmatpush1.bf16.msra.mxu0 0
        %1392 = vmatprep.subr.bf16.mxu0 0
        %1393 = vmatpush1.bf16.msra.mxu0 0
        %1394 = vmatprep.subr.bf16.mxu0 0
        %1395 = vmatpush1.bf16.msra.mxu0 0
        %1396 = vmatprep.subr.bf16.mxu0 0
        %1397 = vmatpush1.bf16.msra.mxu0 0
        %1398 = vmatprep.subr.bf16.mxu0 0
        %1399 = vmatpush1.bf16.msra.mxu0 0
        %1400 = vmatprep.subr.bf16.mxu0 0
        %1401 = vmatpush1.bf16.msra.mxu0 0
        %1402 = vmatprep.subr.bf16.mxu0 0
        %1403 = vmatpush1.bf16.msra.mxu0 0
        %1404 = vmatprep.subr.bf16.mxu0 0
        %1405 = vmatpush1.bf16.msra.mxu0 0
        %1406 = vmatprep.subr.bf16.mxu0 0
        %1407 = vmatpush1.bf16.msra.mxu0 0
        %1408 = vmatprep.subr.bf16.mxu0 0
        %1409 = vmatpush1.bf16.msra.mxu0 0
        %1410 = vmatprep.subr.bf16.mxu0 0
        %1411 = vmatpush1.bf16.msra.mxu0 0
        %1412 = vmatprep.mubr.bf16.mxu0 0
        %1413 = vmatmul.mubr.bf16.gmra.mrb[0].mxu0 %v1375
        %v1414 = vpop.f32.mrb[0].mxu0
        %v1415 = vadd.f32 0.0, %v1414
        %v1416 = vpop.f32.mrb[0].mxu0
        %v1417 = vpop.f32.mrb[0].mxu0
        %v1418 = vpop.f32.mrb[0].mxu0
        %1419 = vdwg.mxu0
        %1421 = vrot.lane.b32.xlu0 %v1415, 16
        %v1422 = vpop.permute.xlu0 %1421
        %vm1424 = vcmask 195712
        %1425 = vst.msk [vmem:[#allocation3] sm:$0xff] %vm1424, %v1422
        %1426 = vrot.lane.b32.xlu0 %v1081, 104
        %v1427 = vpop.permute.xlu0 %1426
        %1428 = vrot.lane.b32.xlu0 %v1082, 104
        %v1429 = vpop.permute.xlu0 %1428
        %v1431 = vsel %vm1084, %v1427, 0
        %v1434 = vsel %vm1084, %v1429, 0
        %1436 = vmatprep.subr.bf16.mxu0 0
        %1437 = vmatpush1.bf16.xpose.msra.mxu0 %v1434
        %1438 = vmatprep.subr.bf16.mxu0 0
        %1439 = vmatpush1.bf16.xpose.msra.mxu0 0
        %1440 = vmatprep.subr.bf16.mxu0 0
        %1441 = vmatpush1.bf16.xpose.msra.mxu0 0
        %1442 = vmatprep.subr.bf16.mxu0 0
        %1443 = vmatpush1.bf16.xpose.msra.mxu0 0
        %1444 = vmatprep.subr.bf16.mxu0 0
        %1445 = vmatpush1.bf16.xpose.msra.mxu0 0
        %1446 = vmatprep.subr.bf16.mxu0 0
        %1447 = vmatpush1.bf16.xpose.msra.mxu0 0
        %1448 = vmatprep.subr.bf16.mxu0 0
        %1449 = vmatpush1.bf16.xpose.msra.mxu0 0
        %1450 = vmatprep.subr.bf16.mxu0 0
        %1451 = vmatpush1.bf16.xpose.msra.mxu0 0
        %1452 = vmatprep.subr.bf16.mxu0 0
        %1453 = vmatpush1.bf16.xpose.msra.mxu0 0
        %1454 = vmatprep.subr.bf16.mxu0 0
        %1455 = vmatpush1.bf16.xpose.msra.mxu0 0
        %1456 = vmatprep.subr.bf16.mxu0 0
        %1457 = vmatpush1.bf16.xpose.msra.mxu0 0
        %1458 = vmatprep.subr.bf16.mxu0 0
        %1459 = vmatpush1.bf16.xpose.msra.mxu0 0
        %1460 = vmatprep.subr.bf16.mxu0 0
        %1461 = vmatpush1.bf16.xpose.msra.mxu0 0
        %1462 = vmatprep.subr.bf16.mxu0 0
        %1463 = vmatpush1.bf16.xpose.msra.mxu0 0
        %1464 = vmatprep.subr.bf16.mxu0 0
        %1465 = vmatpush1.bf16.xpose.msra.mxu0 0
        %1466 = vmatprep.subr.bf16.mxu0 0
        %1467 = vmatpush1.bf16.xpose.msra.mxu0 0
        %1468 = vmatprep.mubr.bf16.mxu0 0
        %1469 = vmatmul.mubr.bf16.gmra.mrb[0].mxu0 %v1431
        %v1470 = vpop.f32.mrb[0].mxu0
        %v1471 = vadd.f32 %v881, %v1470
        %v1472 = vpop.f32.mrb[0].mxu0
        %v1473 = vpop.f32.mrb[0].mxu0
        %v1474 = vpop.f32.mrb[0].mxu0
        %1475 = vdwg.mxu0
        %v1476 = vsel %vm1084, %v1471, -inf
        %1477 = vmax.xlane.f32.xlu0 %v1476
        %v1478 = vpop.xlane.xlu0 %1477
        %v1479 = vsub.f32 %v1471, %v1478
        %v1480 = vmul.f32 %v1479, 1.442695
        %v1481 = vpow.pop %v1480
        %v1482 = vsel %vm1084, %v1481, 0.0
        %1483 = vadd.xlane.f32.xlu0 %v1482
        %v1484 = vpop.xlane.xlu0 %1483
        %v1485 = vrcp.pop %v1484
        %v1486 = vmul.f32 %v1481, %v1485
        %v1487 = vpack.c.bf16 %v1486, %v1486
        %1488 = vrot.lane.b32.xlu0 %v1083, 104
        %v1489 = vpop.permute.xlu0 %1488
        %v1491 = vsel %vm1084, %v1487, 0
        %v1494 = vsel %vm1146, %v1489, 0
        %1496 = vmatprep.subr.bf16.mxu0 0
        %1497 = vmatpush1.bf16.msra.mxu0 %v1494
        %1498 = vmatprep.subr.bf16.mxu0 0
        %1499 = vmatpush1.bf16.msra.mxu0 0
        %1500 = vmatprep.subr.bf16.mxu0 0
        %1501 = vmatpush1.bf16.msra.mxu0 0
        %1502 = vmatprep.subr.bf16.mxu0 0
        %1503 = vmatpush1.bf16.msra.mxu0 0
        %1504 = vmatprep.subr.bf16.mxu0 0
        %1505 = vmatpush1.bf16.msra.mxu0 0
        %1506 = vmatprep.subr.bf16.mxu0 0
        %1507 = vmatpush1.bf16.msra.mxu0 0
        %1508 = vmatprep.subr.bf16.mxu0 0
        %1509 = vmatpush1.bf16.msra.mxu0 0
        %1510 = vmatprep.subr.bf16.mxu0 0
        %1511 = vmatpush1.bf16.msra.mxu0 0
        %1512 = vmatprep.subr.bf16.mxu0 0
        %1513 = vmatpush1.bf16.msra.mxu0 0
        %1514 = vmatprep.subr.bf16.mxu0 0
        %1515 = vmatpush1.bf16.msra.mxu0 0
        %1516 = vmatprep.subr.bf16.mxu0 0
        %1517 = vmatpush1.bf16.msra.mxu0 0
        %1518 = vmatprep.subr.bf16.mxu0 0
        %1519 = vmatpush1.bf16.msra.mxu0 0
        %1520 = vmatprep.subr.bf16.mxu0 0
        %1521 = vmatpush1.bf16.msra.mxu0 0
        %1522 = vmatprep.subr.bf16.mxu0 0
        %1523 = vmatpush1.bf16.msra.mxu0 0
        %1524 = vmatprep.subr.bf16.mxu0 0
        %1525 = vmatpush1.bf16.msra.mxu0 0
        %1526 = vmatprep.subr.bf16.mxu0 0
        %1527 = vmatpush1.bf16.msra.mxu0 0
        %1528 = vmatprep.mubr.bf16.mxu0 0
        %1529 = vmatmul.mubr.bf16.gmra.mrb[0].mxu0 %v1491
        %v1530 = vpop.f32.mrb[0].mxu0
        %v1531 = vadd.f32 0.0, %v1530
        %v1532 = vpop.f32.mrb[0].mxu0
        %v1533 = vpop.f32.mrb[0].mxu0
        %v1534 = vpop.f32.mrb[0].mxu0
        %1535 = vdwg.mxu0
        %1537 = vrot.lane.b32.xlu0 %v1531, 24
        %v1538 = vpop.permute.xlu0 %1537
        %vm1540 = vcmask 261312
        %1541 = vst.msk [vmem:[#allocation3] sm:$0xff] %vm1540, %v1538
        %v1542 = vld [vmem:[#allocation3] sm:$0xff]
        %v1543 = vpack.c.bf16 %v1542, %v1542
        %v1544 = vld [vmem:[%s848] sm:$0xf]
        %v1545 = vld [vmem:[%s848 + $0x4] sm:$0xf]
        %v1546 = vld [vmem:[%s848 + $0x8] sm:$0xf]
        %v1547 = vld [vmem:[%s848 + $0xc] sm:$0xf]
        %v1548 = vld [vmem:[%s739] sm:$0x1]
        %v1550 = vlaneseq
        %v1551 = vshrl.u32 %v1550, 7
        %v1552 = vsub.s32 0, %v1551
        %v1553 = vrot.slane %v1548, %v1552
        %v1559 = vunpack.c.l.b16 %v1544
        %v1560 = vunpack.c.l.b16 %v1545
        %v1561 = vunpack.c.l.b16 %v1546
        %v1562 = vunpack.c.l.b16 %v1547
        %v1563 = vpack.c.b16 %v1560, %v1559
        %v1564 = vpack.c.b16 %v1562, %v1561
        %v1568 = vsel %vm907, %v1543, 0
        %1570 = vmatprep.subr.bf16.mxu0 0
        %1571 = vmatpush1.bf16.msra.mxu0 %v1563
        %1572 = vmatprep.subr.bf16.mxu0 0
        %1573 = vmatpush1.bf16.msra.mxu0 %v1564
        %1574 = vmatprep.subr.bf16.mxu0 0
        %1575 = vmatpush1.bf16.msra.mxu0 0
        %1576 = vmatprep.subr.bf16.mxu0 0
        %1577 = vmatpush1.bf16.msra.mxu0 0
        %1578 = vmatprep.subr.bf16.mxu0 0
        %1579 = vmatpush1.bf16.msra.mxu0 0
        %1580 = vmatprep.subr.bf16.mxu0 0
        %1581 = vmatpush1.bf16.msra.mxu0 0
        %1582 = vmatprep.subr.bf16.mxu0 0
        %1583 = vmatpush1.bf16.msra.mxu0 0
        %1584 = vmatprep.subr.bf16.mxu0 0
        %1585 = vmatpush1.bf16.msra.mxu0 0
        %1586 = vmatprep.subr.bf16.mxu0 0
        %1587 = vmatpush1.bf16.msra.mxu0 0
        %1588 = vmatprep.subr.bf16.mxu0 0
        %1589 = vmatpush1.bf16.msra.mxu0 0
        %1590 = vmatprep.subr.bf16.mxu0 0
        %1591 = vmatpush1.bf16.msra.mxu0 0
        %1592 = vmatprep.subr.bf16.mxu0 0
        %1593 = vmatpush1.bf16.msra.mxu0 0
        %1594 = vmatprep.subr.bf16.mxu0 0
        %1595 = vmatpush1.bf16.msra.mxu0 0
        %1596 = vmatprep.subr.bf16.mxu0 0
        %1597 = vmatpush1.bf16.msra.mxu0 0
        %1598 = vmatprep.subr.bf16.mxu0 0
        %1599 = vmatpush1.bf16.msra.mxu0 0
        %1600 = vmatprep.subr.bf16.mxu0 0
        %1601 = vmatpush1.bf16.msra.mxu0 0
        %1602 = vmatprep.mubr.bf16.mxu0 0
        %1603 = vmatmul.mubr.bf16.gmra.mrb[0].mxu0 %v1568
        %v1604 = vpop.f32.mrb[0].mxu0
        %v1605 = vadd.f32 %v1553, %v1604
        %v1606 = vpop.f32.mrb[0].mxu0
        %v1607 = vpop.f32.mrb[0].mxu0
        %v1608 = vpop.f32.mrb[0].mxu0
        %1609 = vdwg.mxu0
        %v1610 = vadd.f32 %v879, %v1605
        %v1611 = vld [vmem:[%s862] sm:$0x1]
        %v1612 = vld [vmem:[%s866] sm:$0x1]
        %v1613 = vsel %vm907, %v1610, 0.0
        %1614 = vadd.xlane.f32.xlu0 %v1613
        %v1615 = vpop.xlane.xlu0 %1614
        %v1616 = vrcp.pop 32.0
        %v1617 = vmul.f32 %v1615, %v1616
        %v1618 = vsub.f32 %v1610, %v1617
        %v1619 = vmul.f32 %v1618, %v1618
        %v1620 = vsel %vm907, %v1619, 0.0
        %1621 = vadd.xlane.f32.xlu0 %v1620
        %v1622 = vpop.xlane.xlu0 %1621
        %v1623 = vmul.f32 %v1622, %v1616
        %v1625 = vlaneseq
        %v1626 = vshrl.u32 %v1625, 7
        %v1627 = vsub.s32 0, %v1626
        %v1628 = vrot.slane %v1611, %v1627
        %v1630 = vmul.f32 %v1628, %v1618
        %v1631 = vadd.f32 %v1623, 1e-06
        %v1632 = vrsqrt.pop %v1631
        %v1633 = vmul.f32 %v1630, %v1632
        %v1635 = vlaneseq
        %v1636 = vshrl.u32 %v1635, 7
        %v1637 = vsub.s32 0, %v1636
        %v1638 = vrot.slane %v1612, %v1637
        %v1640 = vadd.f32 %v1633, %v1638
        %v1641 = vpack.c.bf16 %v1640, %v1640
        %s1642 = scalar_lea.vmem %s721, 48 [#allocation12]
        %v1643 = vld [vmem:[%s1642] sm:$0xf]
        %v1644 = vld [vmem:[%s1642 + $0x4] sm:$0xf]
        %v1645 = vld [vmem:[%s1642 + $0x8] sm:$0xf]
        %v1646 = vld [vmem:[%s1642 + $0xc] sm:$0xf]
        %s1647 = scalar_lea.vmem %s730, 3 [#allocation13]
        %v1648 = vld [vmem:[%s1647] sm:$0x1]
        %v1650 = vlaneseq
        %v1651 = vshrl.u32 %v1650, 7
        %v1652 = vsub.s32 0, %v1651
        %v1653 = vrot.slane %v1648, %v1652
        %v1659 = vunpack.c.l.b16 %v1643
        %v1660 = vunpack.c.l.b16 %v1644
        %v1661 = vunpack.c.l.b16 %v1645
        %v1662 = vunpack.c.l.b16 %v1646
        %v1663 = vpack.c.b16 %v1660, %v1659
        %v1664 = vpack.c.b16 %v1662, %v1661
        %v1668 = vsel %vm907, %v1641, 0
        %1670 = vmatprep.subr.bf16.mxu0 0
        %1671 = vmatpush1.bf16.msra.mxu0 %v1663
        %1672 = vmatprep.subr.bf16.mxu0 0
        %1673 = vmatpush1.bf16.msra.mxu0 %v1664
        %1674 = vmatprep.subr.bf16.mxu0 0
        %1675 = vmatpush1.bf16.msra.mxu0 0
        %1676 = vmatprep.subr.bf16.mxu0 0
        %1677 = vmatpush1.bf16.msra.mxu0 0
        %1678 = vmatprep.subr.bf16.mxu0 0
        %1679 = vmatpush1.bf16.msra.mxu0 0
        %1680 = vmatprep.subr.bf16.mxu0 0
        %1681 = vmatpush1.bf16.msra.mxu0 0
        %1682 = vmatprep.subr.bf16.mxu0 0
        %1683 = vmatpush1.bf16.msra.mxu0 0
        %1684 = vmatprep.subr.bf16.mxu0 0
        %1685 = vmatpush1.bf16.msra.mxu0 0
        %1686 = vmatprep.subr.bf16.mxu0 0
        %1687 = vmatpush1.bf16.msra.mxu0 0
        %1688 = vmatprep.subr.bf16.mxu0 0
        %1689 = vmatpush1.bf16.msra.mxu0 0
        %1690 = vmatprep.subr.bf16.mxu0 0
        %1691 = vmatpush1.bf16.msra.mxu0 0
        %1692 = vmatprep.subr.bf16.mxu0 0
        %1693 = vmatpush1.bf16.msra.mxu0 0
        %1694 = vmatprep.subr.bf16.mxu0 0
        %1695 = vmatpush1.bf16.msra.mxu0 0
        %1696 = vmatprep.subr.bf16.mxu0 0
        %1697 = vmatpush1.bf16.msra.mxu0 0
        %1698 = vmatprep.subr.bf16.mxu0 0
        %1699 = vmatpush1.bf16.msra.mxu0 0
        %1700 = vmatprep.subr.bf16.mxu0 0
        %1701 = vmatpush1.bf16.msra.mxu0 0
        %1702 = vmatprep.mubr.bf16.mxu0 0
        %1703 = vmatmul.mubr.bf16.gmra.mrb[0].mxu0 %v1668
        %v1704 = vpop.f32.mrb[0].mxu0
        %v1705 = vadd.f32 %v1653, %v1704
        %v1706 = vpop.f32.mrb[0].mxu0
        %v1707 = vpop.f32.mrb[0].mxu0
        %v1708 = vpop.f32.mrb[0].mxu0
        %1709 = vdwg.mxu0
        %s1710 = scalar_lea.vmem %s721, 64 [#allocation12]
        %v1711 = vld [vmem:[%s1710] sm:$0xf]
        %v1712 = vld [vmem:[%s1710 + $0x4] sm:$0xf]
        %v1713 = vld [vmem:[%s1710 + $0x8] sm:$0xf]
        %v1714 = vld [vmem:[%s1710 + $0xc] sm:$0xf]
        %s1715 = scalar_lea.vmem %s730, 4 [#allocation13]
        %v1716 = vld [vmem:[%s1715] sm:$0x1]
        %v1718 = vlaneseq
        %v1719 = vshrl.u32 %v1718, 7
        %v1720 = vsub.s32 0, %v1719
        %v1721 = vrot.slane %v1716, %v1720
        %v1727 = vunpack.c.l.b16 %v1711
        %v1728 = vunpack.c.l.b16 %v1712
        %v1729 = vunpack.c.l.b16 %v1713
        %v1730 = vunpack.c.l.b16 %v1714
        %v1731 = vpack.c.b16 %v1728, %v1727
        %v1732 = vpack.c.b16 %v1730, %v1729
        %v1736 = vsel %vm907, %v883, 0
        %1738 = vmatprep.subr.bf16.mxu0 0
        %1739 = vmatpush1.bf16.msra.mxu0 %v1731
        %1740 = vmatprep.subr.bf16.mxu0 0
        %1741 = vmatpush1.bf16.msra.mxu0 %v1732
        %1742 = vmatprep.subr.bf16.mxu0 0
        %1743 = vmatpush1.bf16.msra.mxu0 0
        %1744 = vmatprep.subr.bf16.mxu0 0
        %1745 = vmatpush1.bf16.msra.mxu0 0
        %1746 = vmatprep.subr.bf16.mxu0 0
        %1747 = vmatpush1.bf16.msra.mxu0 0
        %1748 = vmatprep.subr.bf16.mxu0 0
        %1749 = vmatpush1.bf16.msra.mxu0 0
        %1750 = vmatprep.subr.bf16.mxu0 0
        %1751 = vmatpush1.bf16.msra.mxu0 0
        %1752 = vmatprep.subr.bf16.mxu0 0
        %1753 = vmatpush1.bf16.msra.mxu0 0
        %1754 = vmatprep.subr.bf16.mxu0 0
        %1755 = vmatpush1.bf16.msra.mxu0 0
        %1756 = vmatprep.subr.bf16.mxu0 0
        %1757 = vmatpush1.bf16.msra.mxu0 0
        %1758 = vmatprep.subr.bf16.mxu0 0
        %1759 = vmatpush1.bf16.msra.mxu0 0
        %1760 = vmatprep.subr.bf16.mxu0 0
        %1761 = vmatpush1.bf16.msra.mxu0 0
        %1762 = vmatprep.subr.bf16.mxu0 0
        %1763 = vmatpush1.bf16.msra.mxu0 0
        %1764 = vmatprep.subr.bf16.mxu0 0
        %1765 = vmatpush1.bf16.msra.mxu0 0
        %1766 = vmatprep.subr.bf16.mxu0 0
        %1767 = vmatpush1.bf16.msra.mxu0 0
        %1768 = vmatprep.subr.bf16.mxu0 0
        %1769 = vmatpush1.bf16.msra.mxu0 0
        %1770 = vmatprep.mubr.bf16.mxu0 0
        %1771 = vmatmul.mubr.bf16.gmra.mrb[0].mxu0 %v1736
        %v1772 = vpop.f32.mrb[0].mxu0
        %v1773 = vadd.f32 %v1721, %v1772
        %v1774 = vpop.f32.mrb[0].mxu0
        %v1775 = vpop.f32.mrb[0].mxu0
        %v1776 = vpop.f32.mrb[0].mxu0
        %1777 = vdwg.mxu0
        %s1778 = scalar_lea.vmem %s721, 80 [#allocation12]
        %v1779 = vld [vmem:[%s1778] sm:$0xf]
        %v1780 = vld [vmem:[%s1778 + $0x4] sm:$0xf]
        %v1781 = vld [vmem:[%s1778 + $0x8] sm:$0xf]
        %v1782 = vld [vmem:[%s1778 + $0xc] sm:$0xf]
        %s1783 = scalar_lea.vmem %s730, 5 [#allocation13]
        %v1784 = vld [vmem:[%s1783] sm:$0x1]
        %v1786 = vlaneseq
        %v1787 = vshrl.u32 %v1786, 7
        %v1788 = vsub.s32 0, %v1787
        %v1789 = vrot.slane %v1784, %v1788
        %v1795 = vunpack.c.l.b16 %v1779
        %v1796 = vunpack.c.l.b16 %v1780
        %v1797 = vunpack.c.l.b16 %v1781
        %v1798 = vunpack.c.l.b16 %v1782
        %v1799 = vpack.c.b16 %v1796, %v1795
        %v1800 = vpack.c.b16 %v1798, %v1797
        %1803 = vmatprep.subr.bf16.mxu0 0
        %1804 = vmatpush1.bf16.msra.mxu0 %v1799
        %1805 = vmatprep.subr.bf16.mxu0 0
        %1806 = vmatpush1.bf16.msra.mxu0 %v1800
        %1807 = vmatprep.subr.bf16.mxu0 0
        %1808 = vmatpush1.bf16.msra.mxu0 0
        %1809 = vmatprep.subr.bf16.mxu0 0
        %1810 = vmatpush1.bf16.msra.mxu0 0
        %1811 = vmatprep.subr.bf16.mxu0 0
        %1812 = vmatpush1.bf16.msra.mxu0 0
        %1813 = vmatprep.subr.bf16.mxu0 0
        %1814 = vmatpush1.bf16.msra.mxu0 0
        %1815 = vmatprep.subr.bf16.mxu0 0
        %1816 = vmatpush1.bf16.msra.mxu0 0
        %1817 = vmatprep.subr.bf16.mxu0 0
        %1818 = vmatpush1.bf16.msra.mxu0 0
        %1819 = vmatprep.subr.bf16.mxu0 0
        %1820 = vmatpush1.bf16.msra.mxu0 0
        %1821 = vmatprep.subr.bf16.mxu0 0
        %1822 = vmatpush1.bf16.msra.mxu0 0
        %1823 = vmatprep.subr.bf16.mxu0 0
        %1824 = vmatpush1.bf16.msra.mxu0 0
        %1825 = vmatprep.subr.bf16.mxu0 0
        %1826 = vmatpush1.bf16.msra.mxu0 0
        %1827 = vmatprep.subr.bf16.mxu0 0
        %1828 = vmatpush1.bf16.msra.mxu0 0
        %1829 = vmatprep.subr.bf16.mxu0 0
        %1830 = vmatpush1.bf16.msra.mxu0 0
        %1831 = vmatprep.subr.bf16.mxu0 0
        %1832 = vmatpush1.bf16.msra.mxu0 0
        %1833 = vmatprep.subr.bf16.mxu0 0
        %1834 = vmatpush1.bf16.msra.mxu0 0
        %1835 = vmatprep.mubr.bf16.mxu0 0
        %1836 = vmatmul.mubr.bf16.gmra.mrb[0].mxu0 %v1736
        %v1837 = vpop.f32.mrb[0].mxu0
        %v1838 = vadd.f32 %v1789, %v1837
        %v1839 = vpop.f32.mrb[0].mxu0
        %v1840 = vpop.f32.mrb[0].mxu0
        %v1841 = vpop.f32.mrb[0].mxu0
        %1842 = vdwg.mxu0
        %v1843 = vpack.c.bf16 %v1705, %v1705
        %v1844 = vpack.c.bf16 %v1773, %v1773
        %v1845 = vpack.c.bf16 %v1838, %v1838
        %v1847 = vlaneseq
        %v1848 = vshrl.u32 %v1847, 7
        %v1849 = vsub.s32 0, %v1848
        %v1850 = vrot.slane %v882, %v1849
        %v1853 = vsel %vm1084, %v1843, 0
        %v1856 = vsel %vm1084, %v1844, 0
        %1858 = vmatprep.subr.bf16.mxu0 0
        %1859 = vmatpush1.bf16.xpose.msra.mxu0 %v1856
        %1860 = vmatprep.subr.bf16.mxu0 0
        %1861 = vmatpush1.bf16.xpose.msra.mxu0 0
        %1862 = vmatprep.subr.bf16.mxu0 0
        %1863 = vmatpush1.bf16.xpose.msra.mxu0 0
        %1864 = vmatprep.subr.bf16.mxu0 0
        %1865 = vmatpush1.bf16.xpose.msra.mxu0 0
        %1866 = vmatprep.subr.bf16.mxu0 0
        %1867 = vmatpush1.bf16.xpose.msra.mxu0 0
        %1868 = vmatprep.subr.bf16.mxu0 0
        %1869 = vmatpush1.bf16.xpose.msra.mxu0 0
        %1870 = vmatprep.subr.bf16.mxu0 0
        %1871 = vmatpush1.bf16.xpose.msra.mxu0 0
        %1872 = vmatprep.subr.bf16.mxu0 0
        %1873 = vmatpush1.bf16.xpose.msra.mxu0 0
        %1874 = vmatprep.subr.bf16.mxu0 0
        %1875 = vmatpush1.bf16.xpose.msra.mxu0 0
        %1876 = vmatprep.subr.bf16.mxu0 0
        %1877 = vmatpush1.bf16.xpose.msra.mxu0 0
        %1878 = vmatprep.subr.bf16.mxu0 0
        %1879 = vmatpush1.bf16.xpose.msra.mxu0 0
        %1880 = vmatprep.subr.bf16.mxu0 0
        %1881 = vmatpush1.bf16.xpose.msra.mxu0 0
        %1882 = vmatprep.subr.bf16.mxu0 0
        %1883 = vmatpush1.bf16.xpose.msra.mxu0 0
        %1884 = vmatprep.subr.bf16.mxu0 0
        %1885 = vmatpush1.bf16.xpose.msra.mxu0 0
        %1886 = vmatprep.subr.bf16.mxu0 0
        %1887 = vmatpush1.bf16.xpose.msra.mxu0 0
        %1888 = vmatprep.subr.bf16.mxu0 0
        %1889 = vmatpush1.bf16.xpose.msra.mxu0 0
        %1890 = vmatprep.mubr.bf16.mxu0 0
        %1891 = vmatmul.mubr.bf16.gmra.mrb[0].mxu0 %v1853
        %v1892 = vpop.f32.mrb[0].mxu0
        %v1893 = vadd.f32 %v1850, %v1892
        %v1894 = vpop.f32.mrb[0].mxu0
        %v1895 = vpop.f32.mrb[0].mxu0
        %v1896 = vpop.f32.mrb[0].mxu0
        %1897 = vdwg.mxu0
        %v1898 = vsel %vm1084, %v1893, -inf
        %1899 = vmax.xlane.f32.xlu0 %v1898
        %v1900 = vpop.xlane.xlu0 %1899
        %v1901 = vsub.f32 %v1893, %v1900
        %v1902 = vmul.f32 %v1901, 1.442695
        %v1903 = vpow.pop %v1902
        %v1904 = vsel %vm1084, %v1903, 0.0
        %1905 = vadd.xlane.f32.xlu0 %v1904
        %v1906 = vpop.xlane.xlu0 %1905
        %v1907 = vrcp.pop %v1906
        %v1908 = vmul.f32 %v1903, %v1907
        %v1909 = vpack.c.bf16 %v1908, %v1908
        %v1911 = vsel %vm1084, %v1909, 0
        %v1914 = vsel %vm1146, %v1845, 0
        %1916 = vmatprep.subr.bf16.mxu0 0
        %1917 = vmatpush1.bf16.msra.mxu0 %v1914
        %1918 = vmatprep.subr.bf16.mxu0 0
        %1919 = vmatpush1.bf16.msra.mxu0 0
        %1920 = vmatprep.subr.bf16.mxu0 0
        %1921 = vmatpush1.bf16.msra.mxu0 0
        %1922 = vmatprep.subr.bf16.mxu0 0
        %1923 = vmatpush1.bf16.msra.mxu0 0
        %1924 = vmatprep.subr.bf16.mxu0 0
        %1925 = vmatpush1.bf16.msra.mxu0 0
        %1926 = vmatprep.subr.bf16.mxu0 0
        %1927 = vmatpush1.bf16.msra.mxu0 0
        %1928 = vmatprep.subr.bf16.mxu0 0
        %1929 = vmatpush1.bf16.msra.mxu0 0
        %1930 = vmatprep.subr.bf16.mxu0 0
        %1931 = vmatpush1.bf16.msra.mxu0 0
        %1932 = vmatprep.subr.bf16.mxu0 0
        %1933 = vmatpush1.bf16.msra.mxu0 0
        %1934 = vmatprep.subr.bf16.mxu0 0
        %1935 = vmatpush1.bf16.msra.mxu0 0
        %1936 = vmatprep.subr.bf16.mxu0 0
        %1937 = vmatpush1.bf16.msra.mxu0 0
        %1938 = vmatprep.subr.bf16.mxu0 0
        %1939 = vmatpush1.bf16.msra.mxu0 0
        %1940 = vmatprep.subr.bf16.mxu0 0
        %1941 = vmatpush1.bf16.msra.mxu0 0
        %1942 = vmatprep.subr.bf16.mxu0 0
        %1943 = vmatpush1.bf16.msra.mxu0 0
        %1944 = vmatprep.subr.bf16.mxu0 0
        %1945 = vmatpush1.bf16.msra.mxu0 0
        %1946 = vmatprep.subr.bf16.mxu0 0
        %1947 = vmatpush1.bf16.msra.mxu0 0
        %1948 = vmatprep.mubr.bf16.mxu0 0
        %1949 = vmatmul.mubr.bf16.gmra.mrb[0].mxu0 %v1911
        %v1950 = vpop.f32.mrb[0].mxu0
        %v1951 = vadd.f32 0.0, %v1950
        %v1952 = vpop.f32.mrb[0].mxu0
        %v1953 = vpop.f32.mrb[0].mxu0
        %v1954 = vpop.f32.mrb[0].mxu0
        %1955 = vdwg.mxu0
        %1956 = vst.msk [vmem:[#allocation3] sm:$0xff] %vm1084, %v1951
        %1958 = vrot.lane.b32.xlu0 %v1843, 120
        %v1959 = vpop.permute.xlu0 %1958
        %1961 = vrot.lane.b32.xlu0 %v1844, 120
        %v1962 = vpop.permute.xlu0 %1961
        %v1964 = vsel %vm1084, %v1959, 0
        %v1967 = vsel %vm1084, %v1962, 0
        %1969 = vmatprep.subr.bf16.mxu0 0
        %1970 = vmatpush1.bf16.xpose.msra.mxu0 %v1967
        %1971 = vmatprep.subr.bf16.mxu0 0
        %1972 = vmatpush1.bf16.xpose.msra.mxu0 0
        %1973 = vmatprep.subr.bf16.mxu0 0
        %1974 = vmatpush1.bf16.xpose.msra.mxu0 0
        %1975 = vmatprep.subr.bf16.mxu0 0
        %1976 = vmatpush1.bf16.xpose.msra.mxu0 0
        %1977 = vmatprep.subr.bf16.mxu0 0
        %1978 = vmatpush1.bf16.xpose.msra.mxu0 0
        %1979 = vmatprep.subr.bf16.mxu0 0
        %1980 = vmatpush1.bf16.xpose.msra.mxu0 0
        %1981 = vmatprep.subr.bf16.mxu0 0
        %1982 = vmatpush1.bf16.xpose.msra.mxu0 0
        %1983 = vmatprep.subr.bf16.mxu0 0
        %1984 = vmatpush1.bf16.xpose.msra.mxu0 0
        %1985 = vmatprep.subr.bf16.mxu0 0
        %1986 = vmatpush1.bf16.xpose.msra.mxu0 0
        %1987 = vmatprep.subr.bf16.mxu0 0
        %1988 = vmatpush1.bf16.xpose.msra.mxu0 0
        %1989 = vmatprep.subr.bf16.mxu0 0
        %1990 = vmatpush1.bf16.xpose.msra.mxu0 0
        %1991 = vmatprep.subr.bf16.mxu0 0
        %1992 = vmatpush1.bf16.xpose.msra.mxu0 0
        %1993 = vmatprep.subr.bf16.mxu0 0
        %1994 = vmatpush1.bf16.xpose.msra.mxu0 0
        %1995 = vmatprep.subr.bf16.mxu0 0
        %1996 = vmatpush1.bf16.xpose.msra.mxu0 0
        %1997 = vmatprep.subr.bf16.mxu0 0
        %1998 = vmatpush1.bf16.xpose.msra.mxu0 0
        %1999 = vmatprep.subr.bf16.mxu0 0
        %2000 = vmatpush1.bf16.xpose.msra.mxu0 0
        %2001 = vmatprep.mubr.bf16.mxu0 0
        %2002 = vmatmul.mubr.bf16.gmra.mrb[0].mxu0 %v1964
        %v2003 = vpop.f32.mrb[0].mxu0
        %v2004 = vadd.f32 %v1850, %v2003
        %v2005 = vpop.f32.mrb[0].mxu0
        %v2006 = vpop.f32.mrb[0].mxu0
        %v2007 = vpop.f32.mrb[0].mxu0
        %2008 = vdwg.mxu0
        %v2009 = vsel %vm1084, %v2004, -inf
        %2010 = vmax.xlane.f32.xlu0 %v2009
        %v2011 = vpop.xlane.xlu0 %2010
        %v2012 = vsub.f32 %v2004, %v2011
        %v2013 = vmul.f32 %v2012, 1.442695
        %v2014 = vpow.pop %v2013
        %v2015 = vsel %vm1084, %v2014, 0.0
        %2016 = vadd.xlane.f32.xlu0 %v2015
        %v2017 = vpop.xlane.xlu0 %2016
        %v2018 = vrcp.pop %v2017
        %v2019 = vmul.f32 %v2014, %v2018
        %v2020 = vpack.c.bf16 %v2019, %v2019
        %2022 = vrot.lane.b32.xlu0 %v1845, 120
        %v2023 = vpop.permute.xlu0 %2022
        %v2025 = vsel %vm1084, %v2020, 0
        %v2028 = vsel %vm1146, %v2023, 0
        %2030 = vmatprep.subr.bf16.mxu0 0
        %2031 = vmatpush1.bf16.msra.mxu0 %v2028
        %2032 = vmatprep.subr.bf16.mxu0 0
        %2033 = vmatpush1.bf16.msra.mxu0 0
        %2034 = vmatprep.subr.bf16.mxu0 0
        %2035 = vmatpush1.bf16.msra.mxu0 0
        %2036 = vmatprep.subr.bf16.mxu0 0
        %2037 = vmatpush1.bf16.msra.mxu0 0
        %2038 = vmatprep.subr.bf16.mxu0 0
        %2039 = vmatpush1.bf16.msra.mxu0 0
        %2040 = vmatprep.subr.bf16.mxu0 0
        %2041 = vmatpush1.bf16.msra.mxu0 0
        %2042 = vmatprep.subr.bf16.mxu0 0
        %2043 = vmatpush1.bf16.msra.mxu0 0
        %2044 = vmatprep.subr.bf16.mxu0 0
        %2045 = vmatpush1.bf16.msra.mxu0 0
        %2046 = vmatprep.subr.bf16.mxu0 0
        %2047 = vmatpush1.bf16.msra.mxu0 0
        %2048 = vmatprep.subr.bf16.mxu0 0
        %2049 = vmatpush1.bf16.msra.mxu0 0
        %2050 = vmatprep.subr.bf16.mxu0 0
        %2051 = vmatpush1.bf16.msra.mxu0 0
        %2052 = vmatprep.subr.bf16.mxu0 0
        %2053 = vmatpush1.bf16.msra.mxu0 0
        %2054 = vmatprep.subr.bf16.mxu0 0
        %2055 = vmatpush1.bf16.msra.mxu0 0
        %2056 = vmatprep.subr.bf16.mxu0 0
        %2057 = vmatpush1.bf16.msra.mxu0 0
        %2058 = vmatprep.subr.bf16.mxu0 0
        %2059 = vmatpush1.bf16.msra.mxu0 0
        %2060 = vmatprep.subr.bf16.mxu0 0
        %2061 = vmatpush1.bf16.msra.mxu0 0
        %2062 = vmatprep.mubr.bf16.mxu0 0
        %2063 = vmatmul.mubr.bf16.gmra.mrb[0].mxu0 %v2025
        %v2064 = vpop.f32.mrb[0].mxu0
        %v2065 = vadd.f32 0.0, %v2064
        %v2066 = vpop.f32.mrb[0].mxu0
        %v2067 = vpop.f32.mrb[0].mxu0
        %v2068 = vpop.f32.mrb[0].mxu0
        %2069 = vdwg.mxu0
        %2071 = vrot.lane.b32.xlu0 %v2065, 8
        %v2072 = vpop.permute.xlu0 %2071
        %2074 = vst.msk [vmem:[#allocation3] sm:$0xff] %vm1308, %v2072
        %2075 = vrot.lane.b32.xlu0 %v1843, 112
        %v2076 = vpop.permute.xlu0 %2075
        %2077 = vrot.lane.b32.xlu0 %v1844, 112
        %v2078 = vpop.permute.xlu0 %2077
        %v2080 = vsel %vm1084, %v2076, 0
        %v2083 = vsel %vm1084, %v2078, 0
        %2085 = vmatprep.subr.bf16.mxu0 0
        %2086 = vmatpush1.bf16.xpose.msra.mxu0 %v2083
        %2087 = vmatprep.subr.bf16.mxu0 0
        %2088 = vmatpush1.bf16.xpose.msra.mxu0 0
        %2089 = vmatprep.subr.bf16.mxu0 0
        %2090 = vmatpush1.bf16.xpose.msra.mxu0 0
        %2091 = vmatprep.subr.bf16.mxu0 0
        %2092 = vmatpush1.bf16.xpose.msra.mxu0 0
        %2093 = vmatprep.subr.bf16.mxu0 0
        %2094 = vmatpush1.bf16.xpose.msra.mxu0 0
        %2095 = vmatprep.subr.bf16.mxu0 0
        %2096 = vmatpush1.bf16.xpose.msra.mxu0 0
        %2097 = vmatprep.subr.bf16.mxu0 0
        %2098 = vmatpush1.bf16.xpose.msra.mxu0 0
        %2099 = vmatprep.subr.bf16.mxu0 0
        %2100 = vmatpush1.bf16.xpose.msra.mxu0 0
        %2101 = vmatprep.subr.bf16.mxu0 0
        %2102 = vmatpush1.bf16.xpose.msra.mxu0 0
        %2103 = vmatprep.subr.bf16.mxu0 0
        %2104 = vmatpush1.bf16.xpose.msra.mxu0 0
        %2105 = vmatprep.subr.bf16.mxu0 0
        %2106 = vmatpush1.bf16.xpose.msra.mxu0 0
        %2107 = vmatprep.subr.bf16.mxu0 0
        %2108 = vmatpush1.bf16.xpose.msra.mxu0 0
        %2109 = vmatprep.subr.bf16.mxu0 0
        %2110 = vmatpush1.bf16.xpose.msra.mxu0 0
        %2111 = vmatprep.subr.bf16.mxu0 0
        %2112 = vmatpush1.bf16.xpose.msra.mxu0 0
        %2113 = vmatprep.subr.bf16.mxu0 0
        %2114 = vmatpush1.bf16.xpose.msra.mxu0 0
        %2115 = vmatprep.subr.bf16.mxu0 0
        %2116 = vmatpush1.bf16.xpose.msra.mxu0 0
        %2117 = vmatprep.mubr.bf16.mxu0 0
        %2118 = vmatmul.mubr.bf16.gmra.mrb[0].mxu0 %v2080
        %v2119 = vpop.f32.mrb[0].mxu0
        %v2120 = vadd.f32 %v1850, %v2119
        %v2121 = vpop.f32.mrb[0].mxu0
        %v2122 = vpop.f32.mrb[0].mxu0
        %v2123 = vpop.f32.mrb[0].mxu0
        %2124 = vdwg.mxu0
        %v2125 = vsel %vm1084, %v2120, -inf
        %2126 = vmax.xlane.f32.xlu0 %v2125
        %v2127 = vpop.xlane.xlu0 %2126
        %v2128 = vsub.f32 %v2120, %v2127
        %v2129 = vmul.f32 %v2128, 1.442695
        %v2130 = vpow.pop %v2129
        %v2131 = vsel %vm1084, %v2130, 0.0
        %2132 = vadd.xlane.f32.xlu0 %v2131
        %v2133 = vpop.xlane.xlu0 %2132
        %v2134 = vrcp.pop %v2133
        %v2135 = vmul.f32 %v2130, %v2134
        %v2136 = vpack.c.bf16 %v2135, %v2135
        %2137 = vrot.lane.b32.xlu0 %v1845, 112
        %v2138 = vpop.permute.xlu0 %2137
        %v2140 = vsel %vm1084, %v2136, 0
        %v2143 = vsel %vm1146, %v2138, 0
        %2145 = vmatprep.subr.bf16.mxu0 0
        %2146 = vmatpush1.bf16.msra.mxu0 %v2143
        %2147 = vmatprep.subr.bf16.mxu0 0
        %2148 = vmatpush1.bf16.msra.mxu0 0
        %2149 = vmatprep.subr.bf16.mxu0 0
        %2150 = vmatpush1.bf16.msra.mxu0 0
        %2151 = vmatprep.subr.bf16.mxu0 0
        %2152 = vmatpush1.bf16.msra.mxu0 0
        %2153 = vmatprep.subr.bf16.mxu0 0
        %2154 = vmatpush1.bf16.msra.mxu0 0
        %2155 = vmatprep.subr.bf16.mxu0 0
        %2156 = vmatpush1.bf16.msra.mxu0 0
        %2157 = vmatprep.subr.bf16.mxu0 0
        %2158 = vmatpush1.bf16.msra.mxu0 0
        %2159 = vmatprep.subr.bf16.mxu0 0
        %2160 = vmatpush1.bf16.msra.mxu0 0
        %2161 = vmatprep.subr.bf16.mxu0 0
        %2162 = vmatpush1.bf16.msra.mxu0 0
        %2163 = vmatprep.subr.bf16.mxu0 0
        %2164 = vmatpush1.bf16.msra.mxu0 0
        %2165 = vmatprep.subr.bf16.mxu0 0
        %2166 = vmatpush1.bf16.msra.mxu0 0
        %2167 = vmatprep.subr.bf16.mxu0 0
        %2168 = vmatpush1.bf16.msra.mxu0 0
        %2169 = vmatprep.subr.bf16.mxu0 0
        %2170 = vmatpush1.bf16.msra.mxu0 0
        %2171 = vmatprep.subr.bf16.mxu0 0
        %2172 = vmatpush1.bf16.msra.mxu0 0
        %2173 = vmatprep.subr.bf16.mxu0 0
        %2174 = vmatpush1.bf16.msra.mxu0 0
        %2175 = vmatprep.subr.bf16.mxu0 0
        %2176 = vmatpush1.bf16.msra.mxu0 0
        %2177 = vmatprep.mubr.bf16.mxu0 0
        %2178 = vmatmul.mubr.bf16.gmra.mrb[0].mxu0 %v2140
        %v2179 = vpop.f32.mrb[0].mxu0
        %v2180 = vadd.f32 0.0, %v2179
        %v2181 = vpop.f32.mrb[0].mxu0
        %v2182 = vpop.f32.mrb[0].mxu0
        %v2183 = vpop.f32.mrb[0].mxu0
        %2184 = vdwg.mxu0
        %2186 = vrot.lane.b32.xlu0 %v2180, 16
        %v2187 = vpop.permute.xlu0 %2186
        %2189 = vst.msk [vmem:[#allocation3] sm:$0xff] %vm1424, %v2187
        %2190 = vrot.lane.b32.xlu0 %v1843, 104
        %v2191 = vpop.permute.xlu0 %2190
        %2192 = vrot.lane.b32.xlu0 %v1844, 104
        %v2193 = vpop.permute.xlu0 %2192
        %v2195 = vsel %vm1084, %v2191, 0
        %v2198 = vsel %vm1084, %v2193, 0
        %2200 = vmatprep.subr.bf16.mxu0 0
        %2201 = vmatpush1.bf16.xpose.msra.mxu0 %v2198
        %2202 = vmatprep.subr.bf16.mxu0 0
        %2203 = vmatpush1.bf16.xpose.msra.mxu0 0
        %2204 = vmatprep.subr.bf16.mxu0 0
        %2205 = vmatpush1.bf16.xpose.msra.mxu0 0
        %2206 = vmatprep.subr.bf16.mxu0 0
        %2207 = vmatpush1.bf16.xpose.msra.mxu0 0
        %2208 = vmatprep.subr.bf16.mxu0 0
        %2209 = vmatpush1.bf16.xpose.msra.mxu0 0
        %2210 = vmatprep.subr.bf16.mxu0 0
        %2211 = vmatpush1.bf16.xpose.msra.mxu0 0
        %2212 = vmatprep.subr.bf16.mxu0 0
        %2213 = vmatpush1.bf16.xpose.msra.mxu0 0
        %2214 = vmatprep.subr.bf16.mxu0 0
        %2215 = vmatpush1.bf16.xpose.msra.mxu0 0
        %2216 = vmatprep.subr.bf16.mxu0 0
        %2217 = vmatpush1.bf16.xpose.msra.mxu0 0
        %2218 = vmatprep.subr.bf16.mxu0 0
        %2219 = vmatpush1.bf16.xpose.msra.mxu0 0
        %2220 = vmatprep.subr.bf16.mxu0 0
        %2221 = vmatpush1.bf16.xpose.msra.mxu0 0
        %2222 = vmatprep.subr.bf16.mxu0 0
        %2223 = vmatpush1.bf16.xpose.msra.mxu0 0
        %2224 = vmatprep.subr.bf16.mxu0 0
        %2225 = vmatpush1.bf16.xpose.msra.mxu0 0
        %2226 = vmatprep.subr.bf16.mxu0 0
        %2227 = vmatpush1.bf16.xpose.msra.mxu0 0
        %2228 = vmatprep.subr.bf16.mxu0 0
        %2229 = vmatpush1.bf16.xpose.msra.mxu0 0
        %2230 = vmatprep.subr.bf16.mxu0 0
        %2231 = vmatpush1.bf16.xpose.msra.mxu0 0
        %2232 = vmatprep.mubr.bf16.mxu0 0
        %2233 = vmatmul.mubr.bf16.gmra.mrb[0].mxu0 %v2195
        %v2234 = vpop.f32.mrb[0].mxu0
        %v2235 = vadd.f32 %v1850, %v2234
        %v2236 = vpop.f32.mrb[0].mxu0
        %v2237 = vpop.f32.mrb[0].mxu0
        %v2238 = vpop.f32.mrb[0].mxu0
        %2239 = vdwg.mxu0
        %v2240 = vsel %vm1084, %v2235, -inf
        %2241 = vmax.xlane.f32.xlu0 %v2240
        %v2242 = vpop.xlane.xlu0 %2241
        %v2243 = vsub.f32 %v2235, %v2242
        %v2244 = vmul.f32 %v2243, 1.442695
        %v2245 = vpow.pop %v2244
        %v2246 = vsel %vm1084, %v2245, 0.0
        %2247 = vadd.xlane.f32.xlu0 %v2246
        %v2248 = vpop.xlane.xlu0 %2247
        %v2249 = vrcp.pop %v2248
        %v2250 = vmul.f32 %v2245, %v2249
        %v2251 = vpack.c.bf16 %v2250, %v2250
        %2252 = vrot.lane.b32.xlu0 %v1845, 104
        %v2253 = vpop.permute.xlu0 %2252
        %v2255 = vsel %vm1084, %v2251, 0
        %v2258 = vsel %vm1146, %v2253, 0
        %2260 = vmatprep.subr.bf16.mxu0 0
        %2261 = vmatpush1.bf16.msra.mxu0 %v2258
        %2262 = vmatprep.subr.bf16.mxu0 0
        %2263 = vmatpush1.bf16.msra.mxu0 0
        %2264 = vmatprep.subr.bf16.mxu0 0
        %2265 = vmatpush1.bf16.msra.mxu0 0
        %2266 = vmatprep.subr.bf16.mxu0 0
        %2267 = vmatpush1.bf16.msra.mxu0 0
        %2268 = vmatprep.subr.bf16.mxu0 0
        %2269 = vmatpush1.bf16.msra.mxu0 0
        %2270 = vmatprep.subr.bf16.mxu0 0
        %2271 = vmatpush1.bf16.msra.mxu0 0
        %2272 = vmatprep.subr.bf16.mxu0 0
        %2273 = vmatpush1.bf16.msra.mxu0 0
        %2274 = vmatprep.subr.bf16.mxu0 0
        %2275 = vmatpush1.bf16.msra.mxu0 0
        %2276 = vmatprep.subr.bf16.mxu0 0
        %2277 = vmatpush1.bf16.msra.mxu0 0
        %2278 = vmatprep.subr.bf16.mxu0 0
        %2279 = vmatpush1.bf16.msra.mxu0 0
        %2280 = vmatprep.subr.bf16.mxu0 0
        %2281 = vmatpush1.bf16.msra.mxu0 0
        %2282 = vmatprep.subr.bf16.mxu0 0
        %2283 = vmatpush1.bf16.msra.mxu0 0
        %2284 = vmatprep.subr.bf16.mxu0 0
        %2285 = vmatpush1.bf16.msra.mxu0 0
        %2286 = vmatprep.subr.bf16.mxu0 0
        %2287 = vmatpush1.bf16.msra.mxu0 0
        %2288 = vmatprep.subr.bf16.mxu0 0
        %2289 = vmatpush1.bf16.msra.mxu0 0
        %2290 = vmatprep.subr.bf16.mxu0 0
        %2291 = vmatpush1.bf16.msra.mxu0 0
        %2292 = vmatprep.mubr.bf16.mxu0 0
        %2293 = vmatmul.mubr.bf16.gmra.mrb[0].mxu0 %v2255
        %v2294 = vpop.f32.mrb[0].mxu0
        %v2295 = vadd.f32 0.0, %v2294
        %v2296 = vpop.f32.mrb[0].mxu0
        %v2297 = vpop.f32.mrb[0].mxu0
        %v2298 = vpop.f32.mrb[0].mxu0
        %2299 = vdwg.mxu0
        %2301 = vrot.lane.b32.xlu0 %v2295, 24
        %v2302 = vpop.permute.xlu0 %2301
        %2304 = vst.msk [vmem:[#allocation3] sm:$0xff] %vm1540, %v2302
        %v2305 = vld [vmem:[#allocation3] sm:$0xff]
        %v2306 = vpack.c.bf16 %v2305, %v2305
        %s2307 = scalar_lea.vmem %s848, 16
        %v2308 = vld [vmem:[%s2307] sm:$0xf]
        %v2309 = vld [vmem:[%s2307 + $0x4] sm:$0xf]
        %v2310 = vld [vmem:[%s2307 + $0x8] sm:$0xf]
        %v2311 = vld [vmem:[%s2307 + $0xc] sm:$0xf]
        %s2312 = scalar_lea.vmem %s739, 1 [#allocation14]
        %v2313 = vld [vmem:[%s2312] sm:$0x1]
        %v2315 = vlaneseq
        %v2316 = vshrl.u32 %v2315, 7
        %v2317 = vsub.s32 0, %v2316
        %v2318 = vrot.slane %v2313, %v2317
        %v2324 = vunpack.c.l.b16 %v2308
        %v2325 = vunpack.c.l.b16 %v2309
        %v2326 = vunpack.c.l.b16 %v2310
        %v2327 = vunpack.c.l.b16 %v2311
        %v2328 = vpack.c.b16 %v2325, %v2324
        %v2329 = vpack.c.b16 %v2327, %v2326
        %v2333 = vsel %vm907, %v2306, 0
        %2335 = vmatprep.subr.bf16.mxu0 0
        %2336 = vmatpush1.bf16.msra.mxu0 %v2328
        %2337 = vmatprep.subr.bf16.mxu0 0
        %2338 = vmatpush1.bf16.msra.mxu0 %v2329
        %2339 = vmatprep.subr.bf16.mxu0 0
        %2340 = vmatpush1.bf16.msra.mxu0 0
        %2341 = vmatprep.subr.bf16.mxu0 0
        %2342 = vmatpush1.bf16.msra.mxu0 0
        %2343 = vmatprep.subr.bf16.mxu0 0
        %2344 = vmatpush1.bf16.msra.mxu0 0
        %2345 = vmatprep.subr.bf16.mxu0 0
        %2346 = vmatpush1.bf16.msra.mxu0 0
        %2347 = vmatprep.subr.bf16.mxu0 0
        %2348 = vmatpush1.bf16.msra.mxu0 0
        %2349 = vmatprep.subr.bf16.mxu0 0
        %2350 = vmatpush1.bf16.msra.mxu0 0
        %2351 = vmatprep.subr.bf16.mxu0 0
        %2352 = vmatpush1.bf16.msra.mxu0 0
        %2353 = vmatprep.subr.bf16.mxu0 0
        %2354 = vmatpush1.bf16.msra.mxu0 0
        %2355 = vmatprep.subr.bf16.mxu0 0
        %2356 = vmatpush1.bf16.msra.mxu0 0
        %2357 = vmatprep.subr.bf16.mxu0 0
        %2358 = vmatpush1.bf16.msra.mxu0 0
        %2359 = vmatprep.subr.bf16.mxu0 0
        %2360 = vmatpush1.bf16.msra.mxu0 0
        %2361 = vmatprep.subr.bf16.mxu0 0
        %2362 = vmatpush1.bf16.msra.mxu0 0
        %2363 = vmatprep.subr.bf16.mxu0 0
        %2364 = vmatpush1.bf16.msra.mxu0 0
        %2365 = vmatprep.subr.bf16.mxu0 0
        %2366 = vmatpush1.bf16.msra.mxu0 0
        %2367 = vmatprep.mubr.bf16.mxu0 0
        %2368 = vmatmul.mubr.bf16.gmra.mrb[0].mxu0 %v2333
        %v2369 = vpop.f32.mrb[0].mxu0
        %v2370 = vadd.f32 %v2318, %v2369
        %v2371 = vpop.f32.mrb[0].mxu0
        %v2372 = vpop.f32.mrb[0].mxu0
        %v2373 = vpop.f32.mrb[0].mxu0
        %2374 = vdwg.mxu0
        %v2375 = vadd.f32 %v1640, %v2370
        %s2376 = scalar_lea.vmem %s862, 1
        %v2377 = vld [vmem:[%s2376] sm:$0x1]
        %s2378 = scalar_lea.vmem %s866, 1
        %v2379 = vld [vmem:[%s2378] sm:$0x1]
        %v2380 = vsel %vm907, %v2375, 0.0
        %2381 = vadd.xlane.f32.xlu0 %v2380
        %v2382 = vpop.xlane.xlu0 %2381
        %v2383 = vmul.f32 %v2382, %v1616
        %v2384 = vsub.f32 %v2375, %v2383
        %v2385 = vmul.f32 %v2384, %v2384
        %v2386 = vsel %vm907, %v2385, 0.0
        %2387 = vadd.xlane.f32.xlu0 %v2386
        %v2388 = vpop.xlane.xlu0 %2387
        %v2389 = vmul.f32 %v2388, %v1616
        %v2391 = vlaneseq
        %v2392 = vshrl.u32 %v2391, 7
        %v2393 = vsub.s32 0, %v2392
        %v2394 = vrot.slane %v2377, %v2393
        %v2396 = vmul.f32 %v2394, %v2384
        %v2397 = vadd.f32 %v2389, 1e-06
        %v2398 = vrsqrt.pop %v2397
        %v2399 = vmul.f32 %v2396, %v2398
        %v2401 = vlaneseq
        %v2402 = vshrl.u32 %v2401, 7
        %v2403 = vsub.s32 0, %v2402
        %v2404 = vrot.slane %v2379, %v2403
        %v2406 = vadd.f32 %v2399, %v2404
        %v2407 = vpack.c.bf16 %v2406, %v2406
        %v2408 = vld [vmem:[%s853] sm:$0xf]
        %v2409 = vld [vmem:[%s853 + $0x4] sm:$0xf]
        %v2410 = vld [vmem:[%s853 + $0x8] sm:$0xf]
        %v2411 = vld [vmem:[%s853 + $0xc] sm:$0xf]
        %v2412 = vld [vmem:[%s747] sm:$0x1]
        %v2414 = vlaneseq
        %v2415 = vshrl.u32 %v2414, 7
        %v2416 = vsub.s32 0, %v2415
        %v2417 = vrot.slane %v2412, %v2416
        %v2423 = vunpack.c.l.b16 %v2408
        %v2424 = vunpack.c.l.b16 %v2409
        %v2425 = vunpack.c.l.b16 %v2410
        %v2426 = vunpack.c.l.b16 %v2411
        %v2427 = vpack.c.b16 %v2424, %v2423
        %v2428 = vpack.c.b16 %v2426, %v2425
        %v2432 = vsel %vm907, %v2407, 0
        %2434 = vmatprep.subr.bf16.mxu0 0
        %2435 = vmatpush1.bf16.msra.mxu0 %v2427
        %2436 = vmatprep.subr.bf16.mxu0 0
        %2437 = vmatpush1.bf16.msra.mxu0 %v2428
        %2438 = vmatprep.subr.bf16.mxu0 0
        %2439 = vmatpush1.bf16.msra.mxu0 0
        %2440 = vmatprep.subr.bf16.mxu0 0
        %2441 = vmatpush1.bf16.msra.mxu0 0
        %2442 = vmatprep.subr.bf16.mxu0 0
        %2443 = vmatpush1.bf16.msra.mxu0 0
        %2444 = vmatprep.subr.bf16.mxu0 0
        %2445 = vmatpush1.bf16.msra.mxu0 0
        %2446 = vmatprep.subr.bf16.mxu0 0
        %2447 = vmatpush1.bf16.msra.mxu0 0
        %2448 = vmatprep.subr.bf16.mxu0 0
        %2449 = vmatpush1.bf16.msra.mxu0 0
        %2450 = vmatprep.subr.bf16.mxu0 0
        %2451 = vmatpush1.bf16.msra.mxu0 0
        %2452 = vmatprep.subr.bf16.mxu0 0
        %2453 = vmatpush1.bf16.msra.mxu0 0
        %2454 = vmatprep.subr.bf16.mxu0 0
        %2455 = vmatpush1.bf16.msra.mxu0 0
        %2456 = vmatprep.subr.bf16.mxu0 0
        %2457 = vmatpush1.bf16.msra.mxu0 0
        %2458 = vmatprep.subr.bf16.mxu0 0
        %2459 = vmatpush1.bf16.msra.mxu0 0
        %2460 = vmatprep.subr.bf16.mxu0 0
        %2461 = vmatpush1.bf16.msra.mxu0 0
        %2462 = vmatprep.subr.bf16.mxu0 0
        %2463 = vmatpush1.bf16.msra.mxu0 0
        %2464 = vmatprep.subr.bf16.mxu0 0
        %2465 = vmatpush1.bf16.msra.mxu0 0
        %2466 = vmatprep.mubr.bf16.mxu0 0
        %2467 = vmatmul.mubr.bf16.gmra.mrb[0].mxu0 %v2432
        %v2468 = vpop.f32.mrb[0].mxu0
        %v2469 = vadd.f32 %v2417, %v2468
        %v2470 = vpop.f32.mrb[0].mxu0
        %v2471 = vpop.f32.mrb[0].mxu0
        %v2472 = vpop.f32.mrb[0].mxu0
        %2473 = vdwg.mxu0
        %v2474 = vmax.f32 %v2469, 0.0
        %v2475 = vpack.c.bf16 %v2474, %v2474
        %v2476 = vld [vmem:[%s858] sm:$0xf]
        %v2477 = vld [vmem:[%s858 + $0x4] sm:$0xf]
        %v2478 = vld [vmem:[%s858 + $0x8] sm:$0xf]
        %v2479 = vld [vmem:[%s858 + $0xc] sm:$0xf]
        %v2480 = vld [vmem:[%s858 + $0x10] sm:$0xf]
        %v2481 = vld [vmem:[%s858 + $0x14] sm:$0xf]
        %v2482 = vld [vmem:[%s858 + $0x18] sm:$0xf]
        %v2483 = vld [vmem:[%s858 + $0x1c] sm:$0xf]
        %v2484 = vld [vmem:[%s755] sm:$0x1]
        %v2486 = vlaneseq
        %v2487 = vshrl.u32 %v2486, 7
        %v2488 = vsub.s32 0, %v2487
        %v2489 = vrot.slane %v2484, %v2488
        %v2499 = vunpack.c.l.b16 %v2476
        %v2500 = vunpack.c.l.b16 %v2477
        %v2501 = vunpack.c.l.b16 %v2478
        %v2502 = vunpack.c.l.b16 %v2479
        %v2503 = vunpack.c.l.b16 %v2480
        %v2504 = vunpack.c.l.b16 %v2481
        %v2505 = vunpack.c.l.b16 %v2482
        %v2506 = vunpack.c.l.b16 %v2483
        %v2507 = vpack.c.b16 %v2500, %v2499
        %v2508 = vpack.c.b16 %v2502, %v2501
        %v2509 = vpack.c.b16 %v2504, %v2503
        %v2510 = vpack.c.b16 %v2506, %v2505
        %vm2515 = vcmask 523264
        %v2517 = vsel %vm2515, %v2475, 0
        %2519 = vmatprep.subr.bf16.mxu0 0
        %2520 = vmatpush1.bf16.msra.mxu0 %v2507
        %2521 = vmatprep.subr.bf16.mxu0 0
        %2522 = vmatpush1.bf16.msra.mxu0 %v2508
        %2523 = vmatprep.subr.bf16.mxu0 0
        %2524 = vmatpush1.bf16.msra.mxu0 %v2509
        %2525 = vmatprep.subr.bf16.mxu0 0
        %2526 = vmatpush1.bf16.msra.mxu0 %v2510
        %2527 = vmatprep.subr.bf16.mxu0 0
        %2528 = vmatpush1.bf16.msra.mxu0 0
        %2529 = vmatprep.subr.bf16.mxu0 0
        %2530 = vmatpush1.bf16.msra.mxu0 0
        %2531 = vmatprep.subr.bf16.mxu0 0
        %2532 = vmatpush1.bf16.msra.mxu0 0
        %2533 = vmatprep.subr.bf16.mxu0 0
        %2534 = vmatpush1.bf16.msra.mxu0 0
        %2535 = vmatprep.subr.bf16.mxu0 0
        %2536 = vmatpush1.bf16.msra.mxu0 0
        %2537 = vmatprep.subr.bf16.mxu0 0
        %2538 = vmatpush1.bf16.msra.mxu0 0
        %2539 = vmatprep.subr.bf16.mxu0 0
        %2540 = vmatpush1.bf16.msra.mxu0 0
        %2541 = vmatprep.subr.bf16.mxu0 0
        %2542 = vmatpush1.bf16.msra.mxu0 0
        %2543 = vmatprep.subr.bf16.mxu0 0
        %2544 = vmatpush1.bf16.msra.mxu0 0
        %2545 = vmatprep.subr.bf16.mxu0 0
        %2546 = vmatpush1.bf16.msra.mxu0 0
        %2547 = vmatprep.subr.bf16.mxu0 0
        %2548 = vmatpush1.bf16.msra.mxu0 0
        %2549 = vmatprep.subr.bf16.mxu0 0
        %2550 = vmatpush1.bf16.msra.mxu0 0
        %2551 = vmatprep.mubr.bf16.mxu0 0
        %2552 = vmatmul.mubr.bf16.gmra.mrb[0].mxu0 %v2517
        %v2553 = vpop.f32.mrb[0].mxu0
        %v2554 = vadd.f32 %v2489, %v2553
        %v2555 = vpop.f32.mrb[0].mxu0
        %v2556 = vpop.f32.mrb[0].mxu0
        %v2557 = vpop.f32.mrb[0].mxu0
        %2558 = vdwg.mxu0
        %v2559 = vadd.f32 %v2406, %v2554
        %s2560 = scalar_lea.vmem %s862, 2
        %v2561 = vld [vmem:[%s2560] sm:$0x1]
        %s2562 = scalar_lea.vmem %s866, 2
        %v2563 = vld [vmem:[%s2562] sm:$0x1]
        %v2564 = vsel %vm907, %v2559, 0.0
        %2565 = vadd.xlane.f32.xlu0 %v2564
        %v2566 = vpop.xlane.xlu0 %2565
        %v2567 = vmul.f32 %v2566, %v1616
        %v2568 = vsub.f32 %v2559, %v2567
        %v2569 = vmul.f32 %v2568, %v2568
        %v2570 = vsel %vm907, %v2569, 0.0
        %2571 = vadd.xlane.f32.xlu0 %v2570
        %v2572 = vpop.xlane.xlu0 %2571
        %v2573 = vmul.f32 %v2572, %v1616
        %v2575 = vlaneseq
        %v2576 = vshrl.u32 %v2575, 7
        %v2577 = vsub.s32 0, %v2576
        %v2578 = vrot.slane %v2561, %v2577
        %v2580 = vmul.f32 %v2578, %v2568
        %v2581 = vadd.f32 %v2573, 1e-06
        %v2582 = vrsqrt.pop %v2581
        %v2583 = vmul.f32 %v2580, %v2582
        %v2585 = vlaneseq
        %v2586 = vshrl.u32 %v2585, 7
        %v2587 = vsub.s32 0, %v2586
        %v2588 = vrot.slane %v2563, %v2587
        %v2590 = vadd.f32 %v2583, %v2588
        %2591 = vst.msk [vmem:[#allocation2] sm:$0xff] %vm907, %v2590
        // Predicated region
        $region125: #{tpu_custom_call.1} parent=83 // pred_check
          %p2592 = pneg %p869
        $region126: #{tpu_custom_call.1} parent=83 // pred_check_branch
          %2594 = sbr.rel (%p2592) target = $region128
        $region127: #{tpu_custom_call.1} parent=83 // pred_region
          %v2595 = vld [vmem:[%s14] sm:$0x1]
          %v2596 = vld [vmem:[%s15] sm:$0x1]
          %v2597 = vsel %vm907, %v2590, 0.0
          %2598 = vadd.xlane.f32.xlu0 %v2597
          %v2599 = vpop.xlane.xlu0 %2598
          %v2600 = vmul.f32 %v2599, %v1616
          %v2601 = vsub.f32 %v2590, %v2600
          %v2602 = vmul.f32 %v2601, %v2601
          %v2603 = vsel %vm907, %v2602, 0.0
          %2604 = vadd.xlane.f32.xlu0 %v2603
          %v2605 = vpop.xlane.xlu0 %2604
          %v2606 = vmul.f32 %v2605, %v1616
          %v2608 = vlaneseq
          %v2609 = vshrl.u32 %v2608, 7
          %v2610 = vsub.s32 0, %v2609
          %v2611 = vrot.slane %v2595, %v2610
          %v2613 = vmul.f32 %v2611, %v2601
          %v2614 = vadd.f32 %v2606, 1e-06
          %v2615 = vrsqrt.pop %v2614
          %v2616 = vmul.f32 %v2613, %v2615
          %v2618 = vlaneseq
          %v2619 = vshrl.u32 %v2618, 7
          %v2620 = vsub.s32 0, %v2619
          %v2621 = vrot.slane %v2596, %v2620
          %v2623 = vadd.f32 %v2616, %v2621
          %2624 = vst.msk [vmem:[#allocation17] sm:$0xff] %vm907, %v2623
        $region128: #{tpu_custom_call.1} parent=83 // pred_fallthru
          _
        %s2625 = scalar_lea.vmem [#allocation2], 8
        %v2626 = vld [vmem:[%s2625] sm:$0xff]
        %v2627 = vpack.c.bf16 %v2626, %v2626
        %s2628 = scalar_lea.vmem [#allocation10], 8
        %v2629 = vld [vmem:[%s2628] sm:$0xff]
        %s2630 = scalar_lea.vmem [#allocation9], 1
        %v2631 = vld [vmem:[%s2630] sm:$0x1]
        %s2632 = scalar_lea.vmem [#allocation7], 4
        %v2633 = vld [vmem:[%s2632] sm:$0xf]
        %v2634 = vld [vmem:[%s721] sm:$0xf]
        %v2635 = vld [vmem:[%s721 + $0x4] sm:$0xf]
        %v2636 = vld [vmem:[%s721 + $0x8] sm:$0xf]
        %v2637 = vld [vmem:[%s721 + $0xc] sm:$0xf]
        %v2638 = vld [vmem:[%s730] sm:$0x1]
        %v2640 = vlaneseq
        %v2641 = vshrl.u32 %v2640, 7
        %v2642 = vsub.s32 0, %v2641
        %v2643 = vrot.slane %v2638, %v2642
        %v2649 = vunpack.c.l.b16 %v2634
        %v2650 = vunpack.c.l.b16 %v2635
        %v2651 = vunpack.c.l.b16 %v2636
        %v2652 = vunpack.c.l.b16 %v2637
        %v2653 = vpack.c.b16 %v2650, %v2649
        %v2654 = vpack.c.b16 %v2652, %v2651
        %v2658 = vsel %vm907, %v2627, 0
        %2660 = vmatprep.subr.bf16.mxu0 0
        %2661 = vmatpush1.bf16.msra.mxu0 %v2653
        %2662 = vmatprep.subr.bf16.mxu0 0
        %2663 = vmatpush1.bf16.msra.mxu0 %v2654
        %2664 = vmatprep.subr.bf16.mxu0 0
        %2665 = vmatpush1.bf16.msra.mxu0 0
        %2666 = vmatprep.subr.bf16.mxu0 0
        %2667 = vmatpush1.bf16.msra.mxu0 0
        %2668 = vmatprep.subr.bf16.mxu0 0
        %2669 = vmatpush1.bf16.msra.mxu0 0
        %2670 = vmatprep.subr.bf16.mxu0 0
        %2671 = vmatpush1.bf16.msra.mxu0 0
        %2672 = vmatprep.subr.bf16.mxu0 0
        %2673 = vmatpush1.bf16.msra.mxu0 0
        %2674 = vmatprep.subr.bf16.mxu0 0
        %2675 = vmatpush1.bf16.msra.mxu0 0
        %2676 = vmatprep.subr.bf16.mxu0 0
        %2677 = vmatpush1.bf16.msra.mxu0 0
        %2678 = vmatprep.subr.bf16.mxu0 0
        %2679 = vmatpush1.bf16.msra.mxu0 0
        %2680 = vmatprep.subr.bf16.mxu0 0
        %2681 = vmatpush1.bf16.msra.mxu0 0
        %2682 = vmatprep.subr.bf16.mxu0 0
        %2683 = vmatpush1.bf16.msra.mxu0 0
        %2684 = vmatprep.subr.bf16.mxu0 0
        %2685 = vmatpush1.bf16.msra.mxu0 0
        %2686 = vmatprep.subr.bf16.mxu0 0
        %2687 = vmatpush1.bf16.msra.mxu0 0
        %2688 = vmatprep.subr.bf16.mxu0 0
        %2689 = vmatpush1.bf16.msra.mxu0 0
        %2690 = vmatprep.subr.bf16.mxu0 0
        %2691 = vmatpush1.bf16.msra.mxu0 0
        %2692 = vmatprep.mubr.bf16.mxu0 0
        %2693 = vmatmul.mubr.bf16.gmra.mrb[0].mxu0 %v2658
        %v2694 = vpop.f32.mrb[0].mxu0
        %v2695 = vadd.f32 %v2643, %v2694
        %v2696 = vpop.f32.mrb[0].mxu0
        %v2697 = vpop.f32.mrb[0].mxu0
        %v2698 = vpop.f32.mrb[0].mxu0
        %2699 = vdwg.mxu0
        %v2700 = vld [vmem:[%s951] sm:$0xf]
        %v2701 = vld [vmem:[%s951 + $0x4] sm:$0xf]
        %v2702 = vld [vmem:[%s951 + $0x8] sm:$0xf]
        %v2703 = vld [vmem:[%s951 + $0xc] sm:$0xf]
        %v2704 = vld [vmem:[%s956] sm:$0x1]
        %v2706 = vlaneseq
        %v2707 = vshrl.u32 %v2706, 7
        %v2708 = vsub.s32 0, %v2707
        %v2709 = vrot.slane %v2704, %v2708
        %v2715 = vunpack.c.l.b16 %v2700
        %v2716 = vunpack.c.l.b16 %v2701
        %v2717 = vunpack.c.l.b16 %v2702
        %v2718 = vunpack.c.l.b16 %v2703
        %v2719 = vpack.c.b16 %v2716, %v2715
        %v2720 = vpack.c.b16 %v2718, %v2717
        %2723 = vmatprep.subr.bf16.mxu0 0
        %2724 = vmatpush1.bf16.msra.mxu0 %v2719
        %2725 = vmatprep.subr.bf16.mxu0 0
        %2726 = vmatpush1.bf16.msra.mxu0 %v2720
        %2727 = vmatprep.subr.bf16.mxu0 0
        %2728 = vmatpush1.bf16.msra.mxu0 0
        %2729 = vmatprep.subr.bf16.mxu0 0
        %2730 = vmatpush1.bf16.msra.mxu0 0
        %2731 = vmatprep.subr.bf16.mxu0 0
        %2732 = vmatpush1.bf16.msra.mxu0 0
        %2733 = vmatprep.subr.bf16.mxu0 0
        %2734 = vmatpush1.bf16.msra.mxu0 0
        %2735 = vmatprep.subr.bf16.mxu0 0
        %2736 = vmatpush1.bf16.msra.mxu0 0
        %2737 = vmatprep.subr.bf16.mxu0 0
        %2738 = vmatpush1.bf16.msra.mxu0 0
        %2739 = vmatprep.subr.bf16.mxu0 0
        %2740 = vmatpush1.bf16.msra.mxu0 0
        %2741 = vmatprep.subr.bf16.mxu0 0
        %2742 = vmatpush1.bf16.msra.mxu0 0
        %2743 = vmatprep.subr.bf16.mxu0 0
        %2744 = vmatpush1.bf16.msra.mxu0 0
        %2745 = vmatprep.subr.bf16.mxu0 0
        %2746 = vmatpush1.bf16.msra.mxu0 0
        %2747 = vmatprep.subr.bf16.mxu0 0
        %2748 = vmatpush1.bf16.msra.mxu0 0
        %2749 = vmatprep.subr.bf16.mxu0 0
        %2750 = vmatpush1.bf16.msra.mxu0 0
        %2751 = vmatprep.subr.bf16.mxu0 0
        %2752 = vmatpush1.bf16.msra.mxu0 0
        %2753 = vmatprep.subr.bf16.mxu0 0
        %2754 = vmatpush1.bf16.msra.mxu0 0
        %2755 = vmatprep.mubr.bf16.mxu0 0
        %2756 = vmatmul.mubr.bf16.gmra.mrb[0].mxu0 %v2658
        %v2757 = vpop.f32.mrb[0].mxu0
        %v2758 = vadd.f32 %v2709, %v2757
        %v2759 = vpop.f32.mrb[0].mxu0
        %v2760 = vpop.f32.mrb[0].mxu0
        %v2761 = vpop.f32.mrb[0].mxu0
        %2762 = vdwg.mxu0
        %v2763 = vld [vmem:[%s1016] sm:$0xf]
        %v2764 = vld [vmem:[%s1016 + $0x4] sm:$0xf]
        %v2765 = vld [vmem:[%s1016 + $0x8] sm:$0xf]
        %v2766 = vld [vmem:[%s1016 + $0xc] sm:$0xf]
        %v2767 = vld [vmem:[%s1021] sm:$0x1]
        %v2769 = vlaneseq
        %v2770 = vshrl.u32 %v2769, 7
        %v2771 = vsub.s32 0, %v2770
        %v2772 = vrot.slane %v2767, %v2771
        %v2778 = vunpack.c.l.b16 %v2763
        %v2779 = vunpack.c.l.b16 %v2764
        %v2780 = vunpack.c.l.b16 %v2765
        %v2781 = vunpack.c.l.b16 %v2766
        %v2782 = vpack.c.b16 %v2779, %v2778
        %v2783 = vpack.c.b16 %v2781, %v2780
        %2786 = vmatprep.subr.bf16.mxu0 0
        %2787 = vmatpush1.bf16.msra.mxu0 %v2782
        %2788 = vmatprep.subr.bf16.mxu0 0
        %2789 = vmatpush1.bf16.msra.mxu0 %v2783
        %2790 = vmatprep.subr.bf16.mxu0 0
        %2791 = vmatpush1.bf16.msra.mxu0 0
        %2792 = vmatprep.subr.bf16.mxu0 0
        %2793 = vmatpush1.bf16.msra.mxu0 0
        %2794 = vmatprep.subr.bf16.mxu0 0
        %2795 = vmatpush1.bf16.msra.mxu0 0
        %2796 = vmatprep.subr.bf16.mxu0 0
        %2797 = vmatpush1.bf16.msra.mxu0 0
        %2798 = vmatprep.subr.bf16.mxu0 0
        %2799 = vmatpush1.bf16.msra.mxu0 0
        %2800 = vmatprep.subr.bf16.mxu0 0
        %2801 = vmatpush1.bf16.msra.mxu0 0
        %2802 = vmatprep.subr.bf16.mxu0 0
        %2803 = vmatpush1.bf16.msra.mxu0 0
        %2804 = vmatprep.subr.bf16.mxu0 0
        %2805 = vmatpush1.bf16.msra.mxu0 0
        %2806 = vmatprep.subr.bf16.mxu0 0
        %2807 = vmatpush1.bf16.msra.mxu0 0
        %2808 = vmatprep.subr.bf16.mxu0 0
        %2809 = vmatpush1.bf16.msra.mxu0 0
        %2810 = vmatprep.subr.bf16.mxu0 0
        %2811 = vmatpush1.bf16.msra.mxu0 0
        %2812 = vmatprep.subr.bf16.mxu0 0
        %2813 = vmatpush1.bf16.msra.mxu0 0
        %2814 = vmatprep.subr.bf16.mxu0 0
        %2815 = vmatpush1.bf16.msra.mxu0 0
        %2816 = vmatprep.subr.bf16.mxu0 0
        %2817 = vmatpush1.bf16.msra.mxu0 0
        %2818 = vmatprep.mubr.bf16.mxu0 0
        %2819 = vmatmul.mubr.bf16.gmra.mrb[0].mxu0 %v2658
        %v2820 = vpop.f32.mrb[0].mxu0
        %v2821 = vadd.f32 %v2772, %v2820
        %v2822 = vpop.f32.mrb[0].mxu0
        %v2823 = vpop.f32.mrb[0].mxu0
        %v2824 = vpop.f32.mrb[0].mxu0
        %2825 = vdwg.mxu0
        %v2826 = vpack.c.bf16 %v2695, %v2695
        %v2827 = vpack.c.bf16 %v2758, %v2758
        %v2828 = vpack.c.bf16 %v2821, %v2821
        %v2830 = vsel %vm1084, %v2826, 0
        %v2833 = vsel %vm1084, %v2827, 0
        %2835 = vmatprep.subr.bf16.mxu0 0
        %2836 = vmatpush1.bf16.xpose.msra.mxu0 %v2833
        %2837 = vmatprep.subr.bf16.mxu0 0
        %2838 = vmatpush1.bf16.xpose.msra.mxu0 0
        %2839 = vmatprep.subr.bf16.mxu0 0
        %2840 = vmatpush1.bf16.xpose.msra.mxu0 0
        %2841 = vmatprep.subr.bf16.mxu0 0
        %2842 = vmatpush1.bf16.xpose.msra.mxu0 0
        %2843 = vmatprep.subr.bf16.mxu0 0
        %2844 = vmatpush1.bf16.xpose.msra.mxu0 0
        %2845 = vmatprep.subr.bf16.mxu0 0
        %2846 = vmatpush1.bf16.xpose.msra.mxu0 0
        %2847 = vmatprep.subr.bf16.mxu0 0
        %2848 = vmatpush1.bf16.xpose.msra.mxu0 0
        %2849 = vmatprep.subr.bf16.mxu0 0
        %2850 = vmatpush1.bf16.xpose.msra.mxu0 0
        %2851 = vmatprep.subr.bf16.mxu0 0
        %2852 = vmatpush1.bf16.xpose.msra.mxu0 0
        %2853 = vmatprep.subr.bf16.mxu0 0
        %2854 = vmatpush1.bf16.xpose.msra.mxu0 0
        %2855 = vmatprep.subr.bf16.mxu0 0
        %2856 = vmatpush1.bf16.xpose.msra.mxu0 0
        %2857 = vmatprep.subr.bf16.mxu0 0
        %2858 = vmatpush1.bf16.xpose.msra.mxu0 0
        %2859 = vmatprep.subr.bf16.mxu0 0
        %2860 = vmatpush1.bf16.xpose.msra.mxu0 0
        %2861 = vmatprep.subr.bf16.mxu0 0
        %2862 = vmatpush1.bf16.xpose.msra.mxu0 0
        %2863 = vmatprep.subr.bf16.mxu0 0
        %2864 = vmatpush1.bf16.xpose.msra.mxu0 0
        %2865 = vmatprep.subr.bf16.mxu0 0
        %2866 = vmatpush1.bf16.xpose.msra.mxu0 0
        %2867 = vmatprep.mubr.bf16.mxu0 0
        %2868 = vmatmul.mubr.bf16.gmra.mrb[0].mxu0 %v2830
        %v2869 = vpop.f32.mrb[0].mxu0
        %v2870 = vadd.f32 %v2629, %v2869
        %v2871 = vpop.f32.mrb[0].mxu0
        %v2872 = vpop.f32.mrb[0].mxu0
        %v2873 = vpop.f32.mrb[0].mxu0
        %2874 = vdwg.mxu0
        %v2875 = vsel %vm1084, %v2870, -inf
        %2876 = vmax.xlane.f32.xlu0 %v2875
        %v2877 = vpop.xlane.xlu0 %2876
        %v2878 = vsub.f32 %v2870, %v2877
        %v2879 = vmul.f32 %v2878, 1.442695
        %v2880 = vpow.pop %v2879
        %v2881 = vsel %vm1084, %v2880, 0.0
        %2882 = vadd.xlane.f32.xlu0 %v2881
        %v2883 = vpop.xlane.xlu0 %2882
        %v2884 = vrcp.pop %v2883
        %v2885 = vmul.f32 %v2880, %v2884
        %v2886 = vpack.c.bf16 %v2885, %v2885
        %v2888 = vsel %vm1084, %v2886, 0
        %v2891 = vsel %vm1146, %v2828, 0
        %2893 = vmatprep.subr.bf16.mxu0 0
        %2894 = vmatpush1.bf16.msra.mxu0 %v2891
        %2895 = vmatprep.subr.bf16.mxu0 0
        %2896 = vmatpush1.bf16.msra.mxu0 0
        %2897 = vmatprep.subr.bf16.mxu0 0
        %2898 = vmatpush1.bf16.msra.mxu0 0
        %2899 = vmatprep.subr.bf16.mxu0 0
        %2900 = vmatpush1.bf16.msra.mxu0 0
        %2901 = vmatprep.subr.bf16.mxu0 0
        %2902 = vmatpush1.bf16.msra.mxu0 0
        %2903 = vmatprep.subr.bf16.mxu0 0
        %2904 = vmatpush1.bf16.msra.mxu0 0
        %2905 = vmatprep.subr.bf16.mxu0 0
        %2906 = vmatpush1.bf16.msra.mxu0 0
        %2907 = vmatprep.subr.bf16.mxu0 0
        %2908 = vmatpush1.bf16.msra.mxu0 0
        %2909 = vmatprep.subr.bf16.mxu0 0
        %2910 = vmatpush1.bf16.msra.mxu0 0
        %2911 = vmatprep.subr.bf16.mxu0 0
        %2912 = vmatpush1.bf16.msra.mxu0 0
        %2913 = vmatprep.subr.bf16.mxu0 0
        %2914 = vmatpush1.bf16.msra.mxu0 0
        %2915 = vmatprep.subr.bf16.mxu0 0
        %2916 = vmatpush1.bf16.msra.mxu0 0
        %2917 = vmatprep.subr.bf16.mxu0 0
        %2918 = vmatpush1.bf16.msra.mxu0 0
        %2919 = vmatprep.subr.bf16.mxu0 0
        %2920 = vmatpush1.bf16.msra.mxu0 0
        %2921 = vmatprep.subr.bf16.mxu0 0
        %2922 = vmatpush1.bf16.msra.mxu0 0
        %2923 = vmatprep.subr.bf16.mxu0 0
        %2924 = vmatpush1.bf16.msra.mxu0 0
        %2925 = vmatprep.mubr.bf16.mxu0 0
        %2926 = vmatmul.mubr.bf16.gmra.mrb[0].mxu0 %v2888
        %v2927 = vpop.f32.mrb[0].mxu0
        %v2928 = vadd.f32 0.0, %v2927
        %v2929 = vpop.f32.mrb[0].mxu0
        %v2930 = vpop.f32.mrb[0].mxu0
        %v2931 = vpop.f32.mrb[0].mxu0
        %2932 = vdwg.mxu0
        %2933 = vst.msk [vmem:[#allocation3] sm:$0xff] %vm1084, %v2928
        %2935 = vrot.lane.b32.xlu0 %v2826, 120
        %v2936 = vpop.permute.xlu0 %2935
        %2938 = vrot.lane.b32.xlu0 %v2827, 120
        %v2939 = vpop.permute.xlu0 %2938
        %v2941 = vsel %vm1084, %v2936, 0
        %v2944 = vsel %vm1084, %v2939, 0
        %2946 = vmatprep.subr.bf16.mxu0 0
        %2947 = vmatpush1.bf16.xpose.msra.mxu0 %v2944
        %2948 = vmatprep.subr.bf16.mxu0 0
        %2949 = vmatpush1.bf16.xpose.msra.mxu0 0
        %2950 = vmatprep.subr.bf16.mxu0 0
        %2951 = vmatpush1.bf16.xpose.msra.mxu0 0
        %2952 = vmatprep.subr.bf16.mxu0 0
        %2953 = vmatpush1.bf16.xpose.msra.mxu0 0
        %2954 = vmatprep.subr.bf16.mxu0 0
        %2955 = vmatpush1.bf16.xpose.msra.mxu0 0
        %2956 = vmatprep.subr.bf16.mxu0 0
        %2957 = vmatpush1.bf16.xpose.msra.mxu0 0
        %2958 = vmatprep.subr.bf16.mxu0 0
        %2959 = vmatpush1.bf16.xpose.msra.mxu0 0
        %2960 = vmatprep.subr.bf16.mxu0 0
        %2961 = vmatpush1.bf16.xpose.msra.mxu0 0
        %2962 = vmatprep.subr.bf16.mxu0 0
        %2963 = vmatpush1.bf16.xpose.msra.mxu0 0
        %2964 = vmatprep.subr.bf16.mxu0 0
        %2965 = vmatpush1.bf16.xpose.msra.mxu0 0
        %2966 = vmatprep.subr.bf16.mxu0 0
        %2967 = vmatpush1.bf16.xpose.msra.mxu0 0
        %2968 = vmatprep.subr.bf16.mxu0 0
        %2969 = vmatpush1.bf16.xpose.msra.mxu0 0
        %2970 = vmatprep.subr.bf16.mxu0 0
        %2971 = vmatpush1.bf16.xpose.msra.mxu0 0
        %2972 = vmatprep.subr.bf16.mxu0 0
        %2973 = vmatpush1.bf16.xpose.msra.mxu0 0
        %2974 = vmatprep.subr.bf16.mxu0 0
        %2975 = vmatpush1.bf16.xpose.msra.mxu0 0
        %2976 = vmatprep.subr.bf16.mxu0 0
        %2977 = vmatpush1.bf16.xpose.msra.mxu0 0
        %2978 = vmatprep.mubr.bf16.mxu0 0
        %2979 = vmatmul.mubr.bf16.gmra.mrb[0].mxu0 %v2941
        %v2980 = vpop.f32.mrb[0].mxu0
        %v2981 = vadd.f32 %v2629, %v2980
        %v2982 = vpop.f32.mrb[0].mxu0
        %v2983 = vpop.f32.mrb[0].mxu0
        %v2984 = vpop.f32.mrb[0].mxu0
        %2985 = vdwg.mxu0
        %v2986 = vsel %vm1084, %v2981, -inf
        %2987 = vmax.xlane.f32.xlu0 %v2986
        %v2988 = vpop.xlane.xlu0 %2987
        %v2989 = vsub.f32 %v2981, %v2988
        %v2990 = vmul.f32 %v2989, 1.442695
        %v2991 = vpow.pop %v2990
        %v2992 = vsel %vm1084, %v2991, 0.0
        %2993 = vadd.xlane.f32.xlu0 %v2992
        %v2994 = vpop.xlane.xlu0 %2993
        %v2995 = vrcp.pop %v2994
        %v2996 = vmul.f32 %v2991, %v2995
        %v2997 = vpack.c.bf16 %v2996, %v2996
        %2999 = vrot.lane.b32.xlu0 %v2828, 120
        %v3000 = vpop.permute.xlu0 %2999
        %v3002 = vsel %vm1084, %v2997, 0
        %v3005 = vsel %vm1146, %v3000, 0
        %3007 = vmatprep.subr.bf16.mxu0 0
        %3008 = vmatpush1.bf16.msra.mxu0 %v3005
        %3009 = vmatprep.subr.bf16.mxu0 0
        %3010 = vmatpush1.bf16.msra.mxu0 0
        %3011 = vmatprep.subr.bf16.mxu0 0
        %3012 = vmatpush1.bf16.msra.mxu0 0
        %3013 = vmatprep.subr.bf16.mxu0 0
        %3014 = vmatpush1.bf16.msra.mxu0 0
        %3015 = vmatprep.subr.bf16.mxu0 0
        %3016 = vmatpush1.bf16.msra.mxu0 0
        %3017 = vmatprep.subr.bf16.mxu0 0
        %3018 = vmatpush1.bf16.msra.mxu0 0
        %3019 = vmatprep.subr.bf16.mxu0 0
        %3020 = vmatpush1.bf16.msra.mxu0 0
        %3021 = vmatprep.subr.bf16.mxu0 0
        %3022 = vmatpush1.bf16.msra.mxu0 0
        %3023 = vmatprep.subr.bf16.mxu0 0
        %3024 = vmatpush1.bf16.msra.mxu0 0
        %3025 = vmatprep.subr.bf16.mxu0 0
        %3026 = vmatpush1.bf16.msra.mxu0 0
        %3027 = vmatprep.subr.bf16.mxu0 0
        %3028 = vmatpush1.bf16.msra.mxu0 0
        %3029 = vmatprep.subr.bf16.mxu0 0
        %3030 = vmatpush1.bf16.msra.mxu0 0
        %3031 = vmatprep.subr.bf16.mxu0 0
        %3032 = vmatpush1.bf16.msra.mxu0 0
        %3033 = vmatprep.subr.bf16.mxu0 0
        %3034 = vmatpush1.bf16.msra.mxu0 0
        %3035 = vmatprep.subr.bf16.mxu0 0
        %3036 = vmatpush1.bf16.msra.mxu0 0
        %3037 = vmatprep.subr.bf16.mxu0 0
        %3038 = vmatpush1.bf16.msra.mxu0 0
        %3039 = vmatprep.mubr.bf16.mxu0 0
        %3040 = vmatmul.mubr.bf16.gmra.mrb[0].mxu0 %v3002
        %v3041 = vpop.f32.mrb[0].mxu0
        %v3042 = vadd.f32 0.0, %v3041
        %v3043 = vpop.f32.mrb[0].mxu0
        %v3044 = vpop.f32.mrb[0].mxu0
        %v3045 = vpop.f32.mrb[0].mxu0
        %3046 = vdwg.mxu0
        %3048 = vrot.lane.b32.xlu0 %v3042, 8
        %v3049 = vpop.permute.xlu0 %3048
        %3051 = vst.msk [vmem:[#allocation3] sm:$0xff] %vm1308, %v3049
        %3052 = vrot.lane.b32.xlu0 %v2826, 112
        %v3053 = vpop.permute.xlu0 %3052
        %3054 = vrot.lane.b32.xlu0 %v2827, 112
        %v3055 = vpop.permute.xlu0 %3054
        %v3057 = vsel %vm1084, %v3053, 0
        %v3060 = vsel %vm1084, %v3055, 0
        %3062 = vmatprep.subr.bf16.mxu0 0
        %3063 = vmatpush1.bf16.xpose.msra.mxu0 %v3060
        %3064 = vmatprep.subr.bf16.mxu0 0
        %3065 = vmatpush1.bf16.xpose.msra.mxu0 0
        %3066 = vmatprep.subr.bf16.mxu0 0
        %3067 = vmatpush1.bf16.xpose.msra.mxu0 0
        %3068 = vmatprep.subr.bf16.mxu0 0
        %3069 = vmatpush1.bf16.xpose.msra.mxu0 0
        %3070 = vmatprep.subr.bf16.mxu0 0
        %3071 = vmatpush1.bf16.xpose.msra.mxu0 0
        %3072 = vmatprep.subr.bf16.mxu0 0
        %3073 = vmatpush1.bf16.xpose.msra.mxu0 0
        %3074 = vmatprep.subr.bf16.mxu0 0
        %3075 = vmatpush1.bf16.xpose.msra.mxu0 0
        %3076 = vmatprep.subr.bf16.mxu0 0
        %3077 = vmatpush1.bf16.xpose.msra.mxu0 0
        %3078 = vmatprep.subr.bf16.mxu0 0
        %3079 = vmatpush1.bf16.xpose.msra.mxu0 0
        %3080 = vmatprep.subr.bf16.mxu0 0
        %3081 = vmatpush1.bf16.xpose.msra.mxu0 0
        %3082 = vmatprep.subr.bf16.mxu0 0
        %3083 = vmatpush1.bf16.xpose.msra.mxu0 0
        %3084 = vmatprep.subr.bf16.mxu0 0
        %3085 = vmatpush1.bf16.xpose.msra.mxu0 0
        %3086 = vmatprep.subr.bf16.mxu0 0
        %3087 = vmatpush1.bf16.xpose.msra.mxu0 0
        %3088 = vmatprep.subr.bf16.mxu0 0
        %3089 = vmatpush1.bf16.xpose.msra.mxu0 0
        %3090 = vmatprep.subr.bf16.mxu0 0
        %3091 = vmatpush1.bf16.xpose.msra.mxu0 0
        %3092 = vmatprep.subr.bf16.mxu0 0
        %3093 = vmatpush1.bf16.xpose.msra.mxu0 0
        %3094 = vmatprep.mubr.bf16.mxu0 0
        %3095 = vmatmul.mubr.bf16.gmra.mrb[0].mxu0 %v3057
        %v3096 = vpop.f32.mrb[0].mxu0
        %v3097 = vadd.f32 %v2629, %v3096
        %v3098 = vpop.f32.mrb[0].mxu0
        %v3099 = vpop.f32.mrb[0].mxu0
        %v3100 = vpop.f32.mrb[0].mxu0
        %3101 = vdwg.mxu0
        %v3102 = vsel %vm1084, %v3097, -inf
        %3103 = vmax.xlane.f32.xlu0 %v3102
        %v3104 = vpop.xlane.xlu0 %3103
        %v3105 = vsub.f32 %v3097, %v3104
        %v3106 = vmul.f32 %v3105, 1.442695
        %v3107 = vpow.pop %v3106
        %v3108 = vsel %vm1084, %v3107, 0.0
        %3109 = vadd.xlane.f32.xlu0 %v3108
        %v3110 = vpop.xlane.xlu0 %3109
        %v3111 = vrcp.pop %v3110
        %v3112 = vmul.f32 %v3107, %v3111
        %v3113 = vpack.c.bf16 %v3112, %v3112
        %3114 = vrot.lane.b32.xlu0 %v2828, 112
        %v3115 = vpop.permute.xlu0 %3114
        %v3117 = vsel %vm1084, %v3113, 0
        %v3120 = vsel %vm1146, %v3115, 0
        %3122 = vmatprep.subr.bf16.mxu0 0
        %3123 = vmatpush1.bf16.msra.mxu0 %v3120
        %3124 = vmatprep.subr.bf16.mxu0 0
        %3125 = vmatpush1.bf16.msra.mxu0 0
        %3126 = vmatprep.subr.bf16.mxu0 0
        %3127 = vmatpush1.bf16.msra.mxu0 0
        %3128 = vmatprep.subr.bf16.mxu0 0
        %3129 = vmatpush1.bf16.msra.mxu0 0
        %3130 = vmatprep.subr.bf16.mxu0 0
        %3131 = vmatpush1.bf16.msra.mxu0 0
        %3132 = vmatprep.subr.bf16.mxu0 0
        %3133 = vmatpush1.bf16.msra.mxu0 0
        %3134 = vmatprep.subr.bf16.mxu0 0
        %3135 = vmatpush1.bf16.msra.mxu0 0
        %3136 = vmatprep.subr.bf16.mxu0 0
        %3137 = vmatpush1.bf16.msra.mxu0 0
        %3138 = vmatprep.subr.bf16.mxu0 0
        %3139 = vmatpush1.bf16.msra.mxu0 0
        %3140 = vmatprep.subr.bf16.mxu0 0
        %3141 = vmatpush1.bf16.msra.mxu0 0
        %3142 = vmatprep.subr.bf16.mxu0 0
        %3143 = vmatpush1.bf16.msra.mxu0 0
        %3144 = vmatprep.subr.bf16.mxu0 0
        %3145 = vmatpush1.bf16.msra.mxu0 0
        %3146 = vmatprep.subr.bf16.mxu0 0
        %3147 = vmatpush1.bf16.msra.mxu0 0
        %3148 = vmatprep.subr.bf16.mxu0 0
        %3149 = vmatpush1.bf16.msra.mxu0 0
        %3150 = vmatprep.subr.bf16.mxu0 0
        %3151 = vmatpush1.bf16.msra.mxu0 0
        %3152 = vmatprep.subr.bf16.mxu0 0
        %3153 = vmatpush1.bf16.msra.mxu0 0
        %3154 = vmatprep.mubr.bf16.mxu0 0
        %3155 = vmatmul.mubr.bf16.gmra.mrb[0].mxu0 %v3117
        %v3156 = vpop.f32.mrb[0].mxu0
        %v3157 = vadd.f32 0.0, %v3156
        %v3158 = vpop.f32.mrb[0].mxu0
        %v3159 = vpop.f32.mrb[0].mxu0
        %v3160 = vpop.f32.mrb[0].mxu0
        %3161 = vdwg.mxu0
        %3163 = vrot.lane.b32.xlu0 %v3157, 16
        %v3164 = vpop.permute.xlu0 %3163
        %3166 = vst.msk [vmem:[#allocation3] sm:$0xff] %vm1424, %v3164
        %3167 = vrot.lane.b32.xlu0 %v2826, 104
        %v3168 = vpop.permute.xlu0 %3167
        %3169 = vrot.lane.b32.xlu0 %v2827, 104
        %v3170 = vpop.permute.xlu0 %3169
        %v3172 = vsel %vm1084, %v3168, 0
        %v3175 = vsel %vm1084, %v3170, 0
        %3177 = vmatprep.subr.bf16.mxu0 0
        %3178 = vmatpush1.bf16.xpose.msra.mxu0 %v3175
        %3179 = vmatprep.subr.bf16.mxu0 0
        %3180 = vmatpush1.bf16.xpose.msra.mxu0 0
        %3181 = vmatprep.subr.bf16.mxu0 0
        %3182 = vmatpush1.bf16.xpose.msra.mxu0 0
        %3183 = vmatprep.subr.bf16.mxu0 0
        %3184 = vmatpush1.bf16.xpose.msra.mxu0 0
        %3185 = vmatprep.subr.bf16.mxu0 0
        %3186 = vmatpush1.bf16.xpose.msra.mxu0 0
        %3187 = vmatprep.subr.bf16.mxu0 0
        %3188 = vmatpush1.bf16.xpose.msra.mxu0 0
        %3189 = vmatprep.subr.bf16.mxu0 0
        %3190 = vmatpush1.bf16.xpose.msra.mxu0 0
        %3191 = vmatprep.subr.bf16.mxu0 0
        %3192 = vmatpush1.bf16.xpose.msra.mxu0 0
        %3193 = vmatprep.subr.bf16.mxu0 0
        %3194 = vmatpush1.bf16.xpose.msra.mxu0 0
        %3195 = vmatprep.subr.bf16.mxu0 0
        %3196 = vmatpush1.bf16.xpose.msra.mxu0 0
        %3197 = vmatprep.subr.bf16.mxu0 0
        %3198 = vmatpush1.bf16.xpose.msra.mxu0 0
        %3199 = vmatprep.subr.bf16.mxu0 0
        %3200 = vmatpush1.bf16.xpose.msra.mxu0 0
        %3201 = vmatprep.subr.bf16.mxu0 0
        %3202 = vmatpush1.bf16.xpose.msra.mxu0 0
        %3203 = vmatprep.subr.bf16.mxu0 0
        %3204 = vmatpush1.bf16.xpose.msra.mxu0 0
        %3205 = vmatprep.subr.bf16.mxu0 0
        %3206 = vmatpush1.bf16.xpose.msra.mxu0 0
        %3207 = vmatprep.subr.bf16.mxu0 0
        %3208 = vmatpush1.bf16.xpose.msra.mxu0 0
        %3209 = vmatprep.mubr.bf16.mxu0 0
        %3210 = vmatmul.mubr.bf16.gmra.mrb[0].mxu0 %v3172
        %v3211 = vpop.f32.mrb[0].mxu0
        %v3212 = vadd.f32 %v2629, %v3211
        %v3213 = vpop.f32.mrb[0].mxu0
        %v3214 = vpop.f32.mrb[0].mxu0
        %v3215 = vpop.f32.mrb[0].mxu0
        %3216 = vdwg.mxu0
        %v3217 = vsel %vm1084, %v3212, -inf
        %3218 = vmax.xlane.f32.xlu0 %v3217
        %v3219 = vpop.xlane.xlu0 %3218
        %v3220 = vsub.f32 %v3212, %v3219
        %v3221 = vmul.f32 %v3220, 1.442695
        %v3222 = vpow.pop %v3221
        %v3223 = vsel %vm1084, %v3222, 0.0
        %3224 = vadd.xlane.f32.xlu0 %v3223
        %v3225 = vpop.xlane.xlu0 %3224
        %v3226 = vrcp.pop %v3225
        %v3227 = vmul.f32 %v3222, %v3226
        %v3228 = vpack.c.bf16 %v3227, %v3227
        %3229 = vrot.lane.b32.xlu0 %v2828, 104
        %v3230 = vpop.permute.xlu0 %3229
        %v3232 = vsel %vm1084, %v3228, 0
        %v3235 = vsel %vm1146, %v3230, 0
        %3237 = vmatprep.subr.bf16.mxu0 0
        %3238 = vmatpush1.bf16.msra.mxu0 %v3235
        %3239 = vmatprep.subr.bf16.mxu0 0
        %3240 = vmatpush1.bf16.msra.mxu0 0
        %3241 = vmatprep.subr.bf16.mxu0 0
        %3242 = vmatpush1.bf16.msra.mxu0 0
        %3243 = vmatprep.subr.bf16.mxu0 0
        %3244 = vmatpush1.bf16.msra.mxu0 0
        %3245 = vmatprep.subr.bf16.mxu0 0
        %3246 = vmatpush1.bf16.msra.mxu0 0
        %3247 = vmatprep.subr.bf16.mxu0 0
        %3248 = vmatpush1.bf16.msra.mxu0 0
        %3249 = vmatprep.subr.bf16.mxu0 0
        %3250 = vmatpush1.bf16.msra.mxu0 0
        %3251 = vmatprep.subr.bf16.mxu0 0
        %3252 = vmatpush1.bf16.msra.mxu0 0
        %3253 = vmatprep.subr.bf16.mxu0 0
        %3254 = vmatpush1.bf16.msra.mxu0 0
        %3255 = vmatprep.subr.bf16.mxu0 0
        %3256 = vmatpush1.bf16.msra.mxu0 0
        %3257 = vmatprep.subr.bf16.mxu0 0
        %3258 = vmatpush1.bf16.msra.mxu0 0
        %3259 = vmatprep.subr.bf16.mxu0 0
        %3260 = vmatpush1.bf16.msra.mxu0 0
        %3261 = vmatprep.subr.bf16.mxu0 0
        %3262 = vmatpush1.bf16.msra.mxu0 0
        %3263 = vmatprep.subr.bf16.mxu0 0
        %3264 = vmatpush1.bf16.msra.mxu0 0
        %3265 = vmatprep.subr.bf16.mxu0 0
        %3266 = vmatpush1.bf16.msra.mxu0 0
        %3267 = vmatprep.subr.bf16.mxu0 0
        %3268 = vmatpush1.bf16.msra.mxu0 0
        %3269 = vmatprep.mubr.bf16.mxu0 0
        %3270 = vmatmul.mubr.bf16.gmra.mrb[0].mxu0 %v3232
        %v3271 = vpop.f32.mrb[0].mxu0
        %v3272 = vadd.f32 0.0, %v3271
        %v3273 = vpop.f32.mrb[0].mxu0
        %v3274 = vpop.f32.mrb[0].mxu0
        %v3275 = vpop.f32.mrb[0].mxu0
        %3276 = vdwg.mxu0
        %3278 = vrot.lane.b32.xlu0 %v3272, 24
        %v3279 = vpop.permute.xlu0 %3278
        %3281 = vst.msk [vmem:[#allocation3] sm:$0xff] %vm1540, %v3279
        %v3282 = vld [vmem:[#allocation3] sm:$0xff]
        %v3283 = vpack.c.bf16 %v3282, %v3282
        %v3284 = vld [vmem:[%s848] sm:$0xf]
        %v3285 = vld [vmem:[%s848 + $0x4] sm:$0xf]
        %v3286 = vld [vmem:[%s848 + $0x8] sm:$0xf]
        %v3287 = vld [vmem:[%s848 + $0xc] sm:$0xf]
        %v3288 = vld [vmem:[%s739] sm:$0x1]
        %v3290 = vlaneseq
        %v3291 = vshrl.u32 %v3290, 7
        %v3292 = vsub.s32 0, %v3291
        %v3293 = vrot.slane %v3288, %v3292
        %v3299 = vunpack.c.l.b16 %v3284
        %v3300 = vunpack.c.l.b16 %v3285
        %v3301 = vunpack.c.l.b16 %v3286
        %v3302 = vunpack.c.l.b16 %v3287
        %v3303 = vpack.c.b16 %v3300, %v3299
        %v3304 = vpack.c.b16 %v3302, %v3301
        %v3308 = vsel %vm907, %v3283, 0
        %3310 = vmatprep.subr.bf16.mxu0 0
        %3311 = vmatpush1.bf16.msra.mxu0 %v3303
        %3312 = vmatprep.subr.bf16.mxu0 0
        %3313 = vmatpush1.bf16.msra.mxu0 %v3304
        %3314 = vmatprep.subr.bf16.mxu0 0
        %3315 = vmatpush1.bf16.msra.mxu0 0
        %3316 = vmatprep.subr.bf16.mxu0 0
        %3317 = vmatpush1.bf16.msra.mxu0 0
        %3318 = vmatprep.subr.bf16.mxu0 0
        %3319 = vmatpush1.bf16.msra.mxu0 0
        %3320 = vmatprep.subr.bf16.mxu0 0
        %3321 = vmatpush1.bf16.msra.mxu0 0
        %3322 = vmatprep.subr.bf16.mxu0 0
        %3323 = vmatpush1.bf16.msra.mxu0 0
        %3324 = vmatprep.subr.bf16.mxu0 0
        %3325 = vmatpush1.bf16.msra.mxu0 0
        %3326 = vmatprep.subr.bf16.mxu0 0
        %3327 = vmatpush1.bf16.msra.mxu0 0
        %3328 = vmatprep.subr.bf16.mxu0 0
        %3329 = vmatpush1.bf16.msra.mxu0 0
        %3330 = vmatprep.subr.bf16.mxu0 0
        %3331 = vmatpush1.bf16.msra.mxu0 0
        %3332 = vmatprep.subr.bf16.mxu0 0
        %3333 = vmatpush1.bf16.msra.mxu0 0
        %3334 = vmatprep.subr.bf16.mxu0 0
        %3335 = vmatpush1.bf16.msra.mxu0 0
        %3336 = vmatprep.subr.bf16.mxu0 0
        %3337 = vmatpush1.bf16.msra.mxu0 0
        %3338 = vmatprep.subr.bf16.mxu0 0
        %3339 = vmatpush1.bf16.msra.mxu0 0
        %3340 = vmatprep.subr.bf16.mxu0 0
        %3341 = vmatpush1.bf16.msra.mxu0 0
        %3342 = vmatprep.mubr.bf16.mxu0 0
        %3343 = vmatmul.mubr.bf16.gmra.mrb[0].mxu0 %v3308
        %v3344 = vpop.f32.mrb[0].mxu0
        %v3345 = vadd.f32 %v3293, %v3344
        %v3346 = vpop.f32.mrb[0].mxu0
        %v3347 = vpop.f32.mrb[0].mxu0
        %v3348 = vpop.f32.mrb[0].mxu0
        %3349 = vdwg.mxu0
        %v3350 = vadd.f32 %v2626, %v3345
        %v3351 = vld [vmem:[%s862] sm:$0x1]
        %v3352 = vld [vmem:[%s866] sm:$0x1]
        %v3353 = vsel %vm907, %v3350, 0.0
        %3354 = vadd.xlane.f32.xlu0 %v3353
        %v3355 = vpop.xlane.xlu0 %3354
        %v3356 = vmul.f32 %v3355, %v1616
        %v3357 = vsub.f32 %v3350, %v3356
        %v3358 = vmul.f32 %v3357, %v3357
        %v3359 = vsel %vm907, %v3358, 0.0
        %3360 = vadd.xlane.f32.xlu0 %v3359
        %v3361 = vpop.xlane.xlu0 %3360
        %v3362 = vmul.f32 %v3361, %v1616
        %v3364 = vlaneseq
        %v3365 = vshrl.u32 %v3364, 7
        %v3366 = vsub.s32 0, %v3365
        %v3367 = vrot.slane %v3351, %v3366
        %v3369 = vmul.f32 %v3367, %v3357
        %v3370 = vadd.f32 %v3362, 1e-06
        %v3371 = vrsqrt.pop %v3370
        %v3372 = vmul.f32 %v3369, %v3371
        %v3374 = vlaneseq
        %v3375 = vshrl.u32 %v3374, 7
        %v3376 = vsub.s32 0, %v3375
        %v3377 = vrot.slane %v3352, %v3376
        %v3379 = vadd.f32 %v3372, %v3377
        %v3380 = vpack.c.bf16 %v3379, %v3379
        %v3381 = vld [vmem:[%s1642] sm:$0xf]
        %v3382 = vld [vmem:[%s1642 + $0x4] sm:$0xf]
        %v3383 = vld [vmem:[%s1642 + $0x8] sm:$0xf]
        %v3384 = vld [vmem:[%s1642 + $0xc] sm:$0xf]
        %v3385 = vld [vmem:[%s1647] sm:$0x1]
        %v3387 = vlaneseq
        %v3388 = vshrl.u32 %v3387, 7
        %v3389 = vsub.s32 0, %v3388
        %v3390 = vrot.slane %v3385, %v3389
        %v3396 = vunpack.c.l.b16 %v3381
        %v3397 = vunpack.c.l.b16 %v3382
        %v3398 = vunpack.c.l.b16 %v3383
        %v3399 = vunpack.c.l.b16 %v3384
        %v3400 = vpack.c.b16 %v3397, %v3396
        %v3401 = vpack.c.b16 %v3399, %v3398
        %v3405 = vsel %vm907, %v3380, 0
        %3407 = vmatprep.subr.bf16.mxu0 0
        %3408 = vmatpush1.bf16.msra.mxu0 %v3400
        %3409 = vmatprep.subr.bf16.mxu0 0
        %3410 = vmatpush1.bf16.msra.mxu0 %v3401
        %3411 = vmatprep.subr.bf16.mxu0 0
        %3412 = vmatpush1.bf16.msra.mxu0 0
        %3413 = vmatprep.subr.bf16.mxu0 0
        %3414 = vmatpush1.bf16.msra.mxu0 0
        %3415 = vmatprep.subr.bf16.mxu0 0
        %3416 = vmatpush1.bf16.msra.mxu0 0
        %3417 = vmatprep.subr.bf16.mxu0 0
        %3418 = vmatpush1.bf16.msra.mxu0 0
        %3419 = vmatprep.subr.bf16.mxu0 0
        %3420 = vmatpush1.bf16.msra.mxu0 0
        %3421 = vmatprep.subr.bf16.mxu0 0
        %3422 = vmatpush1.bf16.msra.mxu0 0
        %3423 = vmatprep.subr.bf16.mxu0 0
        %3424 = vmatpush1.bf16.msra.mxu0 0
        %3425 = vmatprep.subr.bf16.mxu0 0
        %3426 = vmatpush1.bf16.msra.mxu0 0
        %3427 = vmatprep.subr.bf16.mxu0 0
        %3428 = vmatpush1.bf16.msra.mxu0 0
        %3429 = vmatprep.subr.bf16.mxu0 0
        %3430 = vmatpush1.bf16.msra.mxu0 0
        %3431 = vmatprep.subr.bf16.mxu0 0
        %3432 = vmatpush1.bf16.msra.mxu0 0
        %3433 = vmatprep.subr.bf16.mxu0 0
        %3434 = vmatpush1.bf16.msra.mxu0 0
        %3435 = vmatprep.subr.bf16.mxu0 0
        %3436 = vmatpush1.bf16.msra.mxu0 0
        %3437 = vmatprep.subr.bf16.mxu0 0
        %3438 = vmatpush1.bf16.msra.mxu0 0
        %3439 = vmatprep.mubr.bf16.mxu0 0
        %3440 = vmatmul.mubr.bf16.gmra.mrb[0].mxu0 %v3405
        %v3441 = vpop.f32.mrb[0].mxu0
        %v3442 = vadd.f32 %v3390, %v3441
        %v3443 = vpop.f32.mrb[0].mxu0
        %v3444 = vpop.f32.mrb[0].mxu0
        %v3445 = vpop.f32.mrb[0].mxu0
        %3446 = vdwg.mxu0
        %v3447 = vld [vmem:[%s1710] sm:$0xf]
        %v3448 = vld [vmem:[%s1710 + $0x4] sm:$0xf]
        %v3449 = vld [vmem:[%s1710 + $0x8] sm:$0xf]
        %v3450 = vld [vmem:[%s1710 + $0xc] sm:$0xf]
        %v3451 = vld [vmem:[%s1715] sm:$0x1]
        %v3453 = vlaneseq
        %v3454 = vshrl.u32 %v3453, 7
        %v3455 = vsub.s32 0, %v3454
        %v3456 = vrot.slane %v3451, %v3455
        %v3462 = vunpack.c.l.b16 %v3447
        %v3463 = vunpack.c.l.b16 %v3448
        %v3464 = vunpack.c.l.b16 %v3449
        %v3465 = vunpack.c.l.b16 %v3450
        %v3466 = vpack.c.b16 %v3463, %v3462
        %v3467 = vpack.c.b16 %v3465, %v3464
        %v3471 = vsel %vm907, %v2633, 0
        %3473 = vmatprep.subr.bf16.mxu0 0
        %3474 = vmatpush1.bf16.msra.mxu0 %v3466
        %3475 = vmatprep.subr.bf16.mxu0 0
        %3476 = vmatpush1.bf16.msra.mxu0 %v3467
        %3477 = vmatprep.subr.bf16.mxu0 0
        %3478 = vmatpush1.bf16.msra.mxu0 0
        %3479 = vmatprep.subr.bf16.mxu0 0
        %3480 = vmatpush1.bf16.msra.mxu0 0
        %3481 = vmatprep.subr.bf16.mxu0 0
        %3482 = vmatpush1.bf16.msra.mxu0 0
        %3483 = vmatprep.subr.bf16.mxu0 0
        %3484 = vmatpush1.bf16.msra.mxu0 0
        %3485 = vmatprep.subr.bf16.mxu0 0
        %3486 = vmatpush1.bf16.msra.mxu0 0
        %3487 = vmatprep.subr.bf16.mxu0 0
        %3488 = vmatpush1.bf16.msra.mxu0 0
        %3489 = vmatprep.subr.bf16.mxu0 0
        %3490 = vmatpush1.bf16.msra.mxu0 0
        %3491 = vmatprep.subr.bf16.mxu0 0
        %3492 = vmatpush1.bf16.msra.mxu0 0
        %3493 = vmatprep.subr.bf16.mxu0 0
        %3494 = vmatpush1.bf16.msra.mxu0 0
        %3495 = vmatprep.subr.bf16.mxu0 0
        %3496 = vmatpush1.bf16.msra.mxu0 0
        %3497 = vmatprep.subr.bf16.mxu0 0
        %3498 = vmatpush1.bf16.msra.mxu0 0
        %3499 = vmatprep.subr.bf16.mxu0 0
        %3500 = vmatpush1.bf16.msra.mxu0 0
        %3501 = vmatprep.subr.bf16.mxu0 0
        %3502 = vmatpush1.bf16.msra.mxu0 0
        %3503 = vmatprep.subr.bf16.mxu0 0
        %3504 = vmatpush1.bf16.msra.mxu0 0
        %3505 = vmatprep.mubr.bf16.mxu0 0
        %3506 = vmatmul.mubr.bf16.gmra.mrb[0].mxu0 %v3471
        %v3507 = vpop.f32.mrb[0].mxu0
        %v3508 = vadd.f32 %v3456, %v3507
        %v3509 = vpop.f32.mrb[0].mxu0
        %v3510 = vpop.f32.mrb[0].mxu0
        %v3511 = vpop.f32.mrb[0].mxu0
        %3512 = vdwg.mxu0
        %v3513 = vld [vmem:[%s1778] sm:$0xf]
        %v3514 = vld [vmem:[%s1778 + $0x4] sm:$0xf]
        %v3515 = vld [vmem:[%s1778 + $0x8] sm:$0xf]
        %v3516 = vld [vmem:[%s1778 + $0xc] sm:$0xf]
        %v3517 = vld [vmem:[%s1783] sm:$0x1]
        %v3519 = vlaneseq
        %v3520 = vshrl.u32 %v3519, 7
        %v3521 = vsub.s32 0, %v3520
        %v3522 = vrot.slane %v3517, %v3521
        %v3528 = vunpack.c.l.b16 %v3513
        %v3529 = vunpack.c.l.b16 %v3514
        %v3530 = vunpack.c.l.b16 %v3515
        %v3531 = vunpack.c.l.b16 %v3516
        %v3532 = vpack.c.b16 %v3529, %v3528
        %v3533 = vpack.c.b16 %v3531, %v3530
        %3536 = vmatprep.subr.bf16.mxu0 0
        %3537 = vmatpush1.bf16.msra.mxu0 %v3532
        %3538 = vmatprep.subr.bf16.mxu0 0
        %3539 = vmatpush1.bf16.msra.mxu0 %v3533
        %3540 = vmatprep.subr.bf16.mxu0 0
        %3541 = vmatpush1.bf16.msra.mxu0 0
        %3542 = vmatprep.subr.bf16.mxu0 0
        %3543 = vmatpush1.bf16.msra.mxu0 0
        %3544 = vmatprep.subr.bf16.mxu0 0
        %3545 = vmatpush1.bf16.msra.mxu0 0
        %3546 = vmatprep.subr.bf16.mxu0 0
        %3547 = vmatpush1.bf16.msra.mxu0 0
        %3548 = vmatprep.subr.bf16.mxu0 0
        %3549 = vmatpush1.bf16.msra.mxu0 0
        %3550 = vmatprep.subr.bf16.mxu0 0
        %3551 = vmatpush1.bf16.msra.mxu0 0
        %3552 = vmatprep.subr.bf16.mxu0 0
        %3553 = vmatpush1.bf16.msra.mxu0 0
        %3554 = vmatprep.subr.bf16.mxu0 0
        %3555 = vmatpush1.bf16.msra.mxu0 0
        %3556 = vmatprep.subr.bf16.mxu0 0
        %3557 = vmatpush1.bf16.msra.mxu0 0
        %3558 = vmatprep.subr.bf16.mxu0 0
        %3559 = vmatpush1.bf16.msra.mxu0 0
        %3560 = vmatprep.subr.bf16.mxu0 0
        %3561 = vmatpush1.bf16.msra.mxu0 0
        %3562 = vmatprep.subr.bf16.mxu0 0
        %3563 = vmatpush1.bf16.msra.mxu0 0
        %3564 = vmatprep.subr.bf16.mxu0 0
        %3565 = vmatpush1.bf16.msra.mxu0 0
        %3566 = vmatprep.subr.bf16.mxu0 0
        %3567 = vmatpush1.bf16.msra.mxu0 0
        %3568 = vmatprep.mubr.bf16.mxu0 0
        %3569 = vmatmul.mubr.bf16.gmra.mrb[0].mxu0 %v3471
        %v3570 = vpop.f32.mrb[0].mxu0
        %v3571 = vadd.f32 %v3522, %v3570
        %v3572 = vpop.f32.mrb[0].mxu0
        %v3573 = vpop.f32.mrb[0].mxu0
        %v3574 = vpop.f32.mrb[0].mxu0
        %3575 = vdwg.mxu0
        %v3576 = vpack.c.bf16 %v3442, %v3442
        %v3577 = vpack.c.bf16 %v3508, %v3508
        %v3578 = vpack.c.bf16 %v3571, %v3571
        %v3580 = vlaneseq
        %v3581 = vshrl.u32 %v3580, 7
        %v3582 = vsub.s32 0, %v3581
        %v3583 = vrot.slane %v2631, %v3582
        %v3586 = vsel %vm1084, %v3576, 0
        %v3589 = vsel %vm1084, %v3577, 0
        %3591 = vmatprep.subr.bf16.mxu0 0
        %3592 = vmatpush1.bf16.xpose.msra.mxu0 %v3589
        %3593 = vmatprep.subr.bf16.mxu0 0
        %3594 = vmatpush1.bf16.xpose.msra.mxu0 0
        %3595 = vmatprep.subr.bf16.mxu0 0
        %3596 = vmatpush1.bf16.xpose.msra.mxu0 0
        %3597 = vmatprep.subr.bf16.mxu0 0
        %3598 = vmatpush1.bf16.xpose.msra.mxu0 0
        %3599 = vmatprep.subr.bf16.mxu0 0
        %3600 = vmatpush1.bf16.xpose.msra.mxu0 0
        %3601 = vmatprep.subr.bf16.mxu0 0
        %3602 = vmatpush1.bf16.xpose.msra.mxu0 0
        %3603 = vmatprep.subr.bf16.mxu0 0
        %3604 = vmatpush1.bf16.xpose.msra.mxu0 0
        %3605 = vmatprep.subr.bf16.mxu0 0
        %3606 = vmatpush1.bf16.xpose.msra.mxu0 0
        %3607 = vmatprep.subr.bf16.mxu0 0
        %3608 = vmatpush1.bf16.xpose.msra.mxu0 0
        %3609 = vmatprep.subr.bf16.mxu0 0
        %3610 = vmatpush1.bf16.xpose.msra.mxu0 0
        %3611 = vmatprep.subr.bf16.mxu0 0
        %3612 = vmatpush1.bf16.xpose.msra.mxu0 0
        %3613 = vmatprep.subr.bf16.mxu0 0
        %3614 = vmatpush1.bf16.xpose.msra.mxu0 0
        %3615 = vmatprep.subr.bf16.mxu0 0
        %3616 = vmatpush1.bf16.xpose.msra.mxu0 0
        %3617 = vmatprep.subr.bf16.mxu0 0
        %3618 = vmatpush1.bf16.xpose.msra.mxu0 0
        %3619 = vmatprep.subr.bf16.mxu0 0
        %3620 = vmatpush1.bf16.xpose.msra.mxu0 0
        %3621 = vmatprep.subr.bf16.mxu0 0
        %3622 = vmatpush1.bf16.xpose.msra.mxu0 0
        %3623 = vmatprep.mubr.bf16.mxu0 0
        %3624 = vmatmul.mubr.bf16.gmra.mrb[0].mxu0 %v3586
        %v3625 = vpop.f32.mrb[0].mxu0
        %v3626 = vadd.f32 %v3583, %v3625
        %v3627 = vpop.f32.mrb[0].mxu0
        %v3628 = vpop.f32.mrb[0].mxu0
        %v3629 = vpop.f32.mrb[0].mxu0
        %3630 = vdwg.mxu0
        %v3631 = vsel %vm1084, %v3626, -inf
        %3632 = vmax.xlane.f32.xlu0 %v3631
        %v3633 = vpop.xlane.xlu0 %3632
        %v3634 = vsub.f32 %v3626, %v3633
        %v3635 = vmul.f32 %v3634, 1.442695
        %v3636 = vpow.pop %v3635
        %v3637 = vsel %vm1084, %v3636, 0.0
        %3638 = vadd.xlane.f32.xlu0 %v3637
        %v3639 = vpop.xlane.xlu0 %3638
        %v3640 = vrcp.pop %v3639
        %v3641 = vmul.f32 %v3636, %v3640
        %v3642 = vpack.c.bf16 %v3641, %v3641
        %v3644 = vsel %vm1084, %v3642, 0
        %v3647 = vsel %vm1146, %v3578, 0
        %3649 = vmatprep.subr.bf16.mxu0 0
        %3650 = vmatpush1.bf16.msra.mxu0 %v3647
        %3651 = vmatprep.subr.bf16.mxu0 0
        %3652 = vmatpush1.bf16.msra.mxu0 0
        %3653 = vmatprep.subr.bf16.mxu0 0
        %3654 = vmatpush1.bf16.msra.mxu0 0
        %3655 = vmatprep.subr.bf16.mxu0 0
        %3656 = vmatpush1.bf16.msra.mxu0 0
        %3657 = vmatprep.subr.bf16.mxu0 0
        %3658 = vmatpush1.bf16.msra.mxu0 0
        %3659 = vmatprep.subr.bf16.mxu0 0
        %3660 = vmatpush1.bf16.msra.mxu0 0
        %3661 = vmatprep.subr.bf16.mxu0 0
        %3662 = vmatpush1.bf16.msra.mxu0 0
        %3663 = vmatprep.subr.bf16.mxu0 0
        %3664 = vmatpush1.bf16.msra.mxu0 0
        %3665 = vmatprep.subr.bf16.mxu0 0
        %3666 = vmatpush1.bf16.msra.mxu0 0
        %3667 = vmatprep.subr.bf16.mxu0 0
        %3668 = vmatpush1.bf16.msra.mxu0 0
        %3669 = vmatprep.subr.bf16.mxu0 0
        %3670 = vmatpush1.bf16.msra.mxu0 0
        %3671 = vmatprep.subr.bf16.mxu0 0
        %3672 = vmatpush1.bf16.msra.mxu0 0
        %3673 = vmatprep.subr.bf16.mxu0 0
        %3674 = vmatpush1.bf16.msra.mxu0 0
        %3675 = vmatprep.subr.bf16.mxu0 0
        %3676 = vmatpush1.bf16.msra.mxu0 0
        %3677 = vmatprep.subr.bf16.mxu0 0
        %3678 = vmatpush1.bf16.msra.mxu0 0
        %3679 = vmatprep.subr.bf16.mxu0 0
        %3680 = vmatpush1.bf16.msra.mxu0 0
        %3681 = vmatprep.mubr.bf16.mxu0 0
        %3682 = vmatmul.mubr.bf16.gmra.mrb[0].mxu0 %v3644
        %v3683 = vpop.f32.mrb[0].mxu0
        %v3684 = vadd.f32 0.0, %v3683
        %v3685 = vpop.f32.mrb[0].mxu0
        %v3686 = vpop.f32.mrb[0].mxu0
        %v3687 = vpop.f32.mrb[0].mxu0
        %3688 = vdwg.mxu0
        %3689 = vst.msk [vmem:[#allocation3] sm:$0xff] %vm1084, %v3684
        %3691 = vrot.lane.b32.xlu0 %v3576, 120
        %v3692 = vpop.permute.xlu0 %3691
        %3694 = vrot.lane.b32.xlu0 %v3577, 120
        %v3695 = vpop.permute.xlu0 %3694
        %v3697 = vsel %vm1084, %v3692, 0
        %v3700 = vsel %vm1084, %v3695, 0
        %3702 = vmatprep.subr.bf16.mxu0 0
        %3703 = vmatpush1.bf16.xpose.msra.mxu0 %v3700
        %3704 = vmatprep.subr.bf16.mxu0 0
        %3705 = vmatpush1.bf16.xpose.msra.mxu0 0
        %3706 = vmatprep.subr.bf16.mxu0 0
        %3707 = vmatpush1.bf16.xpose.msra.mxu0 0
        %3708 = vmatprep.subr.bf16.mxu0 0
        %3709 = vmatpush1.bf16.xpose.msra.mxu0 0
        %3710 = vmatprep.subr.bf16.mxu0 0
        %3711 = vmatpush1.bf16.xpose.msra.mxu0 0
        %3712 = vmatprep.subr.bf16.mxu0 0
        %3713 = vmatpush1.bf16.xpose.msra.mxu0 0
        %3714 = vmatprep.subr.bf16.mxu0 0
        %3715 = vmatpush1.bf16.xpose.msra.mxu0 0
        %3716 = vmatprep.subr.bf16.mxu0 0
        %3717 = vmatpush1.bf16.xpose.msra.mxu0 0
        %3718 = vmatprep.subr.bf16.mxu0 0
        %3719 = vmatpush1.bf16.xpose.msra.mxu0 0
        %3720 = vmatprep.subr.bf16.mxu0 0
        %3721 = vmatpush1.bf16.xpose.msra.mxu0 0
        %3722 = vmatprep.subr.bf16.mxu0 0
        %3723 = vmatpush1.bf16.xpose.msra.mxu0 0
        %3724 = vmatprep.subr.bf16.mxu0 0
        %3725 = vmatpush1.bf16.xpose.msra.mxu0 0
        %3726 = vmatprep.subr.bf16.mxu0 0
        %3727 = vmatpush1.bf16.xpose.msra.mxu0 0
        %3728 = vmatprep.subr.bf16.mxu0 0
        %3729 = vmatpush1.bf16.xpose.msra.mxu0 0
        %3730 = vmatprep.subr.bf16.mxu0 0
        %3731 = vmatpush1.bf16.xpose.msra.mxu0 0
        %3732 = vmatprep.subr.bf16.mxu0 0
        %3733 = vmatpush1.bf16.xpose.msra.mxu0 0
        %3734 = vmatprep.mubr.bf16.mxu0 0
        %3735 = vmatmul.mubr.bf16.gmra.mrb[0].mxu0 %v3697
        %v3736 = vpop.f32.mrb[0].mxu0
        %v3737 = vadd.f32 %v3583, %v3736
        %v3738 = vpop.f32.mrb[0].mxu0
        %v3739 = vpop.f32.mrb[0].mxu0
        %v3740 = vpop.f32.mrb[0].mxu0
        %3741 = vdwg.mxu0
        %v3742 = vsel %vm1084, %v3737, -inf
        %3743 = vmax.xlane.f32.xlu0 %v3742
        %v3744 = vpop.xlane.xlu0 %3743
        %v3745 = vsub.f32 %v3737, %v3744
        %v3746 = vmul.f32 %v3745, 1.442695
        %v3747 = vpow.pop %v3746
        %v3748 = vsel %vm1084, %v3747, 0.0
        %3749 = vadd.xlane.f32.xlu0 %v3748
        %v3750 = vpop.xlane.xlu0 %3749
        %v3751 = vrcp.pop %v3750
        %v3752 = vmul.f32 %v3747, %v3751
        %v3753 = vpack.c.bf16 %v3752, %v3752
        %3755 = vrot.lane.b32.xlu0 %v3578, 120
        %v3756 = vpop.permute.xlu0 %3755
        %v3758 = vsel %vm1084, %v3753, 0
        %v3761 = vsel %vm1146, %v3756, 0
        %3763 = vmatprep.subr.bf16.mxu0 0
        %3764 = vmatpush1.bf16.msra.mxu0 %v3761
        %3765 = vmatprep.subr.bf16.mxu0 0
        %3766 = vmatpush1.bf16.msra.mxu0 0
        %3767 = vmatprep.subr.bf16.mxu0 0
        %3768 = vmatpush1.bf16.msra.mxu0 0
        %3769 = vmatprep.subr.bf16.mxu0 0
        %3770 = vmatpush1.bf16.msra.mxu0 0
        %3771 = vmatprep.subr.bf16.mxu0 0
        %3772 = vmatpush1.bf16.msra.mxu0 0
        %3773 = vmatprep.subr.bf16.mxu0 0
        %3774 = vmatpush1.bf16.msra.mxu0 0
        %3775 = vmatprep.subr.bf16.mxu0 0
        %3776 = vmatpush1.bf16.msra.mxu0 0
        %3777 = vmatprep.subr.bf16.mxu0 0
        %3778 = vmatpush1.bf16.msra.mxu0 0
        %3779 = vmatprep.subr.bf16.mxu0 0
        %3780 = vmatpush1.bf16.msra.mxu0 0
        %3781 = vmatprep.subr.bf16.mxu0 0
        %3782 = vmatpush1.bf16.msra.mxu0 0
        %3783 = vmatprep.subr.bf16.mxu0 0
        %3784 = vmatpush1.bf16.msra.mxu0 0
        %3785 = vmatprep.subr.bf16.mxu0 0
        %3786 = vmatpush1.bf16.msra.mxu0 0
        %3787 = vmatprep.subr.bf16.mxu0 0
        %3788 = vmatpush1.bf16.msra.mxu0 0
        %3789 = vmatprep.subr.bf16.mxu0 0
        %3790 = vmatpush1.bf16.msra.mxu0 0
        %3791 = vmatprep.subr.bf16.mxu0 0
        %3792 = vmatpush1.bf16.msra.mxu0 0
        %3793 = vmatprep.subr.bf16.mxu0 0
        %3794 = vmatpush1.bf16.msra.mxu0 0
        %3795 = vmatprep.mubr.bf16.mxu0 0
        %3796 = vmatmul.mubr.bf16.gmra.mrb[0].mxu0 %v3758
        %v3797 = vpop.f32.mrb[0].mxu0
        %v3798 = vadd.f32 0.0, %v3797
        %v3799 = vpop.f32.mrb[0].mxu0
        %v3800 = vpop.f32.mrb[0].mxu0
        %v3801 = vpop.f32.mrb[0].mxu0
        %3802 = vdwg.mxu0
        %3804 = vrot.lane.b32.xlu0 %v3798, 8
        %v3805 = vpop.permute.xlu0 %3804
        %3807 = vst.msk [vmem:[#allocation3] sm:$0xff] %vm1308, %v3805
        %3808 = vrot.lane.b32.xlu0 %v3576, 112
        %v3809 = vpop.permute.xlu0 %3808
        %3810 = vrot.lane.b32.xlu0 %v3577, 112
        %v3811 = vpop.permute.xlu0 %3810
        %v3813 = vsel %vm1084, %v3809, 0
        %v3816 = vsel %vm1084, %v3811, 0
        %3818 = vmatprep.subr.bf16.mxu0 0
        %3819 = vmatpush1.bf16.xpose.msra.mxu0 %v3816
        %3820 = vmatprep.subr.bf16.mxu0 0
        %3821 = vmatpush1.bf16.xpose.msra.mxu0 0
        %3822 = vmatprep.subr.bf16.mxu0 0
        %3823 = vmatpush1.bf16.xpose.msra.mxu0 0
        %3824 = vmatprep.subr.bf16.mxu0 0
        %3825 = vmatpush1.bf16.xpose.msra.mxu0 0
        %3826 = vmatprep.subr.bf16.mxu0 0
        %3827 = vmatpush1.bf16.xpose.msra.mxu0 0
        %3828 = vmatprep.subr.bf16.mxu0 0
        %3829 = vmatpush1.bf16.xpose.msra.mxu0 0
        %3830 = vmatprep.subr.bf16.mxu0 0
        %3831 = vmatpush1.bf16.xpose.msra.mxu0 0
        %3832 = vmatprep.subr.bf16.mxu0 0
        %3833 = vmatpush1.bf16.xpose.msra.mxu0 0
        %3834 = vmatprep.subr.bf16.mxu0 0
        %3835 = vmatpush1.bf16.xpose.msra.mxu0 0
        %3836 = vmatprep.subr.bf16.mxu0 0
        %3837 = vmatpush1.bf16.xpose.msra.mxu0 0
        %3838 = vmatprep.subr.bf16.mxu0 0
        %3839 = vmatpush1.bf16.xpose.msra.mxu0 0
        %3840 = vmatprep.subr.bf16.mxu0 0
        %3841 = vmatpush1.bf16.xpose.msra.mxu0 0
        %3842 = vmatprep.subr.bf16.mxu0 0
        %3843 = vmatpush1.bf16.xpose.msra.mxu0 0
        %3844 = vmatprep.subr.bf16.mxu0 0
        %3845 = vmatpush1.bf16.xpose.msra.mxu0 0
        %3846 = vmatprep.subr.bf16.mxu0 0
        %3847 = vmatpush1.bf16.xpose.msra.mxu0 0
        %3848 = vmatprep.subr.bf16.mxu0 0
        %3849 = vmatpush1.bf16.xpose.msra.mxu0 0
        %3850 = vmatprep.mubr.bf16.mxu0 0
        %3851 = vmatmul.mubr.bf16.gmra.mrb[0].mxu0 %v3813
        %v3852 = vpop.f32.mrb[0].mxu0
        %v3853 = vadd.f32 %v3583, %v3852
        %v3854 = vpop.f32.mrb[0].mxu0
        %v3855 = vpop.f32.mrb[0].mxu0
        %v3856 = vpop.f32.mrb[0].mxu0
        %3857 = vdwg.mxu0
        %v3858 = vsel %vm1084, %v3853, -inf
        %3859 = vmax.xlane.f32.xlu0 %v3858
        %v3860 = vpop.xlane.xlu0 %3859
        %v3861 = vsub.f32 %v3853, %v3860
        %v3862 = vmul.f32 %v3861, 1.442695
        %v3863 = vpow.pop %v3862
        %v3864 = vsel %vm1084, %v3863, 0.0
        %3865 = vadd.xlane.f32.xlu0 %v3864
        %v3866 = vpop.xlane.xlu0 %3865
        %v3867 = vrcp.pop %v3866
        %v3868 = vmul.f32 %v3863, %v3867
        %v3869 = vpack.c.bf16 %v3868, %v3868
        %3870 = vrot.lane.b32.xlu0 %v3578, 112
        %v3871 = vpop.permute.xlu0 %3870
        %v3873 = vsel %vm1084, %v3869, 0
        %v3876 = vsel %vm1146, %v3871, 0
        %3878 = vmatprep.subr.bf16.mxu0 0
        %3879 = vmatpush1.bf16.msra.mxu0 %v3876
        %3880 = vmatprep.subr.bf16.mxu0 0
        %3881 = vmatpush1.bf16.msra.mxu0 0
        %3882 = vmatprep.subr.bf16.mxu0 0
        %3883 = vmatpush1.bf16.msra.mxu0 0
        %3884 = vmatprep.subr.bf16.mxu0 0
        %3885 = vmatpush1.bf16.msra.mxu0 0
        %3886 = vmatprep.subr.bf16.mxu0 0
        %3887 = vmatpush1.bf16.msra.mxu0 0
        %3888 = vmatprep.subr.bf16.mxu0 0
        %3889 = vmatpush1.bf16.msra.mxu0 0
        %3890 = vmatprep.subr.bf16.mxu0 0
        %3891 = vmatpush1.bf16.msra.mxu0 0
        %3892 = vmatprep.subr.bf16.mxu0 0
        %3893 = vmatpush1.bf16.msra.mxu0 0
        %3894 = vmatprep.subr.bf16.mxu0 0
        %3895 = vmatpush1.bf16.msra.mxu0 0
        %3896 = vmatprep.subr.bf16.mxu0 0
        %3897 = vmatpush1.bf16.msra.mxu0 0
        %3898 = vmatprep.subr.bf16.mxu0 0
        %3899 = vmatpush1.bf16.msra.mxu0 0
        %3900 = vmatprep.subr.bf16.mxu0 0
        %3901 = vmatpush1.bf16.msra.mxu0 0
        %3902 = vmatprep.subr.bf16.mxu0 0
        %3903 = vmatpush1.bf16.msra.mxu0 0
        %3904 = vmatprep.subr.bf16.mxu0 0
        %3905 = vmatpush1.bf16.msra.mxu0 0
        %3906 = vmatprep.subr.bf16.mxu0 0
        %3907 = vmatpush1.bf16.msra.mxu0 0
        %3908 = vmatprep.subr.bf16.mxu0 0
        %3909 = vmatpush1.bf16.msra.mxu0 0
        %3910 = vmatprep.mubr.bf16.mxu0 0
        %3911 = vmatmul.mubr.bf16.gmra.mrb[0].mxu0 %v3873
        %v3912 = vpop.f32.mrb[0].mxu0
        %v3913 = vadd.f32 0.0, %v3912
        %v3914 = vpop.f32.mrb[0].mxu0
        %v3915 = vpop.f32.mrb[0].mxu0
        %v3916 = vpop.f32.mrb[0].mxu0
        %3917 = vdwg.mxu0
        %3919 = vrot.lane.b32.xlu0 %v3913, 16
        %v3920 = vpop.permute.xlu0 %3919
        %3922 = vst.msk [vmem:[#allocation3] sm:$0xff] %vm1424, %v3920
        %3923 = vrot.lane.b32.xlu0 %v3576, 104
        %v3924 = vpop.permute.xlu0 %3923
        %3925 = vrot.lane.b32.xlu0 %v3577, 104
        %v3926 = vpop.permute.xlu0 %3925
        %v3928 = vsel %vm1084, %v3924, 0
        %v3931 = vsel %vm1084, %v3926, 0
        %3933 = vmatprep.subr.bf16.mxu0 0
        %3934 = vmatpush1.bf16.xpose.msra.mxu0 %v3931
        %3935 = vmatprep.subr.bf16.mxu0 0
        %3936 = vmatpush1.bf16.xpose.msra.mxu0 0
        %3937 = vmatprep.subr.bf16.mxu0 0
        %3938 = vmatpush1.bf16.xpose.msra.mxu0 0
        %3939 = vmatprep.subr.bf16.mxu0 0
        %3940 = vmatpush1.bf16.xpose.msra.mxu0 0
        %3941 = vmatprep.subr.bf16.mxu0 0
        %3942 = vmatpush1.bf16.xpose.msra.mxu0 0
        %3943 = vmatprep.subr.bf16.mxu0 0
        %3944 = vmatpush1.bf16.xpose.msra.mxu0 0
        %3945 = vmatprep.subr.bf16.mxu0 0
        %3946 = vmatpush1.bf16.xpose.msra.mxu0 0
        %3947 = vmatprep.subr.bf16.mxu0 0
        %3948 = vmatpush1.bf16.xpose.msra.mxu0 0
        %3949 = vmatprep.subr.bf16.mxu0 0
        %3950 = vmatpush1.bf16.xpose.msra.mxu0 0
        %3951 = vmatprep.subr.bf16.mxu0 0
        %3952 = vmatpush1.bf16.xpose.msra.mxu0 0
        %3953 = vmatprep.subr.bf16.mxu0 0
        %3954 = vmatpush1.bf16.xpose.msra.mxu0 0
        %3955 = vmatprep.subr.bf16.mxu0 0
        %3956 = vmatpush1.bf16.xpose.msra.mxu0 0
        %3957 = vmatprep.subr.bf16.mxu0 0
        %3958 = vmatpush1.bf16.xpose.msra.mxu0 0
        %3959 = vmatprep.subr.bf16.mxu0 0
        %3960 = vmatpush1.bf16.xpose.msra.mxu0 0
        %3961 = vmatprep.subr.bf16.mxu0 0
        %3962 = vmatpush1.bf16.xpose.msra.mxu0 0
        %3963 = vmatprep.subr.bf16.mxu0 0
        %3964 = vmatpush1.bf16.xpose.msra.mxu0 0
        %3965 = vmatprep.mubr.bf16.mxu0 0
        %3966 = vmatmul.mubr.bf16.gmra.mrb[0].mxu0 %v3928
        %v3967 = vpop.f32.mrb[0].mxu0
        %v3968 = vadd.f32 %v3583, %v3967
        %v3969 = vpop.f32.mrb[0].mxu0
        %v3970 = vpop.f32.mrb[0].mxu0
        %v3971 = vpop.f32.mrb[0].mxu0
        %3972 = vdwg.mxu0
        %v3973 = vsel %vm1084, %v3968, -inf
        %3974 = vmax.xlane.f32.xlu0 %v3973
        %v3975 = vpop.xlane.xlu0 %3974
        %v3976 = vsub.f32 %v3968, %v3975
        %v3977 = vmul.f32 %v3976, 1.442695
        %v3978 = vpow.pop %v3977
        %v3979 = vsel %vm1084, %v3978, 0.0
        %3980 = vadd.xlane.f32.xlu0 %v3979
        %v3981 = vpop.xlane.xlu0 %3980
        %v3982 = vrcp.pop %v3981
        %v3983 = vmul.f32 %v3978, %v3982
        %v3984 = vpack.c.bf16 %v3983, %v3983
        %3985 = vrot.lane.b32.xlu0 %v3578, 104
        %v3986 = vpop.permute.xlu0 %3985
        %v3988 = vsel %vm1084, %v3984, 0
        %v3991 = vsel %vm1146, %v3986, 0
        %3993 = vmatprep.subr.bf16.mxu0 0
        %3994 = vmatpush1.bf16.msra.mxu0 %v3991
        %3995 = vmatprep.subr.bf16.mxu0 0
        %3996 = vmatpush1.bf16.msra.mxu0 0
        %3997 = vmatprep.subr.bf16.mxu0 0
        %3998 = vmatpush1.bf16.msra.mxu0 0
        %3999 = vmatprep.subr.bf16.mxu0 0
        %4000 = vmatpush1.bf16.msra.mxu0 0
        %4001 = vmatprep.subr.bf16.mxu0 0
        %4002 = vmatpush1.bf16.msra.mxu0 0
        %4003 = vmatprep.subr.bf16.mxu0 0
        %4004 = vmatpush1.bf16.msra.mxu0 0
        %4005 = vmatprep.subr.bf16.mxu0 0
        %4006 = vmatpush1.bf16.msra.mxu0 0
        %4007 = vmatprep.subr.bf16.mxu0 0
        %4008 = vmatpush1.bf16.msra.mxu0 0
        %4009 = vmatprep.subr.bf16.mxu0 0
        %4010 = vmatpush1.bf16.msra.mxu0 0
        %4011 = vmatprep.subr.bf16.mxu0 0
        %4012 = vmatpush1.bf16.msra.mxu0 0
        %4013 = vmatprep.subr.bf16.mxu0 0
        %4014 = vmatpush1.bf16.msra.mxu0 0
        %4015 = vmatprep.subr.bf16.mxu0 0
        %4016 = vmatpush1.bf16.msra.mxu0 0
        %4017 = vmatprep.subr.bf16.mxu0 0
        %4018 = vmatpush1.bf16.msra.mxu0 0
        %4019 = vmatprep.subr.bf16.mxu0 0
        %4020 = vmatpush1.bf16.msra.mxu0 0
        %4021 = vmatprep.subr.bf16.mxu0 0
        %4022 = vmatpush1.bf16.msra.mxu0 0
        %4023 = vmatprep.subr.bf16.mxu0 0
        %4024 = vmatpush1.bf16.msra.mxu0 0
        %4025 = vmatprep.mubr.bf16.mxu0 0
        %4026 = vmatmul.mubr.bf16.gmra.mrb[0].mxu0 %v3988
        %v4027 = vpop.f32.mrb[0].mxu0
        %v4028 = vadd.f32 0.0, %v4027
        %v4029 = vpop.f32.mrb[0].mxu0
        %v4030 = vpop.f32.mrb[0].mxu0
        %v4031 = vpop.f32.mrb[0].mxu0
        %4032 = vdwg.mxu0
        %4034 = vrot.lane.b32.xlu0 %v4028, 24
        %v4035 = vpop.permute.xlu0 %4034
        %4037 = vst.msk [vmem:[#allocation3] sm:$0xff] %vm1540, %v4035
        %v4038 = vld [vmem:[#allocation3] sm:$0xff]
        %v4039 = vpack.c.bf16 %v4038, %v4038
        %v4040 = vld [vmem:[%s2307] sm:$0xf]
        %v4041 = vld [vmem:[%s2307 + $0x4] sm:$0xf]
        %v4042 = vld [vmem:[%s2307 + $0x8] sm:$0xf]
        %v4043 = vld [vmem:[%s2307 + $0xc] sm:$0xf]
        %v4044 = vld [vmem:[%s2312] sm:$0x1]
        %v4046 = vlaneseq
        %v4047 = vshrl.u32 %v4046, 7
        %v4048 = vsub.s32 0, %v4047
        %v4049 = vrot.slane %v4044, %v4048
        %v4055 = vunpack.c.l.b16 %v4040
        %v4056 = vunpack.c.l.b16 %v4041
        %v4057 = vunpack.c.l.b16 %v4042
        %v4058 = vunpack.c.l.b16 %v4043
        %v4059 = vpack.c.b16 %v4056, %v4055
        %v4060 = vpack.c.b16 %v4058, %v4057
        %v4064 = vsel %vm907, %v4039, 0
        %4066 = vmatprep.subr.bf16.mxu0 0
        %4067 = vmatpush1.bf16.msra.mxu0 %v4059
        %4068 = vmatprep.subr.bf16.mxu0 0
        %4069 = vmatpush1.bf16.msra.mxu0 %v4060
        %4070 = vmatprep.subr.bf16.mxu0 0
        %4071 = vmatpush1.bf16.msra.mxu0 0
        %4072 = vmatprep.subr.bf16.mxu0 0
        %4073 = vmatpush1.bf16.msra.mxu0 0
        %4074 = vmatprep.subr.bf16.mxu0 0
        %4075 = vmatpush1.bf16.msra.mxu0 0
        %4076 = vmatprep.subr.bf16.mxu0 0
        %4077 = vmatpush1.bf16.msra.mxu0 0
        %4078 = vmatprep.subr.bf16.mxu0 0
        %4079 = vmatpush1.bf16.msra.mxu0 0
        %4080 = vmatprep.subr.bf16.mxu0 0
        %4081 = vmatpush1.bf16.msra.mxu0 0
        %4082 = vmatprep.subr.bf16.mxu0 0
        %4083 = vmatpush1.bf16.msra.mxu0 0
        %4084 = vmatprep.subr.bf16.mxu0 0
        %4085 = vmatpush1.bf16.msra.mxu0 0
        %4086 = vmatprep.subr.bf16.mxu0 0
        %4087 = vmatpush1.bf16.msra.mxu0 0
        %4088 = vmatprep.subr.bf16.mxu0 0
        %4089 = vmatpush1.bf16.msra.mxu0 0
        %4090 = vmatprep.subr.bf16.mxu0 0
        %4091 = vmatpush1.bf16.msra.mxu0 0
        %4092 = vmatprep.subr.bf16.mxu0 0
        %4093 = vmatpush1.bf16.msra.mxu0 0
        %4094 = vmatprep.subr.bf16.mxu0 0
        %4095 = vmatpush1.bf16.msra.mxu0 0
        %4096 = vmatprep.subr.bf16.mxu0 0
        %4097 = vmatpush1.bf16.msra.mxu0 0
        %4098 = vmatprep.mubr.bf16.mxu0 0
        %4099 = vmatmul.mubr.bf16.gmra.mrb[0].mxu0 %v4064
        %v4100 = vpop.f32.mrb[0].mxu0
        %v4101 = vadd.f32 %v4049, %v4100
        %v4102 = vpop.f32.mrb[0].mxu0
        %v4103 = vpop.f32.mrb[0].mxu0
        %v4104 = vpop.f32.mrb[0].mxu0
        %4105 = vdwg.mxu0
        %v4106 = vadd.f32 %v3379, %v4101
        %v4107 = vld [vmem:[%s2376] sm:$0x1]
        %v4108 = vld [vmem:[%s2378] sm:$0x1]
        %v4109 = vsel %vm907, %v4106, 0.0
        %4110 = vadd.xlane.f32.xlu0 %v4109
        %v4111 = vpop.xlane.xlu0 %4110
        %v4112 = vmul.f32 %v4111, %v1616
        %v4113 = vsub.f32 %v4106, %v4112
        %v4114 = vmul.f32 %v4113, %v4113
        %v4115 = vsel %vm907, %v4114, 0.0
        %4116 = vadd.xlane.f32.xlu0 %v4115
        %v4117 = vpop.xlane.xlu0 %4116
        %v4118 = vmul.f32 %v4117, %v1616
        %v4120 = vlaneseq
        %v4121 = vshrl.u32 %v4120, 7
        %v4122 = vsub.s32 0, %v4121
        %v4123 = vrot.slane %v4107, %v4122
        %v4125 = vmul.f32 %v4123, %v4113
        %v4126 = vadd.f32 %v4118, 1e-06
        %v4127 = vrsqrt.pop %v4126
        %v4128 = vmul.f32 %v4125, %v4127
        %v4130 = vlaneseq
        %v4131 = vshrl.u32 %v4130, 7
        %v4132 = vsub.s32 0, %v4131
        %v4133 = vrot.slane %v4108, %v4132
        %v4135 = vadd.f32 %v4128, %v4133
        %v4136 = vpack.c.bf16 %v4135, %v4135
        %v4137 = vld [vmem:[%s853] sm:$0xf]
        %v4138 = vld [vmem:[%s853 + $0x4] sm:$0xf]
        %v4139 = vld [vmem:[%s853 + $0x8] sm:$0xf]
        %v4140 = vld [vmem:[%s853 + $0xc] sm:$0xf]
        %v4141 = vld [vmem:[%s747] sm:$0x1]
        %v4143 = vlaneseq
        %v4144 = vshrl.u32 %v4143, 7
        %v4145 = vsub.s32 0, %v4144
        %v4146 = vrot.slane %v4141, %v4145
        %v4152 = vunpack.c.l.b16 %v4137
        %v4153 = vunpack.c.l.b16 %v4138
        %v4154 = vunpack.c.l.b16 %v4139
        %v4155 = vunpack.c.l.b16 %v4140
        %v4156 = vpack.c.b16 %v4153, %v4152
        %v4157 = vpack.c.b16 %v4155, %v4154
        %v4161 = vsel %vm907, %v4136, 0
        %4163 = vmatprep.subr.bf16.mxu0 0
        %4164 = vmatpush1.bf16.msra.mxu0 %v4156
        %4165 = vmatprep.subr.bf16.mxu0 0
        %4166 = vmatpush1.bf16.msra.mxu0 %v4157
        %4167 = vmatprep.subr.bf16.mxu0 0
        %4168 = vmatpush1.bf16.msra.mxu0 0
        %4169 = vmatprep.subr.bf16.mxu0 0
        %4170 = vmatpush1.bf16.msra.mxu0 0
        %4171 = vmatprep.subr.bf16.mxu0 0
        %4172 = vmatpush1.bf16.msra.mxu0 0
        %4173 = vmatprep.subr.bf16.mxu0 0
        %4174 = vmatpush1.bf16.msra.mxu0 0
        %4175 = vmatprep.subr.bf16.mxu0 0
        %4176 = vmatpush1.bf16.msra.mxu0 0
        %4177 = vmatprep.subr.bf16.mxu0 0
        %4178 = vmatpush1.bf16.msra.mxu0 0
        %4179 = vmatprep.subr.bf16.mxu0 0
        %4180 = vmatpush1.bf16.msra.mxu0 0
        %4181 = vmatprep.subr.bf16.mxu0 0
        %4182 = vmatpush1.bf16.msra.mxu0 0
        %4183 = vmatprep.subr.bf16.mxu0 0
        %4184 = vmatpush1.bf16.msra.mxu0 0
        %4185 = vmatprep.subr.bf16.mxu0 0
        %4186 = vmatpush1.bf16.msra.mxu0 0
        %4187 = vmatprep.subr.bf16.mxu0 0
        %4188 = vmatpush1.bf16.msra.mxu0 0
        %4189 = vmatprep.subr.bf16.mxu0 0
        %4190 = vmatpush1.bf16.msra.mxu0 0
        %4191 = vmatprep.subr.bf16.mxu0 0
        %4192 = vmatpush1.bf16.msra.mxu0 0
        %4193 = vmatprep.subr.bf16.mxu0 0
        %4194 = vmatpush1.bf16.msra.mxu0 0
        %4195 = vmatprep.mubr.bf16.mxu0 0
        %4196 = vmatmul.mubr.bf16.gmra.mrb[0].mxu0 %v4161
        %v4197 = vpop.f32.mrb[0].mxu0
        %v4198 = vadd.f32 %v4146, %v4197
        %v4199 = vpop.f32.mrb[0].mxu0
        %v4200 = vpop.f32.mrb[0].mxu0
        %v4201 = vpop.f32.mrb[0].mxu0
        %4202 = vdwg.mxu0
        %v4203 = vmax.f32 %v4198, 0.0
        %v4204 = vpack.c.bf16 %v4203, %v4203
        %v4205 = vld [vmem:[%s858] sm:$0xf]
        %v4206 = vld [vmem:[%s858 + $0x4] sm:$0xf]
        %v4207 = vld [vmem:[%s858 + $0x8] sm:$0xf]
        %v4208 = vld [vmem:[%s858 + $0xc] sm:$0xf]
        %v4209 = vld [vmem:[%s858 + $0x10] sm:$0xf]
        %v4210 = vld [vmem:[%s858 + $0x14] sm:$0xf]
        %v4211 = vld [vmem:[%s858 + $0x18] sm:$0xf]
        %v4212 = vld [vmem:[%s858 + $0x1c] sm:$0xf]
        %v4213 = vld [vmem:[%s755] sm:$0x1]
        %v4215 = vlaneseq
        %v4216 = vshrl.u32 %v4215, 7
        %v4217 = vsub.s32 0, %v4216
        %v4218 = vrot.slane %v4213, %v4217
        %v4228 = vunpack.c.l.b16 %v4205
        %v4229 = vunpack.c.l.b16 %v4206
        %v4230 = vunpack.c.l.b16 %v4207
        %v4231 = vunpack.c.l.b16 %v4208
        %v4232 = vunpack.c.l.b16 %v4209
        %v4233 = vunpack.c.l.b16 %v4210
        %v4234 = vunpack.c.l.b16 %v4211
        %v4235 = vunpack.c.l.b16 %v4212
        %v4236 = vpack.c.b16 %v4229, %v4228
        %v4237 = vpack.c.b16 %v4231, %v4230
        %v4238 = vpack.c.b16 %v4233, %v4232
        %v4239 = vpack.c.b16 %v4235, %v4234
        %v4245 = vsel %vm2515, %v4204, 0
        %4247 = vmatprep.subr.bf16.mxu0 0
        %4248 = vmatpush1.bf16.msra.mxu0 %v4236
        %4249 = vmatprep.subr.bf16.mxu0 0
        %4250 = vmatpush1.bf16.msra.mxu0 %v4237
        %4251 = vmatprep.subr.bf16.mxu0 0
        %4252 = vmatpush1.bf16.msra.mxu0 %v4238
        %4253 = vmatprep.subr.bf16.mxu0 0
        %4254 = vmatpush1.bf16.msra.mxu0 %v4239
        %4255 = vmatprep.subr.bf16.mxu0 0
        %4256 = vmatpush1.bf16.msra.mxu0 0
        %4257 = vmatprep.subr.bf16.mxu0 0
        %4258 = vmatpush1.bf16.msra.mxu0 0
        %4259 = vmatprep.subr.bf16.mxu0 0
        %4260 = vmatpush1.bf16.msra.mxu0 0
        %4261 = vmatprep.subr.bf16.mxu0 0
        %4262 = vmatpush1.bf16.msra.mxu0 0
        %4263 = vmatprep.subr.bf16.mxu0 0
        %4264 = vmatpush1.bf16.msra.mxu0 0
        %4265 = vmatprep.subr.bf16.mxu0 0
        %4266 = vmatpush1.bf16.msra.mxu0 0
        %4267 = vmatprep.subr.bf16.mxu0 0
        %4268 = vmatpush1.bf16.msra.mxu0 0
        %4269 = vmatprep.subr.bf16.mxu0 0
        %4270 = vmatpush1.bf16.msra.mxu0 0
        %4271 = vmatprep.subr.bf16.mxu0 0
        %4272 = vmatpush1.bf16.msra.mxu0 0
        %4273 = vmatprep.subr.bf16.mxu0 0
        %4274 = vmatpush1.bf16.msra.mxu0 0
        %4275 = vmatprep.subr.bf16.mxu0 0
        %4276 = vmatpush1.bf16.msra.mxu0 0
        %4277 = vmatprep.subr.bf16.mxu0 0
        %4278 = vmatpush1.bf16.msra.mxu0 0
        %4279 = vmatprep.mubr.bf16.mxu0 0
        %4280 = vmatmul.mubr.bf16.gmra.mrb[0].mxu0 %v4245
        %v4281 = vpop.f32.mrb[0].mxu0
        %v4282 = vadd.f32 %v4218, %v4281
        %v4283 = vpop.f32.mrb[0].mxu0
        %v4284 = vpop.f32.mrb[0].mxu0
        %v4285 = vpop.f32.mrb[0].mxu0
        %4286 = vdwg.mxu0
        %v4287 = vadd.f32 %v4135, %v4282
        %v4288 = vld [vmem:[%s2560] sm:$0x1]
        %v4289 = vld [vmem:[%s2562] sm:$0x1]
        %v4290 = vsel %vm907, %v4287, 0.0
        %4291 = vadd.xlane.f32.xlu0 %v4290
        %v4292 = vpop.xlane.xlu0 %4291
        %v4293 = vmul.f32 %v4292, %v1616
        %v4294 = vsub.f32 %v4287, %v4293
        %v4295 = vmul.f32 %v4294, %v4294
        %v4296 = vsel %vm907, %v4295, 0.0
        %4297 = vadd.xlane.f32.xlu0 %v4296
        %v4298 = vpop.xlane.xlu0 %4297
        %v4299 = vmul.f32 %v4298, %v1616
        %v4301 = vlaneseq
        %v4302 = vshrl.u32 %v4301, 7
        %v4303 = vsub.s32 0, %v4302
        %v4304 = vrot.slane %v4288, %v4303
        %v4306 = vmul.f32 %v4304, %v4294
        %v4307 = vadd.f32 %v4299, 1e-06
        %v4308 = vrsqrt.pop %v4307
        %v4309 = vmul.f32 %v4306, %v4308
        %v4311 = vlaneseq
        %v4312 = vshrl.u32 %v4311, 7
        %v4313 = vsub.s32 0, %v4312
        %v4314 = vrot.slane %v4289, %v4313
        %v4316 = vadd.f32 %v4309, %v4314
        %4317 = vst.msk [vmem:[%s2625] sm:$0xff] %vm907, %v4316
        // Predicated region
        $region129: #{tpu_custom_call.1} parent=83 // pred_check
          %p4318 = pneg %p869
        $region130: #{tpu_custom_call.1} parent=83 // pred_check_branch
          %4320 = sbr.rel (%p4318) target = $region132
        $region131: #{tpu_custom_call.1} parent=83 // pred_region
          %v4321 = vld [vmem:[%s14] sm:$0x1]
          %v4322 = vld [vmem:[%s15] sm:$0x1]
          %v4323 = vsel %vm907, %v4316, 0.0
          %4324 = vadd.xlane.f32.xlu0 %v4323
          %v4325 = vpop.xlane.xlu0 %4324
          %v4326 = vmul.f32 %v4325, %v1616
          %v4327 = vsub.f32 %v4316, %v4326
          %v4328 = vmul.f32 %v4327, %v4327
          %v4329 = vsel %vm907, %v4328, 0.0
          %4330 = vadd.xlane.f32.xlu0 %v4329
          %v4331 = vpop.xlane.xlu0 %4330
          %v4332 = vmul.f32 %v4331, %v1616
          %v4334 = vlaneseq
          %v4335 = vshrl.u32 %v4334, 7
          %v4336 = vsub.s32 0, %v4335
          %v4337 = vrot.slane %v4321, %v4336
          %v4339 = vmul.f32 %v4337, %v4327
          %v4340 = vadd.f32 %v4332, 1e-06
          %v4341 = vrsqrt.pop %v4340
          %v4342 = vmul.f32 %v4339, %v4341
          %v4344 = vlaneseq
          %v4345 = vshrl.u32 %v4344, 7
          %v4346 = vsub.s32 0, %v4345
          %v4347 = vrot.slane %v4322, %v4346
          %v4349 = vadd.f32 %v4342, %v4347
          %s4350 = scalar_lea.vmem [#allocation17], 8
          %4351 = vst.msk [vmem:[%s4350] sm:$0xff] %vm907, %v4349
        $region132: #{tpu_custom_call.1} parent=83 // pred_fallthru
          _
        // Predicated region
        $region133: #{tpu_custom_call.1} parent=83 // pred_check
          %p4352 = pneg %p467
        $region134: #{tpu_custom_call.1} parent=83 // pred_check_branch
          %4354 = sbr.rel (%p4352) target = $region136
        $region135: #{tpu_custom_call.1} parent=83 // pred_region
          %s4355 = smul.u32 2, %s35
          %s4357 = ssub.s32 256, 256
          %4358 = vsyncadd [#allocation6], %s4357
          %s4359 = smul.addr %s4355, 128
          %s4360 = scalar_lea.hbm %s16, %s4359
          %s4361 = sshll.u32 [#allocation17], 4
          %s4362 = int_to_ptr.vmem [resolvable:$true] %s4361
          %4367 = dma.vmem_to_hbm [thread:$0]  %s4362, 256, %s4360, [#allocation6], 128, 128, 8
        $region136: #{tpu_custom_call.1} parent=83 // pred_fallthru
          _
        // Predicated region
        $region137: #{tpu_custom_call.1} parent=83 // pred_check
          %p4368 = pneg %p467
        $region138: #{tpu_custom_call.1} parent=83 // pred_check_branch
          %4370 = sbr.rel (%p4368) target = $region140
        $region139: #{tpu_custom_call.1} parent=83 // pred_region
          %4371 = dma.done [#allocation6], 256
        $region140: #{tpu_custom_call.1} parent=83 // pred_fallthru
          _
      $region84: #{tpu_custom_call.1} parent=5 // pred_fallthru
        _
      %p4372 = scmp.le.s32.totalorder 2, %s26
      // Predicated region
      $region141: #{tpu_custom_call.1} parent=5 // pred_check
        %p4373 = pneg %p4372
      $region142: #{tpu_custom_call.1} parent=5 // pred_check_branch
        %4375 = sbr.rel (%p4373) target = $region144
      $region143: #{tpu_custom_call.1} parent=5 // pred_region
        %s4376 = ssub.s32 %s26, 2
      $region144: #{tpu_custom_call.1} parent=5 // pred_fallthru
        _
    $region6: #{tpu_custom_call.1} parent=1 // loop_footer
      %s30 = sadd.s32 1, %s26
    $region7: #{tpu_custom_call.1} parent=1 // loop_footer_branch
      %25 = sbr.rel target = $region3
    $region8: #{tpu_custom_call.1} parent=1 // loop_exit
      _
    %4377 = vsyncpa [#allocation5], 1
    %s4378 = scalar_lea.sflag [#allocation5], 1
    %4379 = vsyncpa %s4378, 1
    %4380 = vsyncpa [#allocation8], 1
    %4381 = vsyncpa [#allocation11], 1
    %4382 = vsyncpa [#allocation6], 1
    %s4383 = scalar_lea.sflag [#allocation6], 1
    %4384 = vsyncpa %s4383, 1

</llo_original>
